<compile_context>
chip_gen: v7x
topology: tpu7x:2x2x1
jax: 0.10.0
libtpu: 0.0.40
codegen_flags: <defaults>
</compile_context>

<pallas_src>
import numpy as np
import jax
import jax.numpy as jnp
from jax.experimental import pallas as pl
from jax.experimental.pallas import tpu as pltpu

BN_EPS = 1e-5  # PyTorch BatchNorm2d default eps


# ----------------------------- mask precompute -------------------------------

def _build_tap_masks(N, H, W, ksz):
    """0/1 validity mask per conv tap, shape (ksz*ksz, N*H*W), f32.

    Tap (dy, dx) at output pixel (h, w) reads input (h+dy-p, w+dx-p); the mask
    is 0 where that source falls in the zero "same" padding (or would wrap
    across a row / image boundary in the flattened pixel axis).
    """
    p = ksz // 2
    hh = np.arange(H)[:, None]
    ww = np.arange(W)[None, :]
    masks = np.zeros((ksz * ksz, N * H * W), np.float32)
    for dy in range(ksz):
        for dx in range(ksz):
            vh = (hh + dy - p >= 0) & (hh + dy - p < H)
            vw = (ww + dx - p >= 0) & (ww + dx - p < W)
            m2d = (vh & vw).astype(np.float32)              # (H, W)
            masks[dy * ksz + dx] = np.tile(m2d.reshape(-1), N)
    return masks


# ------------------------------ Pallas kernel --------------------------------

def _make_dense_block_kernel(*, N, H, W, Cin, Cin_pad, k, k_pad, depth, out_c,
                             ksz, pad, M):
    """Build the fused kernel body for a fixed (static) configuration."""
    p = ksz // 2
    C_pad_total = Cin_pad + depth * k_pad
    inv_m = 1.0 / float(M)
    # Flattened-pixel offset per tap (j = dy*ksz + dx) and the center tap.
    offs = [(dy - p) * W + (dx - p) for dy in range(ksz) for dx in range(ksz)]
    center = (ksz // 2) * ksz + (ksz // 2)

    def bias_relu_bn(acc, b_ref, g_ref, be_ref):
        # Conv bias + ReLU + training-mode BatchNorm2d (biased variance over
        # N*H*W).  One-pass stats: sum(y) and sum(y*y) reduce together (post-
        # ReLU values are non-negative O(1), cancellation risk is negligible);
        # everything stays f32.
        y = jnp.maximum(acc + b_ref[...], 0.0)
        s1 = jnp.sum(y, axis=1, keepdims=True)
        s2 = jnp.sum(y * y, axis=1, keepdims=True)
        mean = s1 * inv_m
        var = jnp.maximum(s2 * inv_m - mean * mean, 0.0)
        return (y - mean) * jax.lax.rsqrt(var + BN_EPS) * g_ref[...] + be_ref[...]

    def kernel(*refs):
        x_ref, masks_ref = refs[0], refs[1]
        layer_refs = [refs[2 + 4 * i:2 + 4 * (i + 1)] for i in range(depth)]
        wf_ref, bf_ref, gf_ref, bef_ref = refs[2 + 4 * depth:6 + 4 * depth]
        out_ref = refs[6 + 4 * depth]
        feat_ref = refs[7 + 4 * depth]
        buf_ref = refs[8 + 4 * depth]

        # Prologue: zero only the two halo bands ("same" zero padding) and the
        # padded x rows; drop x in and stream it into the feature-map output.
        buf_ref[:, 0:pad] = jnp.zeros((C_pad_total, pad), jnp.float32)
        buf_ref[:, pad + M:2 * pad + M] = jnp.zeros((C_pad_total, pad), jnp.float32)
        if Cin_pad > Cin:
            buf_ref[Cin:Cin_pad, pad:pad + M] = jnp.zeros((Cin_pad - Cin, M),
                                                          jnp.float32)
        x = x_ref[...]
        buf_ref[0:Cin, pad:pad + M] = x
        feat_ref[0:Cin, :] = x

        c_pad_cur = Cin_pad   # padded channel rows feeding this layer
        c_real = Cin          # real channel cursor into feat_ref
        for (w_ref, b_ref, g_ref, be_ref) in layer_refs:
            # ONE bf16 MXU matmul per layer over the whole (lane-aligned,
            # zero-halo'd) buffer: (9*k_pad, c) @ (c, M + 2*pad) -> f32 acc9.
            win = buf_ref[0:c_pad_cur, :].astype(jnp.bfloat16)
            acc9 = jnp.dot(w_ref[...], win,
                           preferred_element_type=jnp.float32)
            # Output-side tap combine: out[:, m] += acc9[tap j, pad + m + off].
            # Center tap (off = 0) initializes acc, is lane-aligned and needs
            # no mask; the 8 others are lane-shifted 16-row slices * mask.
            acc = acc9[center * k_pad:(center + 1) * k_pad, pad:pad + M]
            for j in range(ksz * ksz):
                if j == center:
                    continue
                off = offs[j]
                blk = acc9[j * k_pad:(j + 1) * k_pad,
                           pad + off:pad + off + M]
                acc = acc + blk * masks_ref[j:j + 1, :]
            y = bias_relu_bn(acc, b_ref, g_ref, be_ref)   # (k_pad, M) f32
            # Aligned 16-row write into the growing buffer; real 12 rows also
            # stream straight into the feature-map output (no tail copy).
            buf_ref[c_pad_cur:c_pad_cur + k_pad, pad:pad + M] = y
            feat_ref[c_real:c_real + k, :] = y[0:k, :]
            c_pad_cur += k_pad
            c_real += k

        # Final 1x1 conv + ReLU + BN over the padded feature slab (the padded
        # columns of wf are zero, so pad rows contribute nothing).
        feats = buf_ref[0:C_pad_total, pad:pad + M].astype(jnp.bfloat16)
        acc = jnp.dot(wf_ref[...], feats, preferred_element_type=jnp.float32)
        out_ref[...] = bias_relu_bn(acc, bf_ref, gf_ref, bef_ref)

    return kernel


# ------------------------------- JAX wrapper ---------------------------------

def dense_conv_block_forward(x_nchw, params):
    """Matches DenseConvBlock.forward: returns (out, feature_maps) in NCHW."""
    N, Cin, H, W = x_nchw.shape
    layers = params["layers"]
    wf, bf, gf, bef = params["final"]
    depth = len(layers)
    k = layers[0][0].shape[0]
    ksz = layers[0][0].shape[-1]
    out_c = wf.shape[0]
    C_total = Cin + depth * k
    M = N * H * W
    p = ksz // 2
    # Lane-aligned halo around the flattened pixel axis (covers p*W + p).
    pad = max(128, ((p * W + p + 127) // 128) * 128)
    assert p * W + p <= pad

    def rup8(v):
        return ((v + 7) // 8) * 8

    # Sublane-aligned channel layout: x block padded to 8, each layer block to 16.
    Cin_pad = rup8(Cin)
    k_pad = rup8(k)
    C_pad_total = Cin_pad + depth * k_pad

    # [C, M] layout: channels on sublanes, pixels (n, h, w) on lanes.
    x2d = jnp.transpose(x_nchw, (1, 0, 2, 3)).reshape(Cin, M).astype(jnp.float32)
    masks = jnp.asarray(_build_tap_masks(N, H, W, ksz))

    def pad_in_channels(wmat):
        # Last axis holds real input channels in concat order [x, y_0, ...];
        # re-space them into the padded buffer layout with zero columns.
        c_in = wmat.shape[-1]
        i = (c_in - Cin) // k
        nd = wmat.ndim
        parts = [jnp.pad(wmat[..., :Cin],
                         [(0, 0)] * (nd - 1) + [(0, Cin_pad - Cin)])]
        for j in range(i):
            parts.append(jnp.pad(wmat[..., Cin + j * k:Cin + (j + 1) * k],
                                 [(0, 0)] * (nd - 1) + [(0, k_pad - k)]))
        return jnp.concatenate(parts, axis=-1)

    flat_in = [x2d, masks]
    for (w, b, g, be) in layers:
        # (k, c_in, Kh, Kw) -> pad out-ch to k_pad, re-space in-ch, then
        # (Kh, Kw, k_pad, c_pad) -> (Kh*Kw*k_pad, c_pad), pre-cast to bf16 for
        # the single-pass bf16 MXU (f32 accumulation stays in-kernel).
        wp = jnp.pad(w, ((0, k_pad - k), (0, 0), (0, 0), (0, 0)))
        wp = jnp.transpose(wp, (2, 3, 0, 1))
        wp = pad_in_channels(wp)
        wp = wp.reshape(ksz * ksz * k_pad, -1).astype(jnp.bfloat16)
        bp = jnp.pad(b, (0, k_pad - k)).reshape(k_pad, 1)
        gp = jnp.pad(g, (0, k_pad - k)).reshape(k_pad, 1)
        bep = jnp.pad(be, (0, k_pad - k)).reshape(k_pad, 1)
        flat_in += [wp, bp, gp, bep]

    wf_pad = pad_in_channels(wf.reshape(out_c, C_total)).astype(jnp.bfloat16)
    flat_in += [wf_pad, bf.reshape(out_c, 1), gf.reshape(out_c, 1),
                bef.reshape(out_c, 1)]

    kernel = _make_dense_block_kernel(N=N, H=H, W=W, Cin=Cin, Cin_pad=Cin_pad,
                                      k=k, k_pad=k_pad, depth=depth,
                                      out_c=out_c, ksz=ksz, pad=pad, M=M)

    def full(shape):
        return pl.BlockSpec(shape, lambda i: (0,) * len(shape))

    out2d, feat2d = pl.pallas_call(
        kernel,
        out_shape=(jax.ShapeDtypeStruct((out_c, M), jnp.float32),
                   jax.ShapeDtypeStruct((C_total, M), jnp.float32)),
        grid_spec=pltpu.PrefetchScalarGridSpec(
            num_scalar_prefetch=0,
            # Whole block in one step: resident working set (padded feature
            # buffer + per-layer matmul result) is < 2 MiB, far below the
            # 32 MiB default scoped VMEM on v5e/v6e/v7x.
            grid=(1,),
            in_specs=[full(a.shape) for a in flat_in],
            out_specs=[full((out_c, M)), full((C_total, M))],
            scratch_shapes=[pltpu.VMEM((C_pad_total, M + 2 * pad), jnp.float32)],
        ),
        compiler_params=pltpu.CompilerParams(
            dimension_semantics=("arbitrary",)),
    )(*flat_in)
    # TODO(synk): on v7x, split M 2-way across the two TensorCores (parallel
    # grid axis) and combine per-core BN partial sums; at M=512 a single TC is
    # faster than the sync.  When scaling past toy sizes, also tile over M and
    # set vmem_limit_bytes (v7x has only 64 MiB physical VMEM).

    out = jnp.transpose(out2d.reshape(out_c, N, H, W), (1, 0, 2, 3))
    feature_maps = jnp.transpose(feat2d.reshape(C_total, N, H, W), (1, 0, 2, 3))
    return out, feature_maps


# ------------------------------ params / reference ---------------------------

def init_dense_conv_block(key, in_channels, out_channels, kernel_size, depth, k=12):
    inner_ksz = kernel_size - (kernel_size + 1) % 2  # force odd, "same" padding

    def init_conv(kk, cin, cout, ksz):
        kw, kb = jax.random.split(kk)
        fan_in = cin * ksz * ksz
        bound = 1.0 / np.sqrt(fan_in)
        w = jax.random.uniform(kw, (cout, cin, ksz, ksz), jnp.float32, -bound, bound)
        b = jax.random.uniform(kb, (cout,), jnp.float32, -bound, bound)
        gamma = jnp.ones((cout,), jnp.float32)
        beta = jnp.zeros((cout,), jnp.float32)
        return (w, b, gamma, beta)

    keys = jax.random.split(key, depth + 1)
    layers = [init_conv(keys[i], in_channels + i * k, k, inner_ksz) for i in range(depth)]
    final = init_conv(keys[depth], in_channels + depth * k, out_channels, 1)
    return {"layers": layers, "final": final}


def _reference_forward(x_nchw, params):
    """Pure-JAX/XLA reference of the same forward math (self-check)."""
    def block(x, w, b, g, be):
        ksz = w.shape[-1]
        p = ksz // 2
        y = jax.lax.conv_general_dilated(
            x, w, window_strides=(1, 1), padding=[(p, p), (p, p)],
            dimension_numbers=("NCHW", "OIHW", "NCHW"),
            precision=jax.lax.Precision.HIGHEST)
        y = jnp.maximum(y + b.reshape(1, -1, 1, 1), 0.0)
        mean = jnp.mean(y, axis=(0, 2, 3), keepdims=True)
        var = jnp.mean(jnp.square(y - mean), axis=(0, 2, 3), keepdims=True)
        return ((y - mean) * jax.lax.rsqrt(var + BN_EPS)
                * g.reshape(1, -1, 1, 1) + be.reshape(1, -1, 1, 1))

    x = x_nchw
    for (w, b, g, be) in params["layers"]:
        x = jnp.concatenate([x, block(x, w, b, g, be)], axis=1)
    feature_maps = x
    out = block(x, *params["final"])
    return out, feature_maps


# ---------------------------------- main --------------------------------------

if __name__ == "__main__":
    # DenseConvBlock(in_channels=4, out_channels=8, kernel_size=3, depth=3, k=12)
    in_channels, out_channels, kernel_size, depth, k = 4, 8, 3, 3, 12
    N, H, W = 2, 16, 16  # M = N*H*W = 512 pixels (4 full lane groups)

    key = jax.random.PRNGKey(0)
    k_x, k_p = jax.random.split(key)
    x = jax.random.normal(k_x, (N, in_channels, H, W), jnp.float32)  # NCHW

    params = init_dense_conv_block(k_p, in_channels, out_channels,
                                   kernel_size, depth, k)

    fwd = jax.jit(dense_conv_block_forward)
    out, feature_maps = fwd(x, params)
    jax.block_until_ready((out, feature_maps))

    assert out.shape == (N, out_channels, H, W)
    assert feature_maps.shape == (N, in_channels + depth * k, H, W)

    # Numerical self-check against a pure-XLA f32 (HIGHEST) reference.
    # Tolerance accounts for the deliberate single-pass bf16 MXU operands
    # (per perf review) chained over depth+1 conv+BN stages.
    out_ref, fm_ref = _reference_forward(x, params)
    np.testing.assert_allclose(np.asarray(out), np.asarray(out_ref),
                               atol=1e-1, rtol=1e-1)
    np.testing.assert_allclose(np.asarray(feature_maps), np.asarray(fm_ref),
                               atol=1e-1, rtol=1e-1)

    print("KERNEL_OK")
</pallas_src>

<mosaic_0001>
module attributes {stable_mosaic.version = 11 : i64} {
  func.func @kernel(%arg0: i32, %arg1: memref<4x512xf32, #tpu.memory_space<vmem>>, %arg2: memref<9x512xf32, #tpu.memory_space<vmem>>, %arg3: memref<144x8xbf16, #tpu.memory_space<vmem>>, %arg4: memref<16x1xf32, #tpu.memory_space<vmem>>, %arg5: memref<16x1xf32, #tpu.memory_space<vmem>>, %arg6: memref<16x1xf32, #tpu.memory_space<vmem>>, %arg7: memref<144x24xbf16, #tpu.memory_space<vmem>>, %arg8: memref<16x1xf32, #tpu.memory_space<vmem>>, %arg9: memref<16x1xf32, #tpu.memory_space<vmem>>, %arg10: memref<16x1xf32, #tpu.memory_space<vmem>>, %arg11: memref<144x40xbf16, #tpu.memory_space<vmem>>, %arg12: memref<16x1xf32, #tpu.memory_space<vmem>>, %arg13: memref<16x1xf32, #tpu.memory_space<vmem>>, %arg14: memref<16x1xf32, #tpu.memory_space<vmem>>, %arg15: memref<8x56xbf16, #tpu.memory_space<vmem>>, %arg16: memref<8x1xf32, #tpu.memory_space<vmem>>, %arg17: memref<8x1xf32, #tpu.memory_space<vmem>>, %arg18: memref<8x1xf32, #tpu.memory_space<vmem>>, %arg19: memref<8x512xf32, #tpu.memory_space<vmem>>, %arg20: memref<40x512xf32, #tpu.memory_space<vmem>>, %arg21: memref<56x768xf32, #tpu.memory_space<vmem>>) attributes {dimension_semantics = [#tpu.dimension_semantics<arbitrary>], iteration_bounds = array<i64: 1>, scalar_prefetch = 0 : i64, scratch_operands = 1 : i64, tpu.core_type = #tpu.core_type<tc>, window_params = [{pipeline_mode = #tpu.pipeline_mode<synchronous>, transform_indices = @transform_0, window_bounds = array<i64: 4, 512>}, {pipeline_mode = #tpu.pipeline_mode<synchronous>, transform_indices = @transform_1, window_bounds = array<i64: 9, 512>}, {pipeline_mode = #tpu.pipeline_mode<synchronous>, transform_indices = @transform_2, window_bounds = array<i64: 144, 8>}, {pipeline_mode = #tpu.pipeline_mode<synchronous>, transform_indices = @transform_3, window_bounds = array<i64: 16, 1>}, {pipeline_mode = #tpu.pipeline_mode<synchronous>, transform_indices = @transform_4, window_bounds = array<i64: 16, 1>}, {pipeline_mode = #tpu.pipeline_mode<synchronous>, transform_indices = @transform_5, window_bounds = array<i64: 16, 1>}, {pipeline_mode = #tpu.pipeline_mode<synchronous>, transform_indices = @transform_6, window_bounds = array<i64: 144, 24>}, {pipeline_mode = #tpu.pipeline_mode<synchronous>, transform_indices = @transform_7, window_bounds = array<i64: 16, 1>}, {pipeline_mode = #tpu.pipeline_mode<synchronous>, transform_indices = @transform_8, window_bounds = array<i64: 16, 1>}, {pipeline_mode = #tpu.pipeline_mode<synchronous>, transform_indices = @transform_9, window_bounds = array<i64: 16, 1>}, {pipeline_mode = #tpu.pipeline_mode<synchronous>, transform_indices = @transform_10, window_bounds = array<i64: 144, 40>}, {pipeline_mode = #tpu.pipeline_mode<synchronous>, transform_indices = @transform_11, window_bounds = array<i64: 16, 1>}, {pipeline_mode = #tpu.pipeline_mode<synchronous>, transform_indices = @transform_12, window_bounds = array<i64: 16, 1>}, {pipeline_mode = #tpu.pipeline_mode<synchronous>, transform_indices = @transform_13, window_bounds = array<i64: 16, 1>}, {pipeline_mode = #tpu.pipeline_mode<synchronous>, transform_indices = @transform_14, window_bounds = array<i64: 8, 56>}, {pipeline_mode = #tpu.pipeline_mode<synchronous>, transform_indices = @transform_15, window_bounds = array<i64: 8, 1>}, {pipeline_mode = #tpu.pipeline_mode<synchronous>, transform_indices = @transform_16, window_bounds = array<i64: 8, 1>}, {pipeline_mode = #tpu.pipeline_mode<synchronous>, transform_indices = @transform_17, window_bounds = array<i64: 8, 1>}, {pipeline_mode = #tpu.pipeline_mode<synchronous>, transform_indices = @transform_18, window_bounds = array<i64: 8, 512>}, {pipeline_mode = #tpu.pipeline_mode<synchronous>, transform_indices = @transform_19, window_bounds = array<i64: 40, 512>}]} {
    %cst = arith.constant 0.000000e+00 : f32
    %0 = vector.broadcast %cst : f32 to vector<56x128xf32>
    %c0 = arith.constant 0 : index
    %c0_0 = arith.constant 0 : index
    %1 = vector.load %arg21[%c0, %c0_0] : memref<56x768xf32, #tpu.memory_space<vmem>>, vector<56x128xf32>
    tpu.vector_store %arg21[%c0, %c0_0], %0 {strides = array<i32>} : memref<56x768xf32, #tpu.memory_space<vmem>>, vector<56x128xf32>,
    %cst_1 = arith.constant 0.000000e+00 : f32
    %2 = vector.broadcast %cst_1 : f32 to vector<56x128xf32>
    %c0_2 = arith.constant 0 : index
    %c640 = arith.constant 640 : index
    %3 = vector.load %arg21[%c0_2, %c640] : memref<56x768xf32, #tpu.memory_space<vmem>>, vector<56x128xf32>
    tpu.vector_store %arg21[%c0_2, %c640], %2 {strides = array<i32>} : memref<56x768xf32, #tpu.memory_space<vmem>>, vector<56x128xf32>,
    %cst_3 = arith.constant 0.000000e+00 : f32
    %4 = vector.broadcast %cst_3 : f32 to vector<4x512xf32>
    %c4 = arith.constant 4 : index
    %c128 = arith.constant 128 : index
    %5 = vector.load %arg21[%c4, %c128] : memref<56x768xf32, #tpu.memory_space<vmem>>, vector<4x512xf32>
    tpu.vector_store %arg21[%c4, %c128], %4 {strides = array<i32>} : memref<56x768xf32, #tpu.memory_space<vmem>>, vector<4x512xf32>,
    %c0_4 = arith.constant 0 : index
    %c0_5 = arith.constant 0 : index
    %6 = vector.load %arg1[%c0_4, %c0_5] : memref<4x512xf32, #tpu.memory_space<vmem>>, vector<4x512xf32>
    %c0_6 = arith.constant 0 : index
    %c128_7 = arith.constant 128 : index
    %7 = vector.load %arg21[%c0_6, %c128_7] : memref<56x768xf32, #tpu.memory_space<vmem>>, vector<4x512xf32>
    tpu.vector_store %arg21[%c0_6, %c128_7], %6 {strides = array<i32>} : memref<56x768xf32, #tpu.memory_space<vmem>>, vector<4x512xf32>,
    %c0_8 = arith.constant 0 : index
    %c0_9 = arith.constant 0 : index
    %8 = vector.load %arg20[%c0_8, %c0_9] : memref<40x512xf32, #tpu.memory_space<vmem>>, vector<4x512xf32>
    tpu.vector_store %arg20[%c0_8, %c0_9], %6 {strides = array<i32>} : memref<40x512xf32, #tpu.memory_space<vmem>>, vector<4x512xf32>,
    %c0_10 = arith.constant 0 : index
    %c0_11 = arith.constant 0 : index
    %9 = vector.load %arg21[%c0_10, %c0_11] : memref<56x768xf32, #tpu.memory_space<vmem>>, vector<8x768xf32>
    %10 = arith.truncf %9 : vector<8x768xf32> to vector<8x768xbf16>
    %c0_12 = arith.constant 0 : index
    %c0_13 = arith.constant 0 : index
    %11 = vector.load %arg3[%c0_12, %c0_13] : memref<144x8xbf16, #tpu.memory_space<vmem>>, vector<144x8xbf16>
    %cst_14 = arith.constant dense<0.000000e+00> : vector<144x768xf32>
    %12 = tpu.matmul %11, %10, %cst_14 {dimension_numbers = #tpu.dot_dimension_numbers<[1], [0], [0], [1], [0, 0, 1, 1], [], []>} : vector<144x8xbf16>, vector<8x768xbf16>, vector<144x768xf32> -> vector<144x768xf32>
    %13 = vector.extract_strided_slice %12 {offsets = [64, 128], sizes = [16, 512], strides = [1, 1]} : vector<144x768xf32> to vector<16x512xf32>
    %14 = vector.extract_strided_slice %12 {offsets = [0, 111], sizes = [16, 512], strides = [1, 1]} : vector<144x768xf32> to vector<16x512xf32>
    %c0_15 = arith.constant 0 : index
    %c0_16 = arith.constant 0 : index
    %15 = vector.load %arg2[%c0_15, %c0_16] : memref<9x512xf32, #tpu.memory_space<vmem>>, vector<1x512xf32>
    %16 = vector.broadcast %15 : vector<1x512xf32> to vector<16x512xf32>
    %17 = arith.mulf %14, %16 : vector<16x512xf32>
    %18 = arith.addf %13, %17 : vector<16x512xf32>
    %19 = vector.extract_strided_slice %12 {offsets = [16, 112], sizes = [16, 512], strides = [1, 1]} : vector<144x768xf32> to vector<16x512xf32>
    %c1 = arith.constant 1 : index
    %c0_17 = arith.constant 0 : index
    %20 = vector.load %arg2[%c1, %c0_17] : memref<9x512xf32, #tpu.memory_space<vmem>>, vector<1x512xf32>
    %21 = vector.broadcast %20 : vector<1x512xf32> to vector<16x512xf32>
    %22 = arith.mulf %19, %21 : vector<16x512xf32>
    %23 = arith.addf %18, %22 : vector<16x512xf32>
    %24 = vector.extract_strided_slice %12 {offsets = [32, 113], sizes = [16, 512], strides = [1, 1]} : vector<144x768xf32> to vector<16x512xf32>
    %c2 = arith.constant 2 : index
    %c0_18 = arith.constant 0 : index
    %25 = vector.load %arg2[%c2, %c0_18] : memref<9x512xf32, #tpu.memory_space<vmem>>, vector<1x512xf32>
    %26 = vector.broadcast %25 : vector<1x512xf32> to vector<16x512xf32>
    %27 = arith.mulf %24, %26 : vector<16x512xf32>
    %28 = arith.addf %23, %27 : vector<16x512xf32>
    %29 = vector.extract_strided_slice %12 {offsets = [48, 127], sizes = [16, 512], strides = [1, 1]} : vector<144x768xf32> to vector<16x512xf32>
    %c3 = arith.constant 3 : index
    %c0_19 = arith.constant 0 : index
    %30 = vector.load %arg2[%c3, %c0_19] : memref<9x512xf32, #tpu.memory_space<vmem>>, vector<1x512xf32>
    %31 = vector.broadcast %30 : vector<1x512xf32> to vector<16x512xf32>
    %32 = arith.mulf %29, %31 : vector<16x512xf32>
    %33 = arith.addf %28, %32 : vector<16x512xf32>
    %34 = vector.extract_strided_slice %12 {offsets = [80, 129], sizes = [16, 512], strides = [1, 1]} : vector<144x768xf32> to vector<16x512xf32>
    %c5 = arith.constant 5 : index
    %c0_20 = arith.constant 0 : index
    %35 = vector.load %arg2[%c5, %c0_20] : memref<9x512xf32, #tpu.memory_space<vmem>>, vector<1x512xf32>
    %36 = vector.broadcast %35 : vector<1x512xf32> to vector<16x512xf32>
    %37 = arith.mulf %34, %36 : vector<16x512xf32>
    %38 = arith.addf %33, %37 : vector<16x512xf32>
    %39 = vector.extract_strided_slice %12 {offsets = [96, 143], sizes = [16, 512], strides = [1, 1]} : vector<144x768xf32> to vector<16x512xf32>
    %c6 = arith.constant 6 : index
    %c0_21 = arith.constant 0 : index
    %40 = vector.load %arg2[%c6, %c0_21] : memref<9x512xf32, #tpu.memory_space<vmem>>, vector<1x512xf32>
    %41 = vector.broadcast %40 : vector<1x512xf32> to vector<16x512xf32>
    %42 = arith.mulf %39, %41 : vector<16x512xf32>
    %43 = arith.addf %38, %42 : vector<16x512xf32>
    %44 = vector.extract_strided_slice %12 {offsets = [112, 144], sizes = [16, 512], strides = [1, 1]} : vector<144x768xf32> to vector<16x512xf32>
    %c7 = arith.constant 7 : index
    %c0_22 = arith.constant 0 : index
    %45 = vector.load %arg2[%c7, %c0_22] : memref<9x512xf32, #tpu.memory_space<vmem>>, vector<1x512xf32>
    %46 = vector.broadcast %45 : vector<1x512xf32> to vector<16x512xf32>
    %47 = arith.mulf %44, %46 : vector<16x512xf32>
    %48 = arith.addf %43, %47 : vector<16x512xf32>
    %49 = vector.extract_strided_slice %12 {offsets = [128, 145], sizes = [16, 512], strides = [1, 1]} : vector<144x768xf32> to vector<16x512xf32>
    %c8 = arith.constant 8 : index
    %c0_23 = arith.constant 0 : index
    %50 = vector.load %arg2[%c8, %c0_23] : memref<9x512xf32, #tpu.memory_space<vmem>>, vector<1x512xf32>
    %51 = vector.broadcast %50 : vector<1x512xf32> to vector<16x512xf32>
    %52 = arith.mulf %49, %51 : vector<16x512xf32>
    %53 = arith.addf %48, %52 : vector<16x512xf32>
    %c0_24 = arith.constant 0 : index
    %c0_25 = arith.constant 0 : index
    %54 = vector.load %arg4[%c0_24, %c0_25] : memref<16x1xf32, #tpu.memory_space<vmem>>, vector<16x1xf32>
    %55 = vector.broadcast %54 : vector<16x1xf32> to vector<16x512xf32>
    %56 = arith.addf %53, %55 : vector<16x512xf32>
    %cst_26 = arith.constant 0.000000e+00 : f32
    %57 = vector.broadcast %cst_26 : f32 to vector<16x512xf32>
    %58 = arith.maximumf %56, %57 : vector<16x512xf32>
    %cst_27 = arith.constant dense<0.000000e+00> : vector<16xf32>
    %59 = vector.multi_reduction <add>, %58, %cst_27 [1] : vector<16x512xf32> to vector<16xf32>
    %60 = vector.shape_cast %59 : vector<16xf32> to vector<16x1xf32>
    %61 = arith.mulf %58, %58 : vector<16x512xf32>
    %cst_28 = arith.constant dense<0.000000e+00> : vector<16xf32>
    %62 = vector.multi_reduction <add>, %61, %cst_28 [1] : vector<16x512xf32> to vector<16xf32>
    %63 = vector.shape_cast %62 : vector<16xf32> to vector<16x1xf32>
    %cst_29 = arith.constant 0.001953125 : f32
    %64 = vector.broadcast %cst_29 : f32 to vector<16x1xf32>
    %65 = arith.mulf %60, %64 : vector<16x1xf32>
    %cst_30 = arith.constant 0.001953125 : f32
    %66 = vector.broadcast %cst_30 : f32 to vector<16x1xf32>
    %67 = arith.mulf %63, %66 : vector<16x1xf32>
    %68 = arith.mulf %65, %65 : vector<16x1xf32>
    %69 = arith.subf %67, %68 : vector<16x1xf32>
    %cst_31 = arith.constant 0.000000e+00 : f32
    %70 = vector.broadcast %cst_31 : f32 to vector<16x1xf32>
    %71 = arith.maximumf %69, %70 : vector<16x1xf32>
    %72 = vector.broadcast %65 : vector<16x1xf32> to vector<16x512xf32>
    %73 = arith.subf %58, %72 : vector<16x512xf32>
    %cst_32 = arith.constant 9.99999974E-6 : f32
    %74 = vector.broadcast %cst_32 : f32 to vector<16x1xf32>
    %75 = arith.addf %71, %74 : vector<16x1xf32>
    %76 = math.rsqrt %75 : vector<16x1xf32>
    %77 = vector.broadcast %76 : vector<16x1xf32> to vector<16x512xf32>
    %78 = arith.mulf %73, %77 : vector<16x512xf32>
    %c0_33 = arith.constant 0 : index
    %c0_34 = arith.constant 0 : index
    %79 = vector.load %arg5[%c0_33, %c0_34] : memref<16x1xf32, #tpu.memory_space<vmem>>, vector<16x1xf32>
    %80 = vector.broadcast %79 : vector<16x1xf32> to vector<16x512xf32>
    %81 = arith.mulf %78, %80 : vector<16x512xf32>
    %c0_35 = arith.constant 0 : index
    %c0_36 = arith.constant 0 : index
    %82 = vector.load %arg6[%c0_35, %c0_36] : memref<16x1xf32, #tpu.memory_space<vmem>>, vector<16x1xf32>
    %83 = vector.broadcast %82 : vector<16x1xf32> to vector<16x512xf32>
    %84 = arith.addf %81, %83 : vector<16x512xf32>
    %c8_37 = arith.constant 8 : index
    %c128_38 = arith.constant 128 : index
    %85 = vector.load %arg21[%c8_37, %c128_38] : memref<56x768xf32, #tpu.memory_space<vmem>>, vector<16x512xf32>
    tpu.vector_store %arg21[%c8_37, %c128_38], %84 {strides = array<i32>} : memref<56x768xf32, #tpu.memory_space<vmem>>, vector<16x512xf32>,
    %86 = vector.extract_strided_slice %84 {offsets = [0, 0], sizes = [12, 512], strides = [1, 1]} : vector<16x512xf32> to vector<12x512xf32>
    %c4_39 = arith.constant 4 : index
    %c0_40 = arith.constant 0 : index
    %87 = vector.load %arg20[%c4_39, %c0_40] : memref<40x512xf32, #tpu.memory_space<vmem>>, vector<12x512xf32>
    tpu.vector_store %arg20[%c4_39, %c0_40], %86 {strides = array<i32>} : memref<40x512xf32, #tpu.memory_space<vmem>>, vector<12x512xf32>,
    %c0_41 = arith.constant 0 : index
    %c0_42 = arith.constant 0 : index
    %88 = vector.load %arg21[%c0_41, %c0_42] : memref<56x768xf32, #tpu.memory_space<vmem>>, vector<24x768xf32>
    %89 = arith.truncf %88 : vector<24x768xf32> to vector<24x768xbf16>
    %c0_43 = arith.constant 0 : index
    %c0_44 = arith.constant 0 : index
    %90 = vector.load %arg7[%c0_43, %c0_44] : memref<144x24xbf16, #tpu.memory_space<vmem>>, vector<144x24xbf16>
    %cst_45 = arith.constant dense<0.000000e+00> : vector<144x768xf32>
    %91 = tpu.matmul %90, %89, %cst_45 {dimension_numbers = #tpu.dot_dimension_numbers<[1], [0], [0], [1], [0, 0, 1, 1], [], []>} : vector<144x24xbf16>, vector<24x768xbf16>, vector<144x768xf32> -> vector<144x768xf32>
    %92 = vector.extract_strided_slice %91 {offsets = [64, 128], sizes = [16, 512], strides = [1, 1]} : vector<144x768xf32> to vector<16x512xf32>
    %93 = vector.extract_strided_slice %91 {offsets = [0, 111], sizes = [16, 512], strides = [1, 1]} : vector<144x768xf32> to vector<16x512xf32>
    %c0_46 = arith.constant 0 : index
    %c0_47 = arith.constant 0 : index
    %94 = vector.load %arg2[%c0_46, %c0_47] : memref<9x512xf32, #tpu.memory_space<vmem>>, vector<1x512xf32>
    %95 = vector.broadcast %94 : vector<1x512xf32> to vector<16x512xf32>
    %96 = arith.mulf %93, %95 : vector<16x512xf32>
    %97 = arith.addf %92, %96 : vector<16x512xf32>
    %98 = vector.extract_strided_slice %91 {offsets = [16, 112], sizes = [16, 512], strides = [1, 1]} : vector<144x768xf32> to vector<16x512xf32>
    %c1_48 = arith.constant 1 : index
    %c0_49 = arith.constant 0 : index
    %99 = vector.load %arg2[%c1_48, %c0_49] : memref<9x512xf32, #tpu.memory_space<vmem>>, vector<1x512xf32>
    %100 = vector.broadcast %99 : vector<1x512xf32> to vector<16x512xf32>
    %101 = arith.mulf %98, %100 : vector<16x512xf32>
    %102 = arith.addf %97, %101 : vector<16x512xf32>
    %103 = vector.extract_strided_slice %91 {offsets = [32, 113], sizes = [16, 512], strides = [1, 1]} : vector<144x768xf32> to vector<16x512xf32>
    %c2_50 = arith.constant 2 : index
    %c0_51 = arith.constant 0 : index
    %104 = vector.load %arg2[%c2_50, %c0_51] : memref<9x512xf32, #tpu.memory_space<vmem>>, vector<1x512xf32>
    %105 = vector.broadcast %104 : vector<1x512xf32> to vector<16x512xf32>
    %106 = arith.mulf %103, %105 : vector<16x512xf32>
    %107 = arith.addf %102, %106 : vector<16x512xf32>
    %108 = vector.extract_strided_slice %91 {offsets = [48, 127], sizes = [16, 512], strides = [1, 1]} : vector<144x768xf32> to vector<16x512xf32>
    %c3_52 = arith.constant 3 : index
    %c0_53 = arith.constant 0 : index
    %109 = vector.load %arg2[%c3_52, %c0_53] : memref<9x512xf32, #tpu.memory_space<vmem>>, vector<1x512xf32>
    %110 = vector.broadcast %109 : vector<1x512xf32> to vector<16x512xf32>
    %111 = arith.mulf %108, %110 : vector<16x512xf32>
    %112 = arith.addf %107, %111 : vector<16x512xf32>
    %113 = vector.extract_strided_slice %91 {offsets = [80, 129], sizes = [16, 512], strides = [1, 1]} : vector<144x768xf32> to vector<16x512xf32>
    %c5_54 = arith.constant 5 : index
    %c0_55 = arith.constant 0 : index
    %114 = vector.load %arg2[%c5_54, %c0_55] : memref<9x512xf32, #tpu.memory_space<vmem>>, vector<1x512xf32>
    %115 = vector.broadcast %114 : vector<1x512xf32> to vector<16x512xf32>
    %116 = arith.mulf %113, %115 : vector<16x512xf32>
    %117 = arith.addf %112, %116 : vector<16x512xf32>
    %118 = vector.extract_strided_slice %91 {offsets = [96, 143], sizes = [16, 512], strides = [1, 1]} : vector<144x768xf32> to vector<16x512xf32>
    %c6_56 = arith.constant 6 : index
    %c0_57 = arith.constant 0 : index
    %119 = vector.load %arg2[%c6_56, %c0_57] : memref<9x512xf32, #tpu.memory_space<vmem>>, vector<1x512xf32>
    %120 = vector.broadcast %119 : vector<1x512xf32> to vector<16x512xf32>
    %121 = arith.mulf %118, %120 : vector<16x512xf32>
    %122 = arith.addf %117, %121 : vector<16x512xf32>
    %123 = vector.extract_strided_slice %91 {offsets = [112, 144], sizes = [16, 512], strides = [1, 1]} : vector<144x768xf32> to vector<16x512xf32>
    %c7_58 = arith.constant 7 : index
    %c0_59 = arith.constant 0 : index
    %124 = vector.load %arg2[%c7_58, %c0_59] : memref<9x512xf32, #tpu.memory_space<vmem>>, vector<1x512xf32>
    %125 = vector.broadcast %124 : vector<1x512xf32> to vector<16x512xf32>
    %126 = arith.mulf %123, %125 : vector<16x512xf32>
    %127 = arith.addf %122, %126 : vector<16x512xf32>
    %128 = vector.extract_strided_slice %91 {offsets = [128, 145], sizes = [16, 512], strides = [1, 1]} : vector<144x768xf32> to vector<16x512xf32>
    %c8_60 = arith.constant 8 : index
    %c0_61 = arith.constant 0 : index
    %129 = vector.load %arg2[%c8_60, %c0_61] : memref<9x512xf32, #tpu.memory_space<vmem>>, vector<1x512xf32>
    %130 = vector.broadcast %129 : vector<1x512xf32> to vector<16x512xf32>
    %131 = arith.mulf %128, %130 : vector<16x512xf32>
    %132 = arith.addf %127, %131 : vector<16x512xf32>
    %c0_62 = arith.constant 0 : index
    %c0_63 = arith.constant 0 : index
    %133 = vector.load %arg8[%c0_62, %c0_63] : memref<16x1xf32, #tpu.memory_space<vmem>>, vector<16x1xf32>
    %134 = vector.broadcast %133 : vector<16x1xf32> to vector<16x512xf32>
    %135 = arith.addf %132, %134 : vector<16x512xf32>
    %cst_64 = arith.constant 0.000000e+00 : f32
    %136 = vector.broadcast %cst_64 : f32 to vector<16x512xf32>
    %137 = arith.maximumf %135, %136 : vector<16x512xf32>
    %cst_65 = arith.constant dense<0.000000e+00> : vector<16xf32>
    %138 = vector.multi_reduction <add>, %137, %cst_65 [1] : vector<16x512xf32> to vector<16xf32>
    %139 = vector.shape_cast %138 : vector<16xf32> to vector<16x1xf32>
    %140 = arith.mulf %137, %137 : vector<16x512xf32>
    %cst_66 = arith.constant dense<0.000000e+00> : vector<16xf32>
    %141 = vector.multi_reduction <add>, %140, %cst_66 [1] : vector<16x512xf32> to vector<16xf32>
    %142 = vector.shape_cast %141 : vector<16xf32> to vector<16x1xf32>
    %cst_67 = arith.constant 0.001953125 : f32
    %143 = vector.broadcast %cst_67 : f32 to vector<16x1xf32>
    %144 = arith.mulf %139, %143 : vector<16x1xf32>
    %cst_68 = arith.constant 0.001953125 : f32
    %145 = vector.broadcast %cst_68 : f32 to vector<16x1xf32>
    %146 = arith.mulf %142, %145 : vector<16x1xf32>
    %147 = arith.mulf %144, %144 : vector<16x1xf32>
    %148 = arith.subf %146, %147 : vector<16x1xf32>
    %cst_69 = arith.constant 0.000000e+00 : f32
    %149 = vector.broadcast %cst_69 : f32 to vector<16x1xf32>
    %150 = arith.maximumf %148, %149 : vector<16x1xf32>
    %151 = vector.broadcast %144 : vector<16x1xf32> to vector<16x512xf32>
    %152 = arith.subf %137, %151 : vector<16x512xf32>
    %cst_70 = arith.constant 9.99999974E-6 : f32
    %153 = vector.broadcast %cst_70 : f32 to vector<16x1xf32>
    %154 = arith.addf %150, %153 : vector<16x1xf32>
    %155 = math.rsqrt %154 : vector<16x1xf32>
    %156 = vector.broadcast %155 : vector<16x1xf32> to vector<16x512xf32>
    %157 = arith.mulf %152, %156 : vector<16x512xf32>
    %c0_71 = arith.constant 0 : index
    %c0_72 = arith.constant 0 : index
    %158 = vector.load %arg9[%c0_71, %c0_72] : memref<16x1xf32, #tpu.memory_space<vmem>>, vector<16x1xf32>
    %159 = vector.broadcast %158 : vector<16x1xf32> to vector<16x512xf32>
    %160 = arith.mulf %157, %159 : vector<16x512xf32>
    %c0_73 = arith.constant 0 : index
    %c0_74 = arith.constant 0 : index
    %161 = vector.load %arg10[%c0_73, %c0_74] : memref<16x1xf32, #tpu.memory_space<vmem>>, vector<16x1xf32>
    %162 = vector.broadcast %161 : vector<16x1xf32> to vector<16x512xf32>
    %163 = arith.addf %160, %162 : vector<16x512xf32>
    %c24 = arith.constant 24 : index
    %c128_75 = arith.constant 128 : index
    %164 = vector.load %arg21[%c24, %c128_75] : memref<56x768xf32, #tpu.memory_space<vmem>>, vector<16x512xf32>
    tpu.vector_store %arg21[%c24, %c128_75], %163 {strides = array<i32>} : memref<56x768xf32, #tpu.memory_space<vmem>>, vector<16x512xf32>,
    %165 = vector.extract_strided_slice %163 {offsets = [0, 0], sizes = [12, 512], strides = [1, 1]} : vector<16x512xf32> to vector<12x512xf32>
    %c16 = arith.constant 16 : index
    %c0_76 = arith.constant 0 : index
    %166 = vector.load %arg20[%c16, %c0_76] : memref<40x512xf32, #tpu.memory_space<vmem>>, vector<12x512xf32>
    tpu.vector_store %arg20[%c16, %c0_76], %165 {strides = array<i32>} : memref<40x512xf32, #tpu.memory_space<vmem>>, vector<12x512xf32>,
    %c0_77 = arith.constant 0 : index
    %c0_78 = arith.constant 0 : index
    %167 = vector.load %arg21[%c0_77, %c0_78] : memref<56x768xf32, #tpu.memory_space<vmem>>, vector<40x768xf32>
    %168 = arith.truncf %167 : vector<40x768xf32> to vector<40x768xbf16>
    %c0_79 = arith.constant 0 : index
    %c0_80 = arith.constant 0 : index
    %169 = vector.load %arg11[%c0_79, %c0_80] : memref<144x40xbf16, #tpu.memory_space<vmem>>, vector<144x40xbf16>
    %cst_81 = arith.constant dense<0.000000e+00> : vector<144x768xf32>
    %170 = tpu.matmul %169, %168, %cst_81 {dimension_numbers = #tpu.dot_dimension_numbers<[1], [0], [0], [1], [0, 0, 1, 1], [], []>} : vector<144x40xbf16>, vector<40x768xbf16>, vector<144x768xf32> -> vector<144x768xf32>
    %171 = vector.extract_strided_slice %170 {offsets = [64, 128], sizes = [16, 512], strides = [1, 1]} : vector<144x768xf32> to vector<16x512xf32>
    %172 = vector.extract_strided_slice %170 {offsets = [0, 111], sizes = [16, 512], strides = [1, 1]} : vector<144x768xf32> to vector<16x512xf32>
    %c0_82 = arith.constant 0 : index
    %c0_83 = arith.constant 0 : index
    %173 = vector.load %arg2[%c0_82, %c0_83] : memref<9x512xf32, #tpu.memory_space<vmem>>, vector<1x512xf32>
    %174 = vector.broadcast %173 : vector<1x512xf32> to vector<16x512xf32>
    %175 = arith.mulf %172, %174 : vector<16x512xf32>
    %176 = arith.addf %171, %175 : vector<16x512xf32>
    %177 = vector.extract_strided_slice %170 {offsets = [16, 112], sizes = [16, 512], strides = [1, 1]} : vector<144x768xf32> to vector<16x512xf32>
    %c1_84 = arith.constant 1 : index
    %c0_85 = arith.constant 0 : index
    %178 = vector.load %arg2[%c1_84, %c0_85] : memref<9x512xf32, #tpu.memory_space<vmem>>, vector<1x512xf32>
    %179 = vector.broadcast %178 : vector<1x512xf32> to vector<16x512xf32>
    %180 = arith.mulf %177, %179 : vector<16x512xf32>
    %181 = arith.addf %176, %180 : vector<16x512xf32>
    %182 = vector.extract_strided_slice %170 {offsets = [32, 113], sizes = [16, 512], strides = [1, 1]} : vector<144x768xf32> to vector<16x512xf32>
    %c2_86 = arith.constant 2 : index
    %c0_87 = arith.constant 0 : index
    %183 = vector.load %arg2[%c2_86, %c0_87] : memref<9x512xf32, #tpu.memory_space<vmem>>, vector<1x512xf32>
    %184 = vector.broadcast %183 : vector<1x512xf32> to vector<16x512xf32>
    %185 = arith.mulf %182, %184 : vector<16x512xf32>
    %186 = arith.addf %181, %185 : vector<16x512xf32>
    %187 = vector.extract_strided_slice %170 {offsets = [48, 127], sizes = [16, 512], strides = [1, 1]} : vector<144x768xf32> to vector<16x512xf32>
    %c3_88 = arith.constant 3 : index
    %c0_89 = arith.constant 0 : index
    %188 = vector.load %arg2[%c3_88, %c0_89] : memref<9x512xf32, #tpu.memory_space<vmem>>, vector<1x512xf32>
    %189 = vector.broadcast %188 : vector<1x512xf32> to vector<16x512xf32>
    %190 = arith.mulf %187, %189 : vector<16x512xf32>
    %191 = arith.addf %186, %190 : vector<16x512xf32>
    %192 = vector.extract_strided_slice %170 {offsets = [80, 129], sizes = [16, 512], strides = [1, 1]} : vector<144x768xf32> to vector<16x512xf32>
    %c5_90 = arith.constant 5 : index
    %c0_91 = arith.constant 0 : index
    %193 = vector.load %arg2[%c5_90, %c0_91] : memref<9x512xf32, #tpu.memory_space<vmem>>, vector<1x512xf32>
    %194 = vector.broadcast %193 : vector<1x512xf32> to vector<16x512xf32>
    %195 = arith.mulf %192, %194 : vector<16x512xf32>
    %196 = arith.addf %191, %195 : vector<16x512xf32>
    %197 = vector.extract_strided_slice %170 {offsets = [96, 143], sizes = [16, 512], strides = [1, 1]} : vector<144x768xf32> to vector<16x512xf32>
    %c6_92 = arith.constant 6 : index
    %c0_93 = arith.constant 0 : index
    %198 = vector.load %arg2[%c6_92, %c0_93] : memref<9x512xf32, #tpu.memory_space<vmem>>, vector<1x512xf32>
    %199 = vector.broadcast %198 : vector<1x512xf32> to vector<16x512xf32>
    %200 = arith.mulf %197, %199 : vector<16x512xf32>
    %201 = arith.addf %196, %200 : vector<16x512xf32>
    %202 = vector.extract_strided_slice %170 {offsets = [112, 144], sizes = [16, 512], strides = [1, 1]} : vector<144x768xf32> to vector<16x512xf32>
    %c7_94 = arith.constant 7 : index
    %c0_95 = arith.constant 0 : index
    %203 = vector.load %arg2[%c7_94, %c0_95] : memref<9x512xf32, #tpu.memory_space<vmem>>, vector<1x512xf32>
    %204 = vector.broadcast %203 : vector<1x512xf32> to vector<16x512xf32>
    %205 = arith.mulf %202, %204 : vector<16x512xf32>
    %206 = arith.addf %201, %205 : vector<16x512xf32>
    %207 = vector.extract_strided_slice %170 {offsets = [128, 145], sizes = [16, 512], strides = [1, 1]} : vector<144x768xf32> to vector<16x512xf32>
    %c8_96 = arith.constant 8 : index
    %c0_97 = arith.constant 0 : index
    %208 = vector.load %arg2[%c8_96, %c0_97] : memref<9x512xf32, #tpu.memory_space<vmem>>, vector<1x512xf32>
    %209 = vector.broadcast %208 : vector<1x512xf32> to vector<16x512xf32>
    %210 = arith.mulf %207, %209 : vector<16x512xf32>
    %211 = arith.addf %206, %210 : vector<16x512xf32>
    %c0_98 = arith.constant 0 : index
    %c0_99 = arith.constant 0 : index
    %212 = vector.load %arg12[%c0_98, %c0_99] : memref<16x1xf32, #tpu.memory_space<vmem>>, vector<16x1xf32>
    %213 = vector.broadcast %212 : vector<16x1xf32> to vector<16x512xf32>
    %214 = arith.addf %211, %213 : vector<16x512xf32>
    %cst_100 = arith.constant 0.000000e+00 : f32
    %215 = vector.broadcast %cst_100 : f32 to vector<16x512xf32>
    %216 = arith.maximumf %214, %215 : vector<16x512xf32>
    %cst_101 = arith.constant dense<0.000000e+00> : vector<16xf32>
    %217 = vector.multi_reduction <add>, %216, %cst_101 [1] : vector<16x512xf32> to vector<16xf32>
    %218 = vector.shape_cast %217 : vector<16xf32> to vector<16x1xf32>
    %219 = arith.mulf %216, %216 : vector<16x512xf32>
    %cst_102 = arith.constant dense<0.000000e+00> : vector<16xf32>
    %220 = vector.multi_reduction <add>, %219, %cst_102 [1] : vector<16x512xf32> to vector<16xf32>
    %221 = vector.shape_cast %220 : vector<16xf32> to vector<16x1xf32>
    %cst_103 = arith.constant 0.001953125 : f32
    %222 = vector.broadcast %cst_103 : f32 to vector<16x1xf32>
    %223 = arith.mulf %218, %222 : vector<16x1xf32>
    %cst_104 = arith.constant 0.001953125 : f32
    %224 = vector.broadcast %cst_104 : f32 to vector<16x1xf32>
    %225 = arith.mulf %221, %224 : vector<16x1xf32>
    %226 = arith.mulf %223, %223 : vector<16x1xf32>
    %227 = arith.subf %225, %226 : vector<16x1xf32>
    %cst_105 = arith.constant 0.000000e+00 : f32
    %228 = vector.broadcast %cst_105 : f32 to vector<16x1xf32>
    %229 = arith.maximumf %227, %228 : vector<16x1xf32>
    %230 = vector.broadcast %223 : vector<16x1xf32> to vector<16x512xf32>
    %231 = arith.subf %216, %230 : vector<16x512xf32>
    %cst_106 = arith.constant 9.99999974E-6 : f32
    %232 = vector.broadcast %cst_106 : f32 to vector<16x1xf32>
    %233 = arith.addf %229, %232 : vector<16x1xf32>
    %234 = math.rsqrt %233 : vector<16x1xf32>
    %235 = vector.broadcast %234 : vector<16x1xf32> to vector<16x512xf32>
    %236 = arith.mulf %231, %235 : vector<16x512xf32>
    %c0_107 = arith.constant 0 : index
    %c0_108 = arith.constant 0 : index
    %237 = vector.load %arg13[%c0_107, %c0_108] : memref<16x1xf32, #tpu.memory_space<vmem>>, vector<16x1xf32>
    %238 = vector.broadcast %237 : vector<16x1xf32> to vector<16x512xf32>
    %239 = arith.mulf %236, %238 : vector<16x512xf32>
    %c0_109 = arith.constant 0 : index
    %c0_110 = arith.constant 0 : index
    %240 = vector.load %arg14[%c0_109, %c0_110] : memref<16x1xf32, #tpu.memory_space<vmem>>, vector<16x1xf32>
    %241 = vector.broadcast %240 : vector<16x1xf32> to vector<16x512xf32>
    %242 = arith.addf %239, %241 : vector<16x512xf32>
    %c40 = arith.constant 40 : index
    %c128_111 = arith.constant 128 : index
    %243 = vector.load %arg21[%c40, %c128_111] : memref<56x768xf32, #tpu.memory_space<vmem>>, vector<16x512xf32>
    tpu.vector_store %arg21[%c40, %c128_111], %242 {strides = array<i32>} : memref<56x768xf32, #tpu.memory_space<vmem>>, vector<16x512xf32>,
    %244 = vector.extract_strided_slice %242 {offsets = [0, 0], sizes = [12, 512], strides = [1, 1]} : vector<16x512xf32> to vector<12x512xf32>
    %c28 = arith.constant 28 : index
    %c0_112 = arith.constant 0 : index
    %245 = vector.load %arg20[%c28, %c0_112] : memref<40x512xf32, #tpu.memory_space<vmem>>, vector<12x512xf32>
    tpu.vector_store %arg20[%c28, %c0_112], %244 {strides = array<i32>} : memref<40x512xf32, #tpu.memory_space<vmem>>, vector<12x512xf32>,
    %c0_113 = arith.constant 0 : index
    %c128_114 = arith.constant 128 : index
    %246 = vector.load %arg21[%c0_113, %c128_114] : memref<56x768xf32, #tpu.memory_space<vmem>>, vector<56x512xf32>
    %247 = arith.truncf %246 : vector<56x512xf32> to vector<56x512xbf16>
    %c0_115 = arith.constant 0 : index
    %c0_116 = arith.constant 0 : index
    %248 = vector.load %arg15[%c0_115, %c0_116] : memref<8x56xbf16, #tpu.memory_space<vmem>>, vector<8x56xbf16>
    %cst_117 = arith.constant dense<0.000000e+00> : vector<8x512xf32>
    %249 = tpu.matmul %248, %247, %cst_117 {dimension_numbers = #tpu.dot_dimension_numbers<[1], [0], [0], [1], [0, 0, 1, 1], [], []>} : vector<8x56xbf16>, vector<56x512xbf16>, vector<8x512xf32> -> vector<8x512xf32>
    %c0_118 = arith.constant 0 : index
    %c0_119 = arith.constant 0 : index
    %250 = vector.load %arg16[%c0_118, %c0_119] : memref<8x1xf32, #tpu.memory_space<vmem>>, vector<8x1xf32>
    %251 = vector.broadcast %250 : vector<8x1xf32> to vector<8x512xf32>
    %252 = arith.addf %249, %251 : vector<8x512xf32>
    %cst_120 = arith.constant 0.000000e+00 : f32
    %253 = vector.broadcast %cst_120 : f32 to vector<8x512xf32>
    %254 = arith.maximumf %252, %253 : vector<8x512xf32>
    %cst_121 = arith.constant dense<0.000000e+00> : vector<8xf32>
    %255 = vector.multi_reduction <add>, %254, %cst_121 [1] : vector<8x512xf32> to vector<8xf32>
    %256 = vector.shape_cast %255 : vector<8xf32> to vector<8x1xf32>
    %257 = arith.mulf %254, %254 : vector<8x512xf32>
    %cst_122 = arith.constant dense<0.000000e+00> : vector<8xf32>
    %258 = vector.multi_reduction <add>, %257, %cst_122 [1] : vector<8x512xf32> to vector<8xf32>
    %259 = vector.shape_cast %258 : vector<8xf32> to vector<8x1xf32>
    %cst_123 = arith.constant 0.001953125 : f32
    %260 = vector.broadcast %cst_123 : f32 to vector<8x1xf32>
    %261 = arith.mulf %256, %260 : vector<8x1xf32>
    %cst_124 = arith.constant 0.001953125 : f32
    %262 = vector.broadcast %cst_124 : f32 to vector<8x1xf32>
    %263 = arith.mulf %259, %262 : vector<8x1xf32>
    %264 = arith.mulf %261, %261 : vector<8x1xf32>
    %265 = arith.subf %263, %264 : vector<8x1xf32>
    %cst_125 = arith.constant 0.000000e+00 : f32
    %266 = vector.broadcast %cst_125 : f32 to vector<8x1xf32>
    %267 = arith.maximumf %265, %266 : vector<8x1xf32>
    %268 = vector.broadcast %261 : vector<8x1xf32> to vector<8x512xf32>
    %269 = arith.subf %254, %268 : vector<8x512xf32>
    %cst_126 = arith.constant 9.99999974E-6 : f32
    %270 = vector.broadcast %cst_126 : f32 to vector<8x1xf32>
    %271 = arith.addf %267, %270 : vector<8x1xf32>
    %272 = math.rsqrt %271 : vector<8x1xf32>
    %273 = vector.broadcast %272 : vector<8x1xf32> to vector<8x512xf32>
    %274 = arith.mulf %269, %273 : vector<8x512xf32>
    %c0_127 = arith.constant 0 : index
    %c0_128 = arith.constant 0 : index
    %275 = vector.load %arg17[%c0_127, %c0_128] : memref<8x1xf32, #tpu.memory_space<vmem>>, vector<8x1xf32>
    %276 = vector.broadcast %275 : vector<8x1xf32> to vector<8x512xf32>
    %277 = arith.mulf %274, %276 : vector<8x512xf32>
    %c0_129 = arith.constant 0 : index
    %c0_130 = arith.constant 0 : index
    %278 = vector.load %arg18[%c0_129, %c0_130] : memref<8x1xf32, #tpu.memory_space<vmem>>, vector<8x1xf32>
    %279 = vector.broadcast %278 : vector<8x1xf32> to vector<8x512xf32>
    %280 = arith.addf %277, %279 : vector<8x512xf32>
    %c0_131 = arith.constant 0 : index
    %c0_132 = arith.constant 0 : index
    %281 = vector.load %arg19[%c0_131, %c0_132] : memref<8x512xf32, #tpu.memory_space<vmem>>, vector<8x512xf32>
    tpu.vector_store %arg19[%c0_131, %c0_132], %280 {strides = array<i32>} : memref<8x512xf32, #tpu.memory_space<vmem>>, vector<8x512xf32>,
    return
  }
  func.func @transform_0(%arg0: i32) -> (i32, i32) {
    %c0_i32 = arith.constant 0 : i32
    %c0_i32_0 = arith.constant 0 : i32
    %c0_i32_1 = arith.constant 0 : i32
    return %c0_i32, %c0_i32_0 : i32, i32
  }
  func.func @transform_1(%arg0: i32) -> (i32, i32) {
    %c0_i32 = arith.constant 0 : i32
    %c0_i32_0 = arith.constant 0 : i32
    %c0_i32_1 = arith.constant 0 : i32
    return %c0_i32, %c0_i32_0 : i32, i32
  }
  func.func @transform_2(%arg0: i32) -> (i32, i32) {
    %c0_i32 = arith.constant 0 : i32
    %c0_i32_0 = arith.constant 0 : i32
    %c0_i32_1 = arith.constant 0 : i32
    return %c0_i32, %c0_i32_0 : i32, i32
  }
  func.func @transform_3(%arg0: i32) -> (i32, i32) {
    %c0_i32 = arith.constant 0 : i32
    %c0_i32_0 = arith.constant 0 : i32
    %c0_i32_1 = arith.constant 0 : i32
    return %c0_i32, %c0_i32_0 : i32, i32
  }
  func.func @transform_4(%arg0: i32) -> (i32, i32) {
    %c0_i32 = arith.constant 0 : i32
    %c0_i32_0 = arith.constant 0 : i32
    %c0_i32_1 = arith.constant 0 : i32
    return %c0_i32, %c0_i32_0 : i32, i32
  }
  func.func @transform_5(%arg0: i32) -> (i32, i32) {
    %c0_i32 = arith.constant 0 : i32
    %c0_i32_0 = arith.constant 0 : i32
    %c0_i32_1 = arith.constant 0 : i32
    return %c0_i32, %c0_i32_0 : i32, i32
  }
  func.func @transform_6(%arg0: i32) -> (i32, i32) {
    %c0_i32 = arith.constant 0 : i32
    %c0_i32_0 = arith.constant 0 : i32
    %c0_i32_1 = arith.constant 0 : i32
    return %c0_i32, %c0_i32_0 : i32, i32
  }
  func.func @transform_7(%arg0: i32) -> (i32, i32) {
    %c0_i32 = arith.constant 0 : i32
    %c0_i32_0 = arith.constant 0 : i32
    %c0_i32_1 = arith.constant 0 : i32
    return %c0_i32, %c0_i32_0 : i32, i32
  }
  func.func @transform_8(%arg0: i32) -> (i32, i32) {
    %c0_i32 = arith.constant 0 : i32
    %c0_i32_0 = arith.constant 0 : i32
    %c0_i32_1 = arith.constant 0 : i32
    return %c0_i32, %c0_i32_0 : i32, i32
  }
  func.func @transform_9(%arg0: i32) -> (i32, i32) {
    %c0_i32 = arith.constant 0 : i32
    %c0_i32_0 = arith.constant 0 : i32
    %c0_i32_1 = arith.constant 0 : i32
    return %c0_i32, %c0_i32_0 : i32, i32
  }
  func.func @transform_10(%arg0: i32) -> (i32, i32) {
    %c0_i32 = arith.constant 0 : i32
    %c0_i32_0 = arith.constant 0 : i32
    %c0_i32_1 = arith.constant 0 : i32
    return %c0_i32, %c0_i32_0 : i32, i32
  }
  func.func @transform_11(%arg0: i32) -> (i32, i32) {
    %c0_i32 = arith.constant 0 : i32
    %c0_i32_0 = arith.constant 0 : i32
    %c0_i32_1 = arith.constant 0 : i32
    return %c0_i32, %c0_i32_0 : i32, i32
  }
  func.func @transform_12(%arg0: i32) -> (i32, i32) {
    %c0_i32 = arith.constant 0 : i32
    %c0_i32_0 = arith.constant 0 : i32
    %c0_i32_1 = arith.constant 0 : i32
    return %c0_i32, %c0_i32_0 : i32, i32
  }
  func.func @transform_13(%arg0: i32) -> (i32, i32) {
    %c0_i32 = arith.constant 0 : i32
    %c0_i32_0 = arith.constant 0 : i32
    %c0_i32_1 = arith.constant 0 : i32
    return %c0_i32, %c0_i32_0 : i32, i32
  }
  func.func @transform_14(%arg0: i32) -> (i32, i32) {
    %c0_i32 = arith.constant 0 : i32
    %c0_i32_0 = arith.constant 0 : i32
    %c0_i32_1 = arith.constant 0 : i32
    return %c0_i32, %c0_i32_0 : i32, i32
  }
  func.func @transform_15(%arg0: i32) -> (i32, i32) {
    %c0_i32 = arith.constant 0 : i32
    %c0_i32_0 = arith.constant 0 : i32
    %c0_i32_1 = arith.constant 0 : i32
    return %c0_i32, %c0_i32_0 : i32, i32
  }
  func.func @transform_16(%arg0: i32) -> (i32, i32) {
    %c0_i32 = arith.constant 0 : i32
    %c0_i32_0 = arith.constant 0 : i32
    %c0_i32_1 = arith.constant 0 : i32
    return %c0_i32, %c0_i32_0 : i32, i32
  }
  func.func @transform_17(%arg0: i32) -> (i32, i32) {
    %c0_i32 = arith.constant 0 : i32
    %c0_i32_0 = arith.constant 0 : i32
    %c0_i32_1 = arith.constant 0 : i32
    return %c0_i32, %c0_i32_0 : i32, i32
  }
  func.func @transform_18(%arg0: i32) -> (i32, i32) {
    %c0_i32 = arith.constant 0 : i32
    %c0_i32_0 = arith.constant 0 : i32
    %c0_i32_1 = arith.constant 0 : i32
    return %c0_i32, %c0_i32_0 : i32, i32
  }
  func.func @transform_19(%arg0: i32) -> (i32, i32) {
    %c0_i32 = arith.constant 0 : i32
    %c0_i32_0 = arith.constant 0 : i32
    %c0_i32_1 = arith.constant 0 : i32
    return %c0_i32, %c0_i32_0 : i32, i32
  }
}

</mosaic_0001>

<llo_original>
// kernel: dense_conv_block_forward.1
$region0: #{dense_conv_block_forward.1}
  #allocation0 [shape = 'u32[]', space=smem, size = 0x4, offset = 0x4, fixed_abs, tag = 'smem constant byte address 0x4 - core index']
  #allocation1 [shape = 'u32[144,128]{1,0:T(1,128)}', space=vmem, size = 0x12000, scoped, tag = 'internal scratch']
  #allocation2 [shape = 'f32[56,768]{1,0:T(8,128)}', space=vmem, size = 0x2a000, scoped, tag = 'scratch operand']
  %s0 = inlined_call_operand.vmem [shape: f32[4,512], index: 0, kind: input, shape index: {}]
  %s1 = inlined_call_operand.vmem [shape: f32[9,512], index: 1, kind: input, shape index: {}]
  %s2 = inlined_call_operand.vmem [shape: bf16[144,8], index: 2, kind: input, shape index: {}]
  %s3 = inlined_call_operand.vmem [shape: f32[16,1], index: 3, kind: input, shape index: {}]
  %s4 = inlined_call_operand.vmem [shape: f32[16,1], index: 4, kind: input, shape index: {}]
  %s5 = inlined_call_operand.vmem [shape: f32[16,1], index: 5, kind: input, shape index: {}]
  %s6 = inlined_call_operand.vmem [shape: bf16[144,24], index: 6, kind: input, shape index: {}]
  %s7 = inlined_call_operand.vmem [shape: f32[16,1], index: 7, kind: input, shape index: {}]
  %s8 = inlined_call_operand.vmem [shape: f32[16,1], index: 8, kind: input, shape index: {}]
  %s9 = inlined_call_operand.vmem [shape: f32[16,1], index: 9, kind: input, shape index: {}]
  %s10 = inlined_call_operand.vmem [shape: bf16[144,40], index: 10, kind: input, shape index: {}]
  %s11 = inlined_call_operand.vmem [shape: f32[16,1], index: 11, kind: input, shape index: {}]
  %s12 = inlined_call_operand.vmem [shape: f32[16,1], index: 12, kind: input, shape index: {}]
  %s13 = inlined_call_operand.vmem [shape: f32[16,1], index: 13, kind: input, shape index: {}]
  %s14 = inlined_call_operand.vmem [shape: bf16[8,56], index: 14, kind: input, shape index: {}]
  %s15 = inlined_call_operand.vmem [shape: f32[8,1], index: 15, kind: input, shape index: {}]
  %s16 = inlined_call_operand.vmem [shape: f32[8,1], index: 16, kind: input, shape index: {}]
  %s17 = inlined_call_operand.vmem [shape: f32[8,1], index: 17, kind: input, shape index: {}]
  %s18 = inlined_call_operand.vmem [shape: f32[8,512], index: 18, kind: output, shape index: {0}]
  %s19 = inlined_call_operand.vmem [shape: f32[40,512], index: 19, kind: output, shape index: {1}]
  %20 = xla_tuple %s18, %s19
  %s21 = sld [smem:[#allocation0]]
  $region90: #{dense_conv_block_forward.1} parent=0
    _
  %s23 = ssub.s32 1, %s21
  %s24 = scalar_select 0, %s23, %s21
  // Predicated region
  $region2: #{dense_conv_block_forward.1} parent=0 // pred_check
    _
  $region3: #{dense_conv_block_forward.1} parent=0 // pred_check_branch
    %26 = sbr.rel (0) target = $region5
  $region4: #{dense_conv_block_forward.1} parent=0 // pred_region
    _
  $region5: #{dense_conv_block_forward.1} parent=0 // pred_fallthru
    _
  // Predicated region
  $region6: #{dense_conv_block_forward.1} parent=0 // pred_check
    _
  $region7: #{dense_conv_block_forward.1} parent=0 // pred_check_branch
    %28 = sbr.rel (0) target = $region9
  $region8: #{dense_conv_block_forward.1} parent=0 // pred_region
    _
  $region9: #{dense_conv_block_forward.1} parent=0 // pred_fallthru
    _
  // Predicated region
  $region10: #{dense_conv_block_forward.1} parent=0 // pred_check
    _
  $region11: #{dense_conv_block_forward.1} parent=0 // pred_check_branch
    %30 = sbr.rel (0) target = $region13
  $region12: #{dense_conv_block_forward.1} parent=0 // pred_region
    _
  $region13: #{dense_conv_block_forward.1} parent=0 // pred_fallthru
    _
  // Predicated region
  $region14: #{dense_conv_block_forward.1} parent=0 // pred_check
    _
  $region15: #{dense_conv_block_forward.1} parent=0 // pred_check_branch
    %32 = sbr.rel (0) target = $region17
  $region16: #{dense_conv_block_forward.1} parent=0 // pred_region
    _
  $region17: #{dense_conv_block_forward.1} parent=0 // pred_fallthru
    _
  // Predicated region
  $region18: #{dense_conv_block_forward.1} parent=0 // pred_check
    _
  $region19: #{dense_conv_block_forward.1} parent=0 // pred_check_branch
    %34 = sbr.rel (0) target = $region21
  $region20: #{dense_conv_block_forward.1} parent=0 // pred_region
    _
  $region21: #{dense_conv_block_forward.1} parent=0 // pred_fallthru
    _
  // Predicated region
  $region22: #{dense_conv_block_forward.1} parent=0 // pred_check
    _
  $region23: #{dense_conv_block_forward.1} parent=0 // pred_check_branch
    %36 = sbr.rel (0) target = $region25
  $region24: #{dense_conv_block_forward.1} parent=0 // pred_region
    _
  $region25: #{dense_conv_block_forward.1} parent=0 // pred_fallthru
    _
  // Predicated region
  $region26: #{dense_conv_block_forward.1} parent=0 // pred_check
    _
  $region27: #{dense_conv_block_forward.1} parent=0 // pred_check_branch
    %38 = sbr.rel (0) target = $region29
  $region28: #{dense_conv_block_forward.1} parent=0 // pred_region
    _
  $region29: #{dense_conv_block_forward.1} parent=0 // pred_fallthru
    _
  // Predicated region
  $region30: #{dense_conv_block_forward.1} parent=0 // pred_check
    _
  $region31: #{dense_conv_block_forward.1} parent=0 // pred_check_branch
    %40 = sbr.rel (0) target = $region33
  $region32: #{dense_conv_block_forward.1} parent=0 // pred_region
    _
  $region33: #{dense_conv_block_forward.1} parent=0 // pred_fallthru
    _
  // Predicated region
  $region34: #{dense_conv_block_forward.1} parent=0 // pred_check
    _
  $region35: #{dense_conv_block_forward.1} parent=0 // pred_check_branch
    %42 = sbr.rel (0) target = $region37
  $region36: #{dense_conv_block_forward.1} parent=0 // pred_region
    _
  $region37: #{dense_conv_block_forward.1} parent=0 // pred_fallthru
    _
  // Predicated region
  $region38: #{dense_conv_block_forward.1} parent=0 // pred_check
    _
  $region39: #{dense_conv_block_forward.1} parent=0 // pred_check_branch
    %44 = sbr.rel (0) target = $region41
  $region40: #{dense_conv_block_forward.1} parent=0 // pred_region
    _
  $region41: #{dense_conv_block_forward.1} parent=0 // pred_fallthru
    _
  // Predicated region
  $region42: #{dense_conv_block_forward.1} parent=0 // pred_check
    _
  $region43: #{dense_conv_block_forward.1} parent=0 // pred_check_branch
    %46 = sbr.rel (0) target = $region45
  $region44: #{dense_conv_block_forward.1} parent=0 // pred_region
    _
  $region45: #{dense_conv_block_forward.1} parent=0 // pred_fallthru
    _
  // Predicated region
  $region46: #{dense_conv_block_forward.1} parent=0 // pred_check
    _
  $region47: #{dense_conv_block_forward.1} parent=0 // pred_check_branch
    %48 = sbr.rel (0) target = $region49
  $region48: #{dense_conv_block_forward.1} parent=0 // pred_region
    _
  $region49: #{dense_conv_block_forward.1} parent=0 // pred_fallthru
    _
  // Predicated region
  $region50: #{dense_conv_block_forward.1} parent=0 // pred_check
    _
  $region51: #{dense_conv_block_forward.1} parent=0 // pred_check_branch
    %50 = sbr.rel (0) target = $region53
  $region52: #{dense_conv_block_forward.1} parent=0 // pred_region
    _
  $region53: #{dense_conv_block_forward.1} parent=0 // pred_fallthru
    _
  // Predicated region
  $region54: #{dense_conv_block_forward.1} parent=0 // pred_check
    _
  $region55: #{dense_conv_block_forward.1} parent=0 // pred_check_branch
    %52 = sbr.rel (0) target = $region57
  $region56: #{dense_conv_block_forward.1} parent=0 // pred_region
    _
  $region57: #{dense_conv_block_forward.1} parent=0 // pred_fallthru
    _
  // Predicated region
  $region58: #{dense_conv_block_forward.1} parent=0 // pred_check
    _
  $region59: #{dense_conv_block_forward.1} parent=0 // pred_check_branch
    %54 = sbr.rel (0) target = $region61
  $region60: #{dense_conv_block_forward.1} parent=0 // pred_region
    _
  $region61: #{dense_conv_block_forward.1} parent=0 // pred_fallthru
    _
  // Predicated region
  $region62: #{dense_conv_block_forward.1} parent=0 // pred_check
    _
  $region63: #{dense_conv_block_forward.1} parent=0 // pred_check_branch
    %56 = sbr.rel (0) target = $region65
  $region64: #{dense_conv_block_forward.1} parent=0 // pred_region
    _
  $region65: #{dense_conv_block_forward.1} parent=0 // pred_fallthru
    _
  // Predicated region
  $region66: #{dense_conv_block_forward.1} parent=0 // pred_check
    _
  $region67: #{dense_conv_block_forward.1} parent=0 // pred_check_branch
    %58 = sbr.rel (0) target = $region69
  $region68: #{dense_conv_block_forward.1} parent=0 // pred_region
    _
  $region69: #{dense_conv_block_forward.1} parent=0 // pred_fallthru
    _
  // Predicated region
  $region70: #{dense_conv_block_forward.1} parent=0 // pred_check
    _
  $region71: #{dense_conv_block_forward.1} parent=0 // pred_check_branch
    %60 = sbr.rel (0) target = $region73
  $region72: #{dense_conv_block_forward.1} parent=0 // pred_region
    _
  $region73: #{dense_conv_block_forward.1} parent=0 // pred_fallthru
    _
  %62 = vst [vmem:[#allocation2] sm:$0xff] 0.0
  %63 = vst [vmem:[#allocation2 + $0x30] sm:$0xff] 0.0
  %64 = vst [vmem:[#allocation2 + $0x60] sm:$0xff] 0.0
  %65 = vst [vmem:[#allocation2 + $0x90] sm:$0xff] 0.0
  %66 = vst [vmem:[#allocation2 + $0xc0] sm:$0xff] 0.0
  %67 = vst [vmem:[#allocation2 + $0xf0] sm:$0xff] 0.0
  %68 = vst [vmem:[#allocation2 + $0x120] sm:$0xff] 0.0
  %69 = vst [vmem:[#allocation2 + $0x28] sm:$0xff] 0.0
  %70 = vst [vmem:[#allocation2 + $0x58] sm:$0xff] 0.0
  %71 = vst [vmem:[#allocation2 + $0x88] sm:$0xff] 0.0
  %72 = vst [vmem:[#allocation2 + $0xb8] sm:$0xff] 0.0
  %73 = vst [vmem:[#allocation2 + $0xe8] sm:$0xff] 0.0
  %74 = vst [vmem:[#allocation2 + $0x118] sm:$0xff] 0.0
  %75 = vst [vmem:[#allocation2 + $0x148] sm:$0xff] 0.0
  %76 = vst [vmem:[#allocation2 + $0x8] sm:$0xf0] 0.0
  %77 = vst [vmem:[#allocation2 + $0x10] sm:$0xf0] 0.0
  %78 = vst [vmem:[#allocation2 + $0x18] sm:$0xf0] 0.0
  %79 = vst [vmem:[#allocation2 + $0x20] sm:$0xf0] 0.0
  %v80 = vld [vmem:[%s0] sm:$0xff]
  %v81 = vld [vmem:[%s0 + $0x8] sm:$0xff]
  %v84 = vcombine.high %v80, %v80
  %v85 = vcombine.high %v81, %v81
  %88 = vst [vmem:[#allocation2 + $0x8] sm:$0xf] %v80
  %89 = vst [vmem:[#allocation2 + $0x10] sm:$0xf] %v84
  %90 = vst [vmem:[#allocation2 + $0x18] sm:$0xf] %v81
  %91 = vst [vmem:[#allocation2 + $0x20] sm:$0xf] %v85
  %92 = vst [vmem:[%s19] sm:$0xf] %v80
  %93 = vst [vmem:[%s19 + $0x8] sm:$0xf] %v84
  %94 = vst [vmem:[%s19 + $0x10] sm:$0xf] %v81
  %95 = vst [vmem:[%s19 + $0x18] sm:$0xf] %v85
  %v96 = vld [vmem:[#allocation2] sm:$0xff]
  %v97 = vld [vmem:[#allocation2 + $0x8] sm:$0xff]
  %v98 = vld [vmem:[#allocation2 + $0x10] sm:$0xff]
  %v99 = vld [vmem:[#allocation2 + $0x18] sm:$0xff]
  %v100 = vld [vmem:[#allocation2 + $0x20] sm:$0xff]
  %v101 = vld [vmem:[#allocation2 + $0x28] sm:$0xff]
  %v102 = vpack.c.bf16 %v96, %v96
  %v103 = vpack.c.bf16 %v97, %v97
  %v104 = vpack.c.bf16 %v98, %v98
  %v105 = vpack.c.bf16 %v99, %v99
  %v106 = vpack.c.bf16 %v100, %v100
  %v107 = vpack.c.bf16 %v101, %v101
  %v108 = vld [vmem:[%s2] sm:$0xf]
  %v109 = vld [vmem:[%s2 + $0x4] sm:$0xf]
  %v110 = vld [vmem:[%s2 + $0x8] sm:$0xf]
  %v111 = vld [vmem:[%s2 + $0xc] sm:$0xf]
  %v112 = vld [vmem:[%s2 + $0x10] sm:$0xf]
  %v113 = vld [vmem:[%s2 + $0x14] sm:$0xf]
  %v114 = vld [vmem:[%s2 + $0x18] sm:$0xf]
  %v115 = vld [vmem:[%s2 + $0x1c] sm:$0xf]
  %v116 = vld [vmem:[%s2 + $0x20] sm:$0xf]
  %v117 = vld [vmem:[%s2 + $0x24] sm:$0xf]
  %v118 = vld [vmem:[%s2 + $0x28] sm:$0xf]
  %v119 = vld [vmem:[%s2 + $0x2c] sm:$0xf]
  %v120 = vld [vmem:[%s2 + $0x30] sm:$0xf]
  %v121 = vld [vmem:[%s2 + $0x34] sm:$0xf]
  %v122 = vld [vmem:[%s2 + $0x38] sm:$0xf]
  %v123 = vld [vmem:[%s2 + $0x3c] sm:$0xf]
  %v124 = vld [vmem:[%s2 + $0x40] sm:$0xf]
  %v125 = vld [vmem:[%s2 + $0x44] sm:$0xf]
  %v144 = vunpack.c.l.b16 %v108
  %v145 = vunpack.c.l.b16 %v109
  %v146 = vunpack.c.l.b16 %v110
  %v147 = vunpack.c.l.b16 %v111
  %v148 = vunpack.c.l.b16 %v112
  %v149 = vunpack.c.l.b16 %v113
  %v150 = vunpack.c.l.b16 %v114
  %v151 = vunpack.c.l.b16 %v115
  %v152 = vunpack.c.l.b16 %v116
  %v153 = vunpack.c.l.b16 %v117
  %v154 = vunpack.c.l.b16 %v118
  %v155 = vunpack.c.l.b16 %v119
  %v156 = vunpack.c.l.b16 %v120
  %v157 = vunpack.c.l.b16 %v121
  %v158 = vunpack.c.l.b16 %v122
  %v159 = vunpack.c.l.b16 %v123
  %v160 = vunpack.c.l.b16 %v124
  %v161 = vunpack.c.l.b16 %v125
  %v162 = vpack.c.b16 %v145, %v144
  %v163 = vpack.c.b16 %v147, %v146
  %v164 = vpack.c.b16 %v149, %v148
  %v165 = vpack.c.b16 %v151, %v150
  %v166 = vpack.c.b16 %v153, %v152
  %v167 = vpack.c.b16 %v155, %v154
  %v168 = vpack.c.b16 %v157, %v156
  %v169 = vpack.c.b16 %v159, %v158
  %v170 = vpack.c.b16 %v161, %v160
  %vm171 = vcmask 64512
  %v173 = vsel %vm171, %v162, 0
  %v176 = vsel %vm171, %v163, 0
  %v179 = vsel %vm171, %v164, 0
  %v182 = vsel %vm171, %v165, 0
  %v185 = vsel %vm171, %v166, 0
  %v188 = vsel %vm171, %v167, 0
  %v191 = vsel %vm171, %v168, 0
  %v194 = vsel %vm171, %v169, 0
  %v197 = vsel %vm171, %v170, 0
  %vm199 = vcmask 1043456
  %v201 = vsel %vm199, %v102, 0
  %v204 = vsel %vm199, %v103, 0
  %v207 = vsel %vm199, %v104, 0
  %v210 = vsel %vm199, %v105, 0
  %v213 = vsel %vm199, %v106, 0
  %v216 = vsel %vm199, %v107, 0
  %218 = vmatprep.subr.bf16.mxu0 %v204
  %219 = vmatpush1.bf16.msra.mxu0 %v201
  %220 = vmatprep.subr.bf16.mxu0 0
  %221 = vmatpush1.bf16.msra.mxu0 0
  %222 = vmatprep.subr.bf16.mxu0 0
  %223 = vmatpush1.bf16.msra.mxu0 0
  %224 = vmatprep.subr.bf16.mxu0 0
  %225 = vmatpush1.bf16.msra.mxu0 0
  %226 = vmatprep.subr.bf16.mxu0 0
  %227 = vmatpush1.bf16.msra.mxu0 0
  %228 = vmatprep.subr.bf16.mxu0 0
  %229 = vmatpush1.bf16.msra.mxu0 0
  %230 = vmatprep.subr.bf16.mxu0 0
  %231 = vmatpush1.bf16.msra.mxu0 0
  %232 = vmatprep.subr.bf16.mxu0 0
  %233 = vmatpush1.bf16.msra.mxu0 0
  %234 = vmatprep.subr.bf16.mxu0 0
  %235 = vmatpush1.bf16.msra.mxu0 0
  %236 = vmatprep.subr.bf16.mxu0 0
  %237 = vmatpush1.bf16.msra.mxu0 0
  %238 = vmatprep.subr.bf16.mxu0 0
  %239 = vmatpush1.bf16.msra.mxu0 0
  %240 = vmatprep.subr.bf16.mxu0 0
  %241 = vmatpush1.bf16.msra.mxu0 0
  %242 = vmatprep.subr.bf16.mxu0 0
  %243 = vmatpush1.bf16.msra.mxu0 0
  %244 = vmatprep.subr.bf16.mxu0 0
  %245 = vmatpush1.bf16.msra.mxu0 0
  %246 = vmatprep.subr.bf16.mxu0 0
  %247 = vmatpush1.bf16.msra.mxu0 0
  %248 = vmatprep.subr.bf16.mxu0 0
  %249 = vmatpush1.bf16.msra.mxu0 0
  %250 = vmatprep.mubr.bf16.mxu0 0
  %251 = vmatmul.mubr.bf16.gmra.mrb[0].mxu0 %v173
  %v252 = vpop.f32.mrb[0].mxu0
  %v253 = vadd.f32 0.0, %v252
  %v254 = vpop.f32.mrb[0].mxu0
  %v255 = vadd.f32 0.0, %v254
  %v256 = vpop.f32.mrb[0].mxu0
  %v257 = vadd.f32 0.0, %v256
  %v258 = vpop.f32.mrb[0].mxu0
  %v259 = vadd.f32 0.0, %v258
  %260 = vmatprep.mubr.bf16.mxu0 0
  %261 = vmatmul.mubr.bf16.gmra.mrb[0].mxu0 %v176
  %v262 = vpop.f32.mrb[0].mxu0
  %v263 = vadd.f32 0.0, %v262
  %v264 = vpop.f32.mrb[0].mxu0
  %v265 = vadd.f32 0.0, %v264
  %v266 = vpop.f32.mrb[0].mxu0
  %v267 = vadd.f32 0.0, %v266
  %v268 = vpop.f32.mrb[0].mxu0
  %v269 = vadd.f32 0.0, %v268
  %270 = vmatprep.mubr.bf16.mxu0 0
  %271 = vmatmul.mubr.bf16.gmra.mrb[0].mxu0 %v179
  %v272 = vpop.f32.mrb[0].mxu0
  %v273 = vadd.f32 0.0, %v272
  %v274 = vpop.f32.mrb[0].mxu0
  %v275 = vadd.f32 0.0, %v274
  %v276 = vpop.f32.mrb[0].mxu0
  %v277 = vadd.f32 0.0, %v276
  %v278 = vpop.f32.mrb[0].mxu0
  %v279 = vadd.f32 0.0, %v278
  %280 = vmatprep.mubr.bf16.mxu0 0
  %281 = vmatmul.mubr.bf16.gmra.mrb[0].mxu0 %v182
  %v282 = vpop.f32.mrb[0].mxu0
  %v283 = vadd.f32 0.0, %v282
  %v284 = vpop.f32.mrb[0].mxu0
  %v285 = vadd.f32 0.0, %v284
  %v286 = vpop.f32.mrb[0].mxu0
  %v287 = vadd.f32 0.0, %v286
  %v288 = vpop.f32.mrb[0].mxu0
  %v289 = vadd.f32 0.0, %v288
  %290 = vmatprep.mubr.bf16.mxu0 0
  %291 = vmatmul.mubr.bf16.gmra.mrb[0].mxu0 %v185
  %v292 = vpop.f32.mrb[0].mxu0
  %v293 = vpop.f32.mrb[0].mxu0
  %v294 = vadd.f32 0.0, %v293
  %v295 = vpop.f32.mrb[0].mxu0
  %v296 = vpop.f32.mrb[0].mxu0
  %v297 = vadd.f32 0.0, %v296
  %298 = vmatprep.mubr.bf16.mxu0 0
  %299 = vmatmul.mubr.bf16.gmra.mrb[0].mxu0 %v188
  %v300 = vpop.f32.mrb[0].mxu0
  %v301 = vpop.f32.mrb[0].mxu0
  %v302 = vadd.f32 0.0, %v301
  %v303 = vpop.f32.mrb[0].mxu0
  %v304 = vpop.f32.mrb[0].mxu0
  %v305 = vadd.f32 0.0, %v304
  %306 = vmatprep.mubr.bf16.mxu0 0
  %307 = vmatmul.mubr.bf16.gmra.mrb[0].mxu0 %v191
  %v308 = vpop.f32.mrb[0].mxu0
  %v309 = vpop.f32.mrb[0].mxu0
  %v310 = vadd.f32 0.0, %v309
  %v311 = vpop.f32.mrb[0].mxu0
  %v312 = vpop.f32.mrb[0].mxu0
  %v313 = vadd.f32 0.0, %v312
  %314 = vmatprep.mubr.bf16.mxu0 0
  %315 = vmatmul.mubr.bf16.gmra.mrb[0].mxu0 %v194
  %v316 = vpop.f32.mrb[0].mxu0
  %v317 = vpop.f32.mrb[0].mxu0
  %v318 = vadd.f32 0.0, %v317
  %v319 = vpop.f32.mrb[0].mxu0
  %v320 = vpop.f32.mrb[0].mxu0
  %v321 = vadd.f32 0.0, %v320
  %322 = vmatprep.mubr.bf16.mxu0 0
  %323 = vmatmul.mubr.bf16.gmra.mrb[0].mxu0 %v197
  %v324 = vpop.f32.mrb[0].mxu0
  %v325 = vpop.f32.mrb[0].mxu0
  %v326 = vadd.f32 0.0, %v325
  %v327 = vpop.f32.mrb[0].mxu0
  %v328 = vpop.f32.mrb[0].mxu0
  %v329 = vadd.f32 0.0, %v328
  %330 = vdwg.mxu0
  %331 = vmatprep.subr.bf16.mxu0 %v210
  %332 = vmatpush1.bf16.msra.mxu0 %v207
  %333 = vmatprep.subr.bf16.mxu0 0
  %334 = vmatpush1.bf16.msra.mxu0 0
  %335 = vmatprep.subr.bf16.mxu0 0
  %336 = vmatpush1.bf16.msra.mxu0 0
  %337 = vmatprep.subr.bf16.mxu0 0
  %338 = vmatpush1.bf16.msra.mxu0 0
  %339 = vmatprep.subr.bf16.mxu0 0
  %340 = vmatpush1.bf16.msra.mxu0 0
  %341 = vmatprep.subr.bf16.mxu0 0
  %342 = vmatpush1.bf16.msra.mxu0 0
  %343 = vmatprep.subr.bf16.mxu0 0
  %344 = vmatpush1.bf16.msra.mxu0 0
  %345 = vmatprep.subr.bf16.mxu0 0
  %346 = vmatpush1.bf16.msra.mxu0 0
  %347 = vmatprep.subr.bf16.mxu0 0
  %348 = vmatpush1.bf16.msra.mxu0 0
  %349 = vmatprep.subr.bf16.mxu0 0
  %350 = vmatpush1.bf16.msra.mxu0 0
  %351 = vmatprep.subr.bf16.mxu0 0
  %352 = vmatpush1.bf16.msra.mxu0 0
  %353 = vmatprep.subr.bf16.mxu0 0
  %354 = vmatpush1.bf16.msra.mxu0 0
  %355 = vmatprep.subr.bf16.mxu0 0
  %356 = vmatpush1.bf16.msra.mxu0 0
  %357 = vmatprep.subr.bf16.mxu0 0
  %358 = vmatpush1.bf16.msra.mxu0 0
  %359 = vmatprep.subr.bf16.mxu0 0
  %360 = vmatpush1.bf16.msra.mxu0 0
  %361 = vmatprep.subr.bf16.mxu0 0
  %362 = vmatpush1.bf16.msra.mxu0 0
  %363 = vmatprep.mubr.bf16.mxu0 0
  %364 = vmatmul.mubr.bf16.gmra.mrb[0].mxu0 %v173
  %v365 = vpop.f32.mrb[0].mxu0
  %v366 = vadd.f32 0.0, %v365
  %v367 = vpop.f32.mrb[0].mxu0
  %v368 = vadd.f32 0.0, %v367
  %v369 = vpop.f32.mrb[0].mxu0
  %v370 = vadd.f32 0.0, %v369
  %v371 = vpop.f32.mrb[0].mxu0
  %v372 = vadd.f32 0.0, %v371
  %373 = vmatprep.mubr.bf16.mxu0 0
  %374 = vmatmul.mubr.bf16.gmra.mrb[0].mxu0 %v176
  %v375 = vpop.f32.mrb[0].mxu0
  %v376 = vadd.f32 0.0, %v375
  %v377 = vpop.f32.mrb[0].mxu0
  %v378 = vadd.f32 0.0, %v377
  %v379 = vpop.f32.mrb[0].mxu0
  %v380 = vadd.f32 0.0, %v379
  %v381 = vpop.f32.mrb[0].mxu0
  %v382 = vadd.f32 0.0, %v381
  %383 = vmatprep.mubr.bf16.mxu0 0
  %384 = vmatmul.mubr.bf16.gmra.mrb[0].mxu0 %v179
  %v385 = vpop.f32.mrb[0].mxu0
  %v386 = vadd.f32 0.0, %v385
  %v387 = vpop.f32.mrb[0].mxu0
  %v388 = vadd.f32 0.0, %v387
  %v389 = vpop.f32.mrb[0].mxu0
  %v390 = vadd.f32 0.0, %v389
  %v391 = vpop.f32.mrb[0].mxu0
  %v392 = vadd.f32 0.0, %v391
  %393 = vmatprep.mubr.bf16.mxu0 0
  %394 = vmatmul.mubr.bf16.gmra.mrb[0].mxu0 %v182
  %v395 = vpop.f32.mrb[0].mxu0
  %v396 = vadd.f32 0.0, %v395
  %v397 = vpop.f32.mrb[0].mxu0
  %v398 = vadd.f32 0.0, %v397
  %v399 = vpop.f32.mrb[0].mxu0
  %v400 = vadd.f32 0.0, %v399
  %v401 = vpop.f32.mrb[0].mxu0
  %v402 = vadd.f32 0.0, %v401
  %403 = vmatprep.mubr.bf16.mxu0 0
  %404 = vmatmul.mubr.bf16.gmra.mrb[0].mxu0 %v185
  %v405 = vpop.f32.mrb[0].mxu0
  %v406 = vadd.f32 0.0, %v405
  %v407 = vpop.f32.mrb[0].mxu0
  %v408 = vadd.f32 0.0, %v407
  %v409 = vpop.f32.mrb[0].mxu0
  %v410 = vadd.f32 0.0, %v409
  %v411 = vpop.f32.mrb[0].mxu0
  %v412 = vadd.f32 0.0, %v411
  %413 = vmatprep.mubr.bf16.mxu0 0
  %414 = vmatmul.mubr.bf16.gmra.mrb[0].mxu0 %v188
  %v415 = vpop.f32.mrb[0].mxu0
  %v416 = vadd.f32 0.0, %v415
  %v417 = vpop.f32.mrb[0].mxu0
  %v418 = vadd.f32 0.0, %v417
  %v419 = vpop.f32.mrb[0].mxu0
  %v420 = vadd.f32 0.0, %v419
  %v421 = vpop.f32.mrb[0].mxu0
  %v422 = vadd.f32 0.0, %v421
  %423 = vmatprep.mubr.bf16.mxu0 0
  %424 = vmatmul.mubr.bf16.gmra.mrb[0].mxu0 %v191
  %v425 = vpop.f32.mrb[0].mxu0
  %v426 = vadd.f32 0.0, %v425
  %v427 = vpop.f32.mrb[0].mxu0
  %v428 = vadd.f32 0.0, %v427
  %v429 = vpop.f32.mrb[0].mxu0
  %v430 = vadd.f32 0.0, %v429
  %v431 = vpop.f32.mrb[0].mxu0
  %v432 = vadd.f32 0.0, %v431
  %433 = vmatprep.mubr.bf16.mxu0 0
  %434 = vmatmul.mubr.bf16.gmra.mrb[0].mxu0 %v194
  %v435 = vpop.f32.mrb[0].mxu0
  %v436 = vadd.f32 0.0, %v435
  %v437 = vpop.f32.mrb[0].mxu0
  %v438 = vadd.f32 0.0, %v437
  %v439 = vpop.f32.mrb[0].mxu0
  %v440 = vadd.f32 0.0, %v439
  %v441 = vpop.f32.mrb[0].mxu0
  %v442 = vadd.f32 0.0, %v441
  %443 = vmatprep.mubr.bf16.mxu0 0
  %444 = vmatmul.mubr.bf16.gmra.mrb[0].mxu0 %v197
  %v445 = vpop.f32.mrb[0].mxu0
  %v446 = vadd.f32 0.0, %v445
  %v447 = vpop.f32.mrb[0].mxu0
  %v448 = vadd.f32 0.0, %v447
  %v449 = vpop.f32.mrb[0].mxu0
  %v450 = vadd.f32 0.0, %v449
  %v451 = vpop.f32.mrb[0].mxu0
  %v452 = vadd.f32 0.0, %v451
  %453 = vdwg.mxu0
  %454 = vmatprep.subr.bf16.mxu0 %v216
  %455 = vmatpush1.bf16.msra.mxu0 %v213
  %456 = vmatprep.subr.bf16.mxu0 0
  %457 = vmatpush1.bf16.msra.mxu0 0
  %458 = vmatprep.subr.bf16.mxu0 0
  %459 = vmatpush1.bf16.msra.mxu0 0
  %460 = vmatprep.subr.bf16.mxu0 0
  %461 = vmatpush1.bf16.msra.mxu0 0
  %462 = vmatprep.subr.bf16.mxu0 0
  %463 = vmatpush1.bf16.msra.mxu0 0
  %464 = vmatprep.subr.bf16.mxu0 0
  %465 = vmatpush1.bf16.msra.mxu0 0
  %466 = vmatprep.subr.bf16.mxu0 0
  %467 = vmatpush1.bf16.msra.mxu0 0
  %468 = vmatprep.subr.bf16.mxu0 0
  %469 = vmatpush1.bf16.msra.mxu0 0
  %470 = vmatprep.subr.bf16.mxu0 0
  %471 = vmatpush1.bf16.msra.mxu0 0
  %472 = vmatprep.subr.bf16.mxu0 0
  %473 = vmatpush1.bf16.msra.mxu0 0
  %474 = vmatprep.subr.bf16.mxu0 0
  %475 = vmatpush1.bf16.msra.mxu0 0
  %476 = vmatprep.subr.bf16.mxu0 0
  %477 = vmatpush1.bf16.msra.mxu0 0
  %478 = vmatprep.subr.bf16.mxu0 0
  %479 = vmatpush1.bf16.msra.mxu0 0
  %480 = vmatprep.subr.bf16.mxu0 0
  %481 = vmatpush1.bf16.msra.mxu0 0
  %482 = vmatprep.subr.bf16.mxu0 0
  %483 = vmatpush1.bf16.msra.mxu0 0
  %484 = vmatprep.subr.bf16.mxu0 0
  %485 = vmatpush1.bf16.msra.mxu0 0
  %486 = vmatprep.mubr.bf16.mxu0 0
  %487 = vmatmul.mubr.bf16.gmra.mrb[0].mxu0 %v173
  %v488 = vpop.f32.mrb[0].mxu0
  %v489 = vadd.f32 0.0, %v488
  %v490 = vpop.f32.mrb[0].mxu0
  %v491 = vpop.f32.mrb[0].mxu0
  %v492 = vadd.f32 0.0, %v491
  %v493 = vpop.f32.mrb[0].mxu0
  %494 = vmatprep.mubr.bf16.mxu0 0
  %495 = vmatmul.mubr.bf16.gmra.mrb[0].mxu0 %v176
  %v496 = vpop.f32.mrb[0].mxu0
  %v497 = vadd.f32 0.0, %v496
  %v498 = vpop.f32.mrb[0].mxu0
  %v499 = vpop.f32.mrb[0].mxu0
  %v500 = vadd.f32 0.0, %v499
  %v501 = vpop.f32.mrb[0].mxu0
  %502 = vmatprep.mubr.bf16.mxu0 0
  %503 = vmatmul.mubr.bf16.gmra.mrb[0].mxu0 %v179
  %v504 = vpop.f32.mrb[0].mxu0
  %v505 = vadd.f32 0.0, %v504
  %v506 = vpop.f32.mrb[0].mxu0
  %v507 = vpop.f32.mrb[0].mxu0
  %v508 = vadd.f32 0.0, %v507
  %v509 = vpop.f32.mrb[0].mxu0
  %510 = vmatprep.mubr.bf16.mxu0 0
  %511 = vmatmul.mubr.bf16.gmra.mrb[0].mxu0 %v182
  %v512 = vpop.f32.mrb[0].mxu0
  %v513 = vadd.f32 0.0, %v512
  %v514 = vpop.f32.mrb[0].mxu0
  %v515 = vpop.f32.mrb[0].mxu0
  %v516 = vadd.f32 0.0, %v515
  %v517 = vpop.f32.mrb[0].mxu0
  %518 = vmatprep.mubr.bf16.mxu0 0
  %519 = vmatmul.mubr.bf16.gmra.mrb[0].mxu0 %v185
  %v520 = vpop.f32.mrb[0].mxu0
  %v521 = vadd.f32 0.0, %v520
  %v522 = vpop.f32.mrb[0].mxu0
  %v523 = vpop.f32.mrb[0].mxu0
  %v524 = vadd.f32 0.0, %v523
  %v525 = vpop.f32.mrb[0].mxu0
  %526 = vmatprep.mubr.bf16.mxu0 0
  %527 = vmatmul.mubr.bf16.gmra.mrb[0].mxu0 %v188
  %v528 = vpop.f32.mrb[0].mxu0
  %v529 = vadd.f32 0.0, %v528
  %v530 = vpop.f32.mrb[0].mxu0
  %v531 = vadd.f32 0.0, %v530
  %v532 = vpop.f32.mrb[0].mxu0
  %v533 = vadd.f32 0.0, %v532
  %v534 = vpop.f32.mrb[0].mxu0
  %v535 = vadd.f32 0.0, %v534
  %536 = vmatprep.mubr.bf16.mxu0 0
  %537 = vmatmul.mubr.bf16.gmra.mrb[0].mxu0 %v191
  %v538 = vpop.f32.mrb[0].mxu0
  %v539 = vadd.f32 0.0, %v538
  %v540 = vpop.f32.mrb[0].mxu0
  %v541 = vadd.f32 0.0, %v540
  %v542 = vpop.f32.mrb[0].mxu0
  %v543 = vadd.f32 0.0, %v542
  %v544 = vpop.f32.mrb[0].mxu0
  %v545 = vadd.f32 0.0, %v544
  %546 = vmatprep.mubr.bf16.mxu0 0
  %547 = vmatmul.mubr.bf16.gmra.mrb[0].mxu0 %v194
  %v548 = vpop.f32.mrb[0].mxu0
  %v549 = vadd.f32 0.0, %v548
  %v550 = vpop.f32.mrb[0].mxu0
  %v551 = vadd.f32 0.0, %v550
  %v552 = vpop.f32.mrb[0].mxu0
  %v553 = vadd.f32 0.0, %v552
  %v554 = vpop.f32.mrb[0].mxu0
  %v555 = vadd.f32 0.0, %v554
  %556 = vmatprep.mubr.bf16.mxu0 0
  %557 = vmatmul.mubr.bf16.gmra.mrb[0].mxu0 %v197
  %v558 = vpop.f32.mrb[0].mxu0
  %v559 = vadd.f32 0.0, %v558
  %v560 = vpop.f32.mrb[0].mxu0
  %v561 = vadd.f32 0.0, %v560
  %v562 = vpop.f32.mrb[0].mxu0
  %v563 = vadd.f32 0.0, %v562
  %v564 = vpop.f32.mrb[0].mxu0
  %v565 = vadd.f32 0.0, %v564
  %566 = vdwg.mxu0
  %v567 = vld [vmem:[%s1] ss:$8 sm:$0xf]
  %v569 = vlaneseq
  %v570 = vshrl.u32 %v569, 7
  %v571 = vsub.s32 0, %v570
  %v572 = vrot.slane %v567, %v571
  %v573 = vlaneseq
  %v574 = vshrl.u32 %v573, 7
  %v575 = vsub.s32 1, %v574
  %v576 = vrot.slane %v567, %v575
  %v577 = vlaneseq
  %v578 = vshrl.u32 %v577, 7
  %v579 = vsub.s32 2, %v578
  %v580 = vrot.slane %v567, %v579
  %v581 = vlaneseq
  %v582 = vshrl.u32 %v581, 7
  %v583 = vsub.s32 3, %v582
  %v584 = vrot.slane %v567, %v583
  %585 = vrot.lane.b32.xlu0 %v572, 111
  %v586 = vpop.permute.xlu0 %585
  %587 = vrot.lane.b32.xlu0 %v576, 111
  %v588 = vpop.permute.xlu0 %587
  %589 = vrot.lane.b32.xlu0 %v580, 111
  %v590 = vpop.permute.xlu0 %589
  %591 = vrot.lane.b32.xlu0 %v584, 111
  %v592 = vpop.permute.xlu0 %591
  %vm593 = vcmask 908288
  %v594 = vsel %vm593, %v586, %v588
  %v595 = vsel %vm593, %v588, %v590
  %v596 = vsel %vm593, %v590, %v592
  %v602 = vmul.f32 %v253, %v586
  %v603 = vmul.f32 %v255, %v594
  %v604 = vmul.f32 %v366, %v595
  %v605 = vmul.f32 %v368, %v596
  %v606 = vmul.f32 %v489, %v592
  %v607 = vmul.f32 %v257, %v586
  %v608 = vmul.f32 %v259, %v594
  %v609 = vmul.f32 %v370, %v595
  %v610 = vmul.f32 %v372, %v596
  %v611 = vmul.f32 %v492, %v592
  %622 = vrot.lane.b32.xlu0 %v602, 17
  %v623 = vpop.permute.xlu0 %622
  %624 = vrot.lane.b32.xlu0 %v603, 17
  %v625 = vpop.permute.xlu0 %624
  %626 = vrot.lane.b32.xlu0 %v604, 17
  %v627 = vpop.permute.xlu0 %626
  %628 = vrot.lane.b32.xlu0 %v605, 17
  %v629 = vpop.permute.xlu0 %628
  %630 = vrot.lane.b32.xlu0 %v606, 17
  %v631 = vpop.permute.xlu0 %630
  %632 = vrot.lane.b32.xlu0 %v607, 17
  %v633 = vpop.permute.xlu0 %632
  %634 = vrot.lane.b32.xlu0 %v608, 17
  %v635 = vpop.permute.xlu0 %634
  %636 = vrot.lane.b32.xlu0 %v609, 17
  %v637 = vpop.permute.xlu0 %636
  %638 = vrot.lane.b32.xlu0 %v610, 17
  %v639 = vpop.permute.xlu0 %638
  %640 = vrot.lane.b32.xlu0 %v611, 17
  %v641 = vpop.permute.xlu0 %640
  %vm642 = vcmask 138240
  %v643 = vsel %vm642, %v623, %v625
  %v644 = vsel %vm642, %v625, %v627
  %v645 = vsel %vm642, %v627, %v629
  %v646 = vsel %vm642, %v629, %v631
  %v647 = vsel %vm642, %v633, %v635
  %v648 = vsel %vm642, %v635, %v637
  %v649 = vsel %vm642, %v637, %v639
  %v650 = vsel %vm642, %v639, %v641
  %v659 = vadd.f32 %v294, %v643
  %v660 = vadd.f32 %v406, %v644
  %v661 = vadd.f32 %v408, %v645
  %v662 = vadd.f32 %v521, %v646
  %v663 = vadd.f32 %v297, %v647
  %v664 = vadd.f32 %v410, %v648
  %v665 = vadd.f32 %v412, %v649
  %v666 = vadd.f32 %v524, %v650
  %s667 = scalar_lea.vmem %s1, 1
  %v668 = vld [vmem:[%s667] ss:$8 sm:$0xf]
  %v670 = vlaneseq
  %v671 = vshrl.u32 %v670, 7
  %v672 = vsub.s32 0, %v671
  %v673 = vrot.slane %v668, %v672
  %v674 = vlaneseq
  %v675 = vshrl.u32 %v674, 7
  %v676 = vsub.s32 1, %v675
  %v677 = vrot.slane %v668, %v676
  %v678 = vlaneseq
  %v679 = vshrl.u32 %v678, 7
  %v680 = vsub.s32 2, %v679
  %v681 = vrot.slane %v668, %v680
  %v682 = vlaneseq
  %v683 = vshrl.u32 %v682, 7
  %v684 = vsub.s32 3, %v683
  %v685 = vrot.slane %v668, %v684
  %686 = vrot.lane.b32.xlu0 %v673, 112
  %v687 = vpop.permute.xlu0 %686
  %688 = vrot.lane.b32.xlu0 %v677, 112
  %v689 = vpop.permute.xlu0 %688
  %690 = vrot.lane.b32.xlu0 %v681, 112
  %v691 = vpop.permute.xlu0 %690
  %692 = vrot.lane.b32.xlu0 %v685, 112
  %v693 = vpop.permute.xlu0 %692
  %vm694 = vcmask 916480
  %v695 = vsel %vm694, %v687, %v689
  %v696 = vsel %vm694, %v689, %v691
  %v697 = vsel %vm694, %v691, %v693
  %v703 = vmul.f32 %v263, %v687
  %v704 = vmul.f32 %v265, %v695
  %v705 = vmul.f32 %v376, %v696
  %v706 = vmul.f32 %v378, %v697
  %v707 = vmul.f32 %v497, %v693
  %v708 = vmul.f32 %v267, %v687
  %v709 = vmul.f32 %v269, %v695
  %v710 = vmul.f32 %v380, %v696
  %v711 = vmul.f32 %v382, %v697
  %v712 = vmul.f32 %v500, %v693
  %723 = vrot.lane.b32.xlu0 %v703, 16
  %v724 = vpop.permute.xlu0 %723
  %725 = vrot.lane.b32.xlu0 %v704, 16
  %v726 = vpop.permute.xlu0 %725
  %727 = vrot.lane.b32.xlu0 %v705, 16
  %v728 = vpop.permute.xlu0 %727
  %729 = vrot.lane.b32.xlu0 %v706, 16
  %v730 = vpop.permute.xlu0 %729
  %731 = vrot.lane.b32.xlu0 %v707, 16
  %v732 = vpop.permute.xlu0 %731
  %733 = vrot.lane.b32.xlu0 %v708, 16
  %v734 = vpop.permute.xlu0 %733
  %735 = vrot.lane.b32.xlu0 %v709, 16
  %v736 = vpop.permute.xlu0 %735
  %737 = vrot.lane.b32.xlu0 %v710, 16
  %v738 = vpop.permute.xlu0 %737
  %739 = vrot.lane.b32.xlu0 %v711, 16
  %v740 = vpop.permute.xlu0 %739
  %741 = vrot.lane.b32.xlu0 %v712, 16
  %v742 = vpop.permute.xlu0 %741
  %vm743 = vcmask 130048
  %v744 = vsel %vm743, %v724, %v726
  %v745 = vsel %vm743, %v726, %v728
  %v746 = vsel %vm743, %v728, %v730
  %v747 = vsel %vm743, %v730, %v732
  %v748 = vsel %vm743, %v734, %v736
  %v749 = vsel %vm743, %v736, %v738
  %v750 = vsel %vm743, %v738, %v740
  %v751 = vsel %vm743, %v740, %v742
  %v760 = vadd.f32 %v659, %v744
  %v761 = vadd.f32 %v660, %v745
  %v762 = vadd.f32 %v661, %v746
  %v763 = vadd.f32 %v662, %v747
  %v764 = vadd.f32 %v663, %v748
  %v765 = vadd.f32 %v664, %v749
  %v766 = vadd.f32 %v665, %v750
  %v767 = vadd.f32 %v666, %v751
  %s768 = scalar_lea.vmem %s1, 2
  %v769 = vld [vmem:[%s768] ss:$8 sm:$0xf]
  %v771 = vlaneseq
  %v772 = vshrl.u32 %v771, 7
  %v773 = vsub.s32 0, %v772
  %v774 = vrot.slane %v769, %v773
  %v775 = vlaneseq
  %v776 = vshrl.u32 %v775, 7
  %v777 = vsub.s32 1, %v776
  %v778 = vrot.slane %v769, %v777
  %v779 = vlaneseq
  %v780 = vshrl.u32 %v779, 7
  %v781 = vsub.s32 2, %v780
  %v782 = vrot.slane %v769, %v781
  %v783 = vlaneseq
  %v784 = vshrl.u32 %v783, 7
  %v785 = vsub.s32 3, %v784
  %v786 = vrot.slane %v769, %v785
  %787 = vrot.lane.b32.xlu0 %v774, 113
  %v788 = vpop.permute.xlu0 %787
  %789 = vrot.lane.b32.xlu0 %v778, 113
  %v790 = vpop.permute.xlu0 %789
  %791 = vrot.lane.b32.xlu0 %v782, 113
  %v792 = vpop.permute.xlu0 %791
  %793 = vrot.lane.b32.xlu0 %v786, 113
  %v794 = vpop.permute.xlu0 %793
  %vm795 = vcmask 924672
  %v796 = vsel %vm795, %v788, %v790
  %v797 = vsel %vm795, %v790, %v792
  %v798 = vsel %vm795, %v792, %v794
  %v804 = vmul.f32 %v273, %v788
  %v805 = vmul.f32 %v275, %v796
  %v806 = vmul.f32 %v386, %v797
  %v807 = vmul.f32 %v388, %v798
  %v808 = vmul.f32 %v505, %v794
  %v809 = vmul.f32 %v277, %v788
  %v810 = vmul.f32 %v279, %v796
  %v811 = vmul.f32 %v390, %v797
  %v812 = vmul.f32 %v392, %v798
  %v813 = vmul.f32 %v508, %v794
  %824 = vrot.lane.b32.xlu0 %v804, 15
  %v825 = vpop.permute.xlu0 %824
  %826 = vrot.lane.b32.xlu0 %v805, 15
  %v827 = vpop.permute.xlu0 %826
  %828 = vrot.lane.b32.xlu0 %v806, 15
  %v829 = vpop.permute.xlu0 %828
  %830 = vrot.lane.b32.xlu0 %v807, 15
  %v831 = vpop.permute.xlu0 %830
  %832 = vrot.lane.b32.xlu0 %v808, 15
  %v833 = vpop.permute.xlu0 %832
  %834 = vrot.lane.b32.xlu0 %v809, 15
  %v835 = vpop.permute.xlu0 %834
  %836 = vrot.lane.b32.xlu0 %v810, 15
  %v837 = vpop.permute.xlu0 %836
  %838 = vrot.lane.b32.xlu0 %v811, 15
  %v839 = vpop.permute.xlu0 %838
  %840 = vrot.lane.b32.xlu0 %v812, 15
  %v841 = vpop.permute.xlu0 %840
  %842 = vrot.lane.b32.xlu0 %v813, 15
  %v843 = vpop.permute.xlu0 %842
  %vm844 = vcmask 121856
  %v845 = vsel %vm844, %v825, %v827
  %v846 = vsel %vm844, %v827, %v829
  %v847 = vsel %vm844, %v829, %v831
  %v848 = vsel %vm844, %v831, %v833
  %v849 = vsel %vm844, %v835, %v837
  %v850 = vsel %vm844, %v837, %v839
  %v851 = vsel %vm844, %v839, %v841
  %v852 = vsel %vm844, %v841, %v843
  %v861 = vadd.f32 %v760, %v845
  %v862 = vadd.f32 %v761, %v846
  %v863 = vadd.f32 %v762, %v847
  %v864 = vadd.f32 %v763, %v848
  %v865 = vadd.f32 %v764, %v849
  %v866 = vadd.f32 %v765, %v850
  %v867 = vadd.f32 %v766, %v851
  %v868 = vadd.f32 %v767, %v852
  %s869 = scalar_lea.vmem %s1, 3
  %v870 = vld [vmem:[%s869] ss:$8 sm:$0xf]
  %v872 = vlaneseq
  %v873 = vshrl.u32 %v872, 7
  %v874 = vsub.s32 0, %v873
  %v875 = vrot.slane %v870, %v874
  %v876 = vlaneseq
  %v877 = vshrl.u32 %v876, 7
  %v878 = vsub.s32 1, %v877
  %v879 = vrot.slane %v870, %v878
  %v880 = vlaneseq
  %v881 = vshrl.u32 %v880, 7
  %v882 = vsub.s32 2, %v881
  %v883 = vrot.slane %v870, %v882
  %v884 = vlaneseq
  %v885 = vshrl.u32 %v884, 7
  %v886 = vsub.s32 3, %v885
  %v887 = vrot.slane %v870, %v886
  %888 = vrot.lane.b32.xlu0 %v875, 127
  %v889 = vpop.permute.xlu0 %888
  %890 = vrot.lane.b32.xlu0 %v879, 127
  %v891 = vpop.permute.xlu0 %890
  %892 = vrot.lane.b32.xlu0 %v883, 127
  %v893 = vpop.permute.xlu0 %892
  %894 = vrot.lane.b32.xlu0 %v887, 127
  %v895 = vpop.permute.xlu0 %894
  %vm896 = vcmask 1039360
  %v897 = vsel %vm896, %v889, %v891
  %v898 = vsel %vm896, %v891, %v893
  %v899 = vsel %vm896, %v893, %v895
  %v905 = vmul.f32 %v283, %v889
  %v906 = vmul.f32 %v285, %v897
  %v907 = vmul.f32 %v396, %v898
  %v908 = vmul.f32 %v398, %v899
  %v909 = vmul.f32 %v513, %v895
  %v910 = vmul.f32 %v287, %v889
  %v911 = vmul.f32 %v289, %v897
  %v912 = vmul.f32 %v400, %v898
  %v913 = vmul.f32 %v402, %v899
  %v914 = vmul.f32 %v516, %v895
  %925 = vrot.lane.b32.xlu0 %v905, 1
  %v926 = vpop.permute.xlu0 %925
  %927 = vrot.lane.b32.xlu0 %v906, 1
  %v928 = vpop.permute.xlu0 %927
  %929 = vrot.lane.b32.xlu0 %v907, 1
  %v930 = vpop.permute.xlu0 %929
  %931 = vrot.lane.b32.xlu0 %v908, 1
  %v932 = vpop.permute.xlu0 %931
  %933 = vrot.lane.b32.xlu0 %v909, 1
  %v934 = vpop.permute.xlu0 %933
  %935 = vrot.lane.b32.xlu0 %v910, 1
  %v936 = vpop.permute.xlu0 %935
  %937 = vrot.lane.b32.xlu0 %v911, 1
  %v938 = vpop.permute.xlu0 %937
  %939 = vrot.lane.b32.xlu0 %v912, 1
  %v940 = vpop.permute.xlu0 %939
  %941 = vrot.lane.b32.xlu0 %v913, 1
  %v942 = vpop.permute.xlu0 %941
  %943 = vrot.lane.b32.xlu0 %v914, 1
  %v944 = vpop.permute.xlu0 %943
  %vm945 = vcmask 7168
  %v946 = vsel %vm945, %v926, %v928
  %v947 = vsel %vm945, %v928, %v930
  %v948 = vsel %vm945, %v930, %v932
  %v949 = vsel %vm945, %v932, %v934
  %v950 = vsel %vm945, %v936, %v938
  %v951 = vsel %vm945, %v938, %v940
  %v952 = vsel %vm945, %v940, %v942
  %v953 = vsel %vm945, %v942, %v944
  %v962 = vadd.f32 %v861, %v946
  %v963 = vadd.f32 %v862, %v947
  %v964 = vadd.f32 %v863, %v948
  %v965 = vadd.f32 %v864, %v949
  %v966 = vadd.f32 %v865, %v950
  %v967 = vadd.f32 %v866, %v951
  %v968 = vadd.f32 %v867, %v952
  %v969 = vadd.f32 %v868, %v953
  %s970 = scalar_lea.vmem %s1, 5
  %v971 = vld [vmem:[%s970] ss:$8 sm:$0xf]
  %v973 = vlaneseq
  %v974 = vshrl.u32 %v973, 7
  %v975 = vsub.s32 0, %v974
  %v976 = vrot.slane %v971, %v975
  %v977 = vlaneseq
  %v978 = vshrl.u32 %v977, 7
  %v979 = vsub.s32 1, %v978
  %v980 = vrot.slane %v971, %v979
  %v981 = vlaneseq
  %v982 = vshrl.u32 %v981, 7
  %v983 = vsub.s32 2, %v982
  %v984 = vrot.slane %v971, %v983
  %v985 = vlaneseq
  %v986 = vshrl.u32 %v985, 7
  %v987 = vsub.s32 3, %v986
  %v988 = vrot.slane %v971, %v987
  %989 = vrot.lane.b32.xlu0 %v976, 1
  %v990 = vpop.permute.xlu0 %989
  %991 = vrot.lane.b32.xlu0 %v980, 1
  %v992 = vpop.permute.xlu0 %991
  %993 = vrot.lane.b32.xlu0 %v984, 1
  %v994 = vpop.permute.xlu0 %993
  %995 = vrot.lane.b32.xlu0 %v988, 1
  %v996 = vpop.permute.xlu0 %995
  %v997 = vsel %vm945, %v990, %v992
  %v998 = vsel %vm945, %v992, %v994
  %v999 = vsel %vm945, %v994, %v996
  %v1005 = vmul.f32 %v302, %v990
  %v1006 = vmul.f32 %v416, %v997
  %v1007 = vmul.f32 %v418, %v998
  %v1008 = vmul.f32 %v529, %v999
  %v1009 = vmul.f32 %v531, %v996
  %v1010 = vmul.f32 %v305, %v990
  %v1011 = vmul.f32 %v420, %v997
  %v1012 = vmul.f32 %v422, %v998
  %v1013 = vmul.f32 %v533, %v999
  %v1014 = vmul.f32 %v535, %v996
  %1025 = vrot.lane.b32.xlu0 %v1005, 127
  %v1026 = vpop.permute.xlu0 %1025
  %1027 = vrot.lane.b32.xlu0 %v1006, 127
  %v1028 = vpop.permute.xlu0 %1027
  %1029 = vrot.lane.b32.xlu0 %v1007, 127
  %v1030 = vpop.permute.xlu0 %1029
  %1031 = vrot.lane.b32.xlu0 %v1008, 127
  %v1032 = vpop.permute.xlu0 %1031
  %1033 = vrot.lane.b32.xlu0 %v1009, 127
  %v1034 = vpop.permute.xlu0 %1033
  %1035 = vrot.lane.b32.xlu0 %v1010, 127
  %v1036 = vpop.permute.xlu0 %1035
  %1037 = vrot.lane.b32.xlu0 %v1011, 127
  %v1038 = vpop.permute.xlu0 %1037
  %1039 = vrot.lane.b32.xlu0 %v1012, 127
  %v1040 = vpop.permute.xlu0 %1039
  %1041 = vrot.lane.b32.xlu0 %v1013, 127
  %v1042 = vpop.permute.xlu0 %1041
  %1043 = vrot.lane.b32.xlu0 %v1014, 127
  %v1044 = vpop.permute.xlu0 %1043
  %v1045 = vsel %vm896, %v1026, %v1028
  %v1046 = vsel %vm896, %v1028, %v1030
  %v1047 = vsel %vm896, %v1030, %v1032
  %v1048 = vsel %vm896, %v1032, %v1034
  %v1049 = vsel %vm896, %v1036, %v1038
  %v1050 = vsel %vm896, %v1038, %v1040
  %v1051 = vsel %vm896, %v1040, %v1042
  %v1052 = vsel %vm896, %v1042, %v1044
  %v1061 = vadd.f32 %v962, %v1045
  %v1062 = vadd.f32 %v963, %v1046
  %v1063 = vadd.f32 %v964, %v1047
  %v1064 = vadd.f32 %v965, %v1048
  %v1065 = vadd.f32 %v966, %v1049
  %v1066 = vadd.f32 %v967, %v1050
  %v1067 = vadd.f32 %v968, %v1051
  %v1068 = vadd.f32 %v969, %v1052
  %s1069 = scalar_lea.vmem %s1, 6
  %v1070 = vld [vmem:[%s1069] ss:$8 sm:$0xf]
  %v1072 = vlaneseq
  %v1073 = vshrl.u32 %v1072, 7
  %v1074 = vsub.s32 0, %v1073
  %v1075 = vrot.slane %v1070, %v1074
  %v1076 = vlaneseq
  %v1077 = vshrl.u32 %v1076, 7
  %v1078 = vsub.s32 1, %v1077
  %v1079 = vrot.slane %v1070, %v1078
  %v1080 = vlaneseq
  %v1081 = vshrl.u32 %v1080, 7
  %v1082 = vsub.s32 2, %v1081
  %v1083 = vrot.slane %v1070, %v1082
  %v1084 = vlaneseq
  %v1085 = vshrl.u32 %v1084, 7
  %v1086 = vsub.s32 3, %v1085
  %v1087 = vrot.slane %v1070, %v1086
  %1088 = vrot.lane.b32.xlu0 %v1075, 15
  %v1089 = vpop.permute.xlu0 %1088
  %1090 = vrot.lane.b32.xlu0 %v1079, 15
  %v1091 = vpop.permute.xlu0 %1090
  %1092 = vrot.lane.b32.xlu0 %v1083, 15
  %v1093 = vpop.permute.xlu0 %1092
  %1094 = vrot.lane.b32.xlu0 %v1087, 15
  %v1095 = vpop.permute.xlu0 %1094
  %v1096 = vsel %vm844, %v1089, %v1091
  %v1097 = vsel %vm844, %v1091, %v1093
  %v1098 = vsel %vm844, %v1093, %v1095
  %v1104 = vmul.f32 %v310, %v1089
  %v1105 = vmul.f32 %v426, %v1096
  %v1106 = vmul.f32 %v428, %v1097
  %v1107 = vmul.f32 %v539, %v1098
  %v1108 = vmul.f32 %v541, %v1095
  %v1109 = vmul.f32 %v313, %v1089
  %v1110 = vmul.f32 %v430, %v1096
  %v1111 = vmul.f32 %v432, %v1097
  %v1112 = vmul.f32 %v543, %v1098
  %v1113 = vmul.f32 %v545, %v1095
  %1124 = vrot.lane.b32.xlu0 %v1104, 113
  %v1125 = vpop.permute.xlu0 %1124
  %1126 = vrot.lane.b32.xlu0 %v1105, 113
  %v1127 = vpop.permute.xlu0 %1126
  %1128 = vrot.lane.b32.xlu0 %v1106, 113
  %v1129 = vpop.permute.xlu0 %1128
  %1130 = vrot.lane.b32.xlu0 %v1107, 113
  %v1131 = vpop.permute.xlu0 %1130
  %1132 = vrot.lane.b32.xlu0 %v1108, 113
  %v1133 = vpop.permute.xlu0 %1132
  %1134 = vrot.lane.b32.xlu0 %v1109, 113
  %v1135 = vpop.permute.xlu0 %1134
  %1136 = vrot.lane.b32.xlu0 %v1110, 113
  %v1137 = vpop.permute.xlu0 %1136
  %1138 = vrot.lane.b32.xlu0 %v1111, 113
  %v1139 = vpop.permute.xlu0 %1138
  %1140 = vrot.lane.b32.xlu0 %v1112, 113
  %v1141 = vpop.permute.xlu0 %1140
  %1142 = vrot.lane.b32.xlu0 %v1113, 113
  %v1143 = vpop.permute.xlu0 %1142
  %v1144 = vsel %vm795, %v1125, %v1127
  %v1145 = vsel %vm795, %v1127, %v1129
  %v1146 = vsel %vm795, %v1129, %v1131
  %v1147 = vsel %vm795, %v1131, %v1133
  %v1148 = vsel %vm795, %v1135, %v1137
  %v1149 = vsel %vm795, %v1137, %v1139
  %v1150 = vsel %vm795, %v1139, %v1141
  %v1151 = vsel %vm795, %v1141, %v1143
  %v1160 = vadd.f32 %v1061, %v1144
  %v1161 = vadd.f32 %v1062, %v1145
  %v1162 = vadd.f32 %v1063, %v1146
  %v1163 = vadd.f32 %v1064, %v1147
  %v1164 = vadd.f32 %v1065, %v1148
  %v1165 = vadd.f32 %v1066, %v1149
  %v1166 = vadd.f32 %v1067, %v1150
  %v1167 = vadd.f32 %v1068, %v1151
  %s1168 = scalar_lea.vmem %s1, 7
  %v1169 = vld [vmem:[%s1168] ss:$8 sm:$0xf]
  %v1171 = vlaneseq
  %v1172 = vshrl.u32 %v1171, 7
  %v1173 = vsub.s32 0, %v1172
  %v1174 = vrot.slane %v1169, %v1173
  %v1175 = vlaneseq
  %v1176 = vshrl.u32 %v1175, 7
  %v1177 = vsub.s32 1, %v1176
  %v1178 = vrot.slane %v1169, %v1177
  %v1179 = vlaneseq
  %v1180 = vshrl.u32 %v1179, 7
  %v1181 = vsub.s32 2, %v1180
  %v1182 = vrot.slane %v1169, %v1181
  %v1183 = vlaneseq
  %v1184 = vshrl.u32 %v1183, 7
  %v1185 = vsub.s32 3, %v1184
  %v1186 = vrot.slane %v1169, %v1185
  %1187 = vrot.lane.b32.xlu0 %v1174, 16
  %v1188 = vpop.permute.xlu0 %1187
  %1189 = vrot.lane.b32.xlu0 %v1178, 16
  %v1190 = vpop.permute.xlu0 %1189
  %1191 = vrot.lane.b32.xlu0 %v1182, 16
  %v1192 = vpop.permute.xlu0 %1191
  %1193 = vrot.lane.b32.xlu0 %v1186, 16
  %v1194 = vpop.permute.xlu0 %1193
  %v1195 = vsel %vm743, %v1188, %v1190
  %v1196 = vsel %vm743, %v1190, %v1192
  %v1197 = vsel %vm743, %v1192, %v1194
  %v1203 = vmul.f32 %v318, %v1188
  %v1204 = vmul.f32 %v436, %v1195
  %v1205 = vmul.f32 %v438, %v1196
  %v1206 = vmul.f32 %v549, %v1197
  %v1207 = vmul.f32 %v551, %v1194
  %v1208 = vmul.f32 %v321, %v1188
  %v1209 = vmul.f32 %v440, %v1195
  %v1210 = vmul.f32 %v442, %v1196
  %v1211 = vmul.f32 %v553, %v1197
  %v1212 = vmul.f32 %v555, %v1194
  %1223 = vrot.lane.b32.xlu0 %v1203, 112
  %v1224 = vpop.permute.xlu0 %1223
  %1225 = vrot.lane.b32.xlu0 %v1204, 112
  %v1226 = vpop.permute.xlu0 %1225
  %1227 = vrot.lane.b32.xlu0 %v1205, 112
  %v1228 = vpop.permute.xlu0 %1227
  %1229 = vrot.lane.b32.xlu0 %v1206, 112
  %v1230 = vpop.permute.xlu0 %1229
  %1231 = vrot.lane.b32.xlu0 %v1207, 112
  %v1232 = vpop.permute.xlu0 %1231
  %1233 = vrot.lane.b32.xlu0 %v1208, 112
  %v1234 = vpop.permute.xlu0 %1233
  %1235 = vrot.lane.b32.xlu0 %v1209, 112
  %v1236 = vpop.permute.xlu0 %1235
  %1237 = vrot.lane.b32.xlu0 %v1210, 112
  %v1238 = vpop.permute.xlu0 %1237
  %1239 = vrot.lane.b32.xlu0 %v1211, 112
  %v1240 = vpop.permute.xlu0 %1239
  %1241 = vrot.lane.b32.xlu0 %v1212, 112
  %v1242 = vpop.permute.xlu0 %1241
  %v1243 = vsel %vm694, %v1224, %v1226
  %v1244 = vsel %vm694, %v1226, %v1228
  %v1245 = vsel %vm694, %v1228, %v1230
  %v1246 = vsel %vm694, %v1230, %v1232
  %v1247 = vsel %vm694, %v1234, %v1236
  %v1248 = vsel %vm694, %v1236, %v1238
  %v1249 = vsel %vm694, %v1238, %v1240
  %v1250 = vsel %vm694, %v1240, %v1242
  %v1259 = vadd.f32 %v1160, %v1243
  %v1260 = vadd.f32 %v1161, %v1244
  %v1261 = vadd.f32 %v1162, %v1245
  %v1262 = vadd.f32 %v1163, %v1246
  %v1263 = vadd.f32 %v1164, %v1247
  %v1264 = vadd.f32 %v1165, %v1248
  %v1265 = vadd.f32 %v1166, %v1249
  %v1266 = vadd.f32 %v1167, %v1250
  %s1267 = scalar_lea.vmem %s1, 32
  %v1268 = vld [vmem:[%s1267] ss:$8 sm:$0xf]
  %v1270 = vlaneseq
  %v1271 = vshrl.u32 %v1270, 7
  %v1272 = vsub.s32 0, %v1271
  %v1273 = vrot.slane %v1268, %v1272
  %v1274 = vlaneseq
  %v1275 = vshrl.u32 %v1274, 7
  %v1276 = vsub.s32 1, %v1275
  %v1277 = vrot.slane %v1268, %v1276
  %v1278 = vlaneseq
  %v1279 = vshrl.u32 %v1278, 7
  %v1280 = vsub.s32 2, %v1279
  %v1281 = vrot.slane %v1268, %v1280
  %v1282 = vlaneseq
  %v1283 = vshrl.u32 %v1282, 7
  %v1284 = vsub.s32 3, %v1283
  %v1285 = vrot.slane %v1268, %v1284
  %1286 = vrot.lane.b32.xlu0 %v1273, 17
  %v1287 = vpop.permute.xlu0 %1286
  %1288 = vrot.lane.b32.xlu0 %v1277, 17
  %v1289 = vpop.permute.xlu0 %1288
  %1290 = vrot.lane.b32.xlu0 %v1281, 17
  %v1291 = vpop.permute.xlu0 %1290
  %1292 = vrot.lane.b32.xlu0 %v1285, 17
  %v1293 = vpop.permute.xlu0 %1292
  %v1294 = vsel %vm642, %v1287, %v1289
  %v1295 = vsel %vm642, %v1289, %v1291
  %v1296 = vsel %vm642, %v1291, %v1293
  %v1302 = vmul.f32 %v326, %v1287
  %v1303 = vmul.f32 %v446, %v1294
  %v1304 = vmul.f32 %v448, %v1295
  %v1305 = vmul.f32 %v559, %v1296
  %v1306 = vmul.f32 %v561, %v1293
  %v1307 = vmul.f32 %v329, %v1287
  %v1308 = vmul.f32 %v450, %v1294
  %v1309 = vmul.f32 %v452, %v1295
  %v1310 = vmul.f32 %v563, %v1296
  %v1311 = vmul.f32 %v565, %v1293
  %1322 = vrot.lane.b32.xlu0 %v1302, 111
  %v1323 = vpop.permute.xlu0 %1322
  %1324 = vrot.lane.b32.xlu0 %v1303, 111
  %v1325 = vpop.permute.xlu0 %1324
  %1326 = vrot.lane.b32.xlu0 %v1304, 111
  %v1327 = vpop.permute.xlu0 %1326
  %1328 = vrot.lane.b32.xlu0 %v1305, 111
  %v1329 = vpop.permute.xlu0 %1328
  %1330 = vrot.lane.b32.xlu0 %v1306, 111
  %v1331 = vpop.permute.xlu0 %1330
  %1332 = vrot.lane.b32.xlu0 %v1307, 111
  %v1333 = vpop.permute.xlu0 %1332
  %1334 = vrot.lane.b32.xlu0 %v1308, 111
  %v1335 = vpop.permute.xlu0 %1334
  %1336 = vrot.lane.b32.xlu0 %v1309, 111
  %v1337 = vpop.permute.xlu0 %1336
  %1338 = vrot.lane.b32.xlu0 %v1310, 111
  %v1339 = vpop.permute.xlu0 %1338
  %1340 = vrot.lane.b32.xlu0 %v1311, 111
  %v1341 = vpop.permute.xlu0 %1340
  %v1342 = vsel %vm593, %v1323, %v1325
  %v1343 = vsel %vm593, %v1325, %v1327
  %v1344 = vsel %vm593, %v1327, %v1329
  %v1345 = vsel %vm593, %v1329, %v1331
  %v1346 = vsel %vm593, %v1333, %v1335
  %v1347 = vsel %vm593, %v1335, %v1337
  %v1348 = vsel %vm593, %v1337, %v1339
  %v1349 = vsel %vm593, %v1339, %v1341
  %v1358 = vadd.f32 %v1259, %v1342
  %v1359 = vadd.f32 %v1260, %v1343
  %v1360 = vadd.f32 %v1261, %v1344
  %v1361 = vadd.f32 %v1262, %v1345
  %v1362 = vadd.f32 %v1263, %v1346
  %v1363 = vadd.f32 %v1264, %v1347
  %v1364 = vadd.f32 %v1265, %v1348
  %v1365 = vadd.f32 %v1266, %v1349
  %v1366 = vld [vmem:[%s3] sm:$0xff]
  %v1367 = vld [vmem:[%s3 + $0x8] sm:$0xff]
  %1369 = vset.pattern.permute.xlu0 0
  %1370 = vperm.xlu0 %1369, %v1366
  %v1371 = vpop.permute.xlu0 %1370
  %1374 = vset.pattern.permute.xlu0 0
  %1375 = vperm.xlu0 %1374, %v1367
  %v1376 = vpop.permute.xlu0 %1375
  %v1378 = vadd.f32 %v1358, %v1371
  %v1379 = vadd.f32 %v1359, %v1371
  %v1380 = vadd.f32 %v1360, %v1371
  %v1381 = vadd.f32 %v1361, %v1371
  %v1382 = vadd.f32 %v1362, %v1376
  %v1383 = vadd.f32 %v1363, %v1376
  %v1384 = vadd.f32 %v1364, %v1376
  %v1385 = vadd.f32 %v1365, %v1376
  %v1386 = vmax.f32 %v1378, 0.0
  %v1387 = vmax.f32 %v1379, 0.0
  %v1388 = vmax.f32 %v1380, 0.0
  %v1389 = vmax.f32 %v1381, 0.0
  %v1390 = vmax.f32 %v1382, 0.0
  %v1391 = vmax.f32 %v1383, 0.0
  %v1392 = vmax.f32 %v1384, 0.0
  %v1393 = vmax.f32 %v1385, 0.0
  %v1394 = vadd.f32 %v1386, %v1387
  %v1395 = vadd.f32 %v1394, %v1388
  %v1396 = vadd.f32 %v1395, %v1389
  %1397 = vadd.xlane.f32.xlu0 %v1396
  %v1398 = vpop.xlane.xlu0 %1397
  %v1399 = vadd.f32 %v1390, %v1391
  %v1400 = vadd.f32 %v1399, %v1392
  %v1401 = vadd.f32 %v1400, %v1393
  %1402 = vadd.xlane.f32.xlu0 %v1401
  %v1403 = vpop.xlane.xlu0 %1402
  %v1404 = vmul.f32 %v1386, %v1386
  %v1405 = vmul.f32 %v1387, %v1387
  %v1406 = vmul.f32 %v1388, %v1388
  %v1407 = vmul.f32 %v1389, %v1389
  %v1408 = vmul.f32 %v1390, %v1390
  %v1409 = vmul.f32 %v1391, %v1391
  %v1410 = vmul.f32 %v1392, %v1392
  %v1411 = vmul.f32 %v1393, %v1393
  %v1412 = vadd.f32 %v1404, %v1405
  %v1413 = vadd.f32 %v1412, %v1406
  %v1414 = vadd.f32 %v1413, %v1407
  %1415 = vadd.xlane.f32.xlu0 %v1414
  %v1416 = vpop.xlane.xlu0 %1415
  %v1417 = vadd.f32 %v1408, %v1409
  %v1418 = vadd.f32 %v1417, %v1410
  %v1419 = vadd.f32 %v1418, %v1411
  %1420 = vadd.xlane.f32.xlu0 %v1419
  %v1421 = vpop.xlane.xlu0 %1420
  %v1422 = vmul.f32 %v1398, 0.001953125
  %v1423 = vmul.f32 %v1403, 0.001953125
  %v1424 = vmul.f32 %v1416, 0.001953125
  %v1425 = vmul.f32 %v1421, 0.001953125
  %v1426 = vmul.f32 %v1422, %v1422
  %v1427 = vmul.f32 %v1423, %v1423
  %v1428 = vsub.f32 %v1424, %v1426
  %v1429 = vsub.f32 %v1425, %v1427
  %v1430 = vmax.f32 %v1428, 0.0
  %v1431 = vmax.f32 %v1429, 0.0
  %v1432 = vsub.f32 %v1386, %v1422
  %v1433 = vsub.f32 %v1387, %v1422
  %v1434 = vsub.f32 %v1388, %v1422
  %v1435 = vsub.f32 %v1389, %v1422
  %v1436 = vsub.f32 %v1390, %v1423
  %v1437 = vsub.f32 %v1391, %v1423
  %v1438 = vsub.f32 %v1392, %v1423
  %v1439 = vsub.f32 %v1393, %v1423
  %v1440 = vadd.f32 %v1430, 1e-05
  %v1441 = vadd.f32 %v1431, 1e-05
  %v1442 = vrsqrt.pop %v1440
  %v1443 = vrsqrt.pop %v1441
  %v1444 = vmul.f32 %v1432, %v1442
  %v1445 = vmul.f32 %v1433, %v1442
  %v1446 = vmul.f32 %v1434, %v1442
  %v1447 = vmul.f32 %v1435, %v1442
  %v1448 = vmul.f32 %v1436, %v1443
  %v1449 = vmul.f32 %v1437, %v1443
  %v1450 = vmul.f32 %v1438, %v1443
  %v1451 = vmul.f32 %v1439, %v1443
  %v1452 = vld [vmem:[%s4] sm:$0xff]
  %v1453 = vld [vmem:[%s4 + $0x8] sm:$0xff]
  %1455 = vset.pattern.permute.xlu0 0
  %1456 = vperm.xlu0 %1455, %v1452
  %v1457 = vpop.permute.xlu0 %1456
  %1460 = vset.pattern.permute.xlu0 0
  %1461 = vperm.xlu0 %1460, %v1453
  %v1462 = vpop.permute.xlu0 %1461
  %v1464 = vmul.f32 %v1444, %v1457
  %v1465 = vmul.f32 %v1445, %v1457
  %v1466 = vmul.f32 %v1446, %v1457
  %v1467 = vmul.f32 %v1447, %v1457
  %v1468 = vmul.f32 %v1448, %v1462
  %v1469 = vmul.f32 %v1449, %v1462
  %v1470 = vmul.f32 %v1450, %v1462
  %v1471 = vmul.f32 %v1451, %v1462
  %v1472 = vld [vmem:[%s5] sm:$0xff]
  %v1473 = vld [vmem:[%s5 + $0x8] sm:$0xff]
  %1475 = vset.pattern.permute.xlu0 0
  %1476 = vperm.xlu0 %1475, %v1472
  %v1477 = vpop.permute.xlu0 %1476
  %1480 = vset.pattern.permute.xlu0 0
  %1481 = vperm.xlu0 %1480, %v1473
  %v1482 = vpop.permute.xlu0 %1481
  %v1484 = vadd.f32 %v1464, %v1477
  %v1485 = vadd.f32 %v1465, %v1477
  %v1486 = vadd.f32 %v1466, %v1477
  %v1487 = vadd.f32 %v1467, %v1477
  %v1488 = vadd.f32 %v1468, %v1482
  %v1489 = vadd.f32 %v1469, %v1482
  %v1490 = vadd.f32 %v1470, %v1482
  %v1491 = vadd.f32 %v1471, %v1482
  %1492 = vst [vmem:[#allocation2 + $0x38] sm:$0xff] %v1484
  %1493 = vst [vmem:[#allocation2 + $0x40] sm:$0xff] %v1485
  %1494 = vst [vmem:[#allocation2 + $0x48] sm:$0xff] %v1486
  %1495 = vst [vmem:[#allocation2 + $0x50] sm:$0xff] %v1487
  %1496 = vst [vmem:[#allocation2 + $0x68] sm:$0xff] %v1488
  %1497 = vst [vmem:[#allocation2 + $0x70] sm:$0xff] %v1489
  %1498 = vst [vmem:[#allocation2 + $0x78] sm:$0xff] %v1490
  %1499 = vst [vmem:[#allocation2 + $0x80] sm:$0xff] %v1491
  %v1508 = vrot.slane %v1484, 4
  %v1509 = vrot.slane %v1485, 4
  %v1510 = vrot.slane %v1486, 4
  %v1511 = vrot.slane %v1487, 4
  %v1512 = vrot.slane %v1488, 4
  %v1513 = vsel %vm199, %v1508, %v1512
  %v1514 = vrot.slane %v1489, 4
  %v1515 = vsel %vm199, %v1509, %v1514
  %v1516 = vrot.slane %v1490, 4
  %v1517 = vsel %vm199, %v1510, %v1516
  %v1518 = vrot.slane %v1491, 4
  %v1519 = vsel %vm199, %v1511, %v1518
  %1528 = vst [vmem:[%s19] sm:$0xf0] %v1508
  %1529 = vst [vmem:[%s19 + $0x8] sm:$0xf0] %v1509
  %1530 = vst [vmem:[%s19 + $0x10] sm:$0xf0] %v1510
  %1531 = vst [vmem:[%s19 + $0x18] sm:$0xf0] %v1511
  %1532 = vst [vmem:[%s19 + $0x20] sm:$0xff] %v1513
  %1533 = vst [vmem:[%s19 + $0x28] sm:$0xff] %v1515
  %1534 = vst [vmem:[%s19 + $0x30] sm:$0xff] %v1517
  %1535 = vst [vmem:[%s19 + $0x38] sm:$0xff] %v1519
  %v1536 = vld [vmem:[#allocation2] sm:$0xff]
  %v1537 = vld [vmem:[#allocation2 + $0x8] sm:$0xff]
  %v1538 = vld [vmem:[#allocation2 + $0x10] sm:$0xff]
  %v1539 = vld [vmem:[#allocation2 + $0x18] sm:$0xff]
  %v1540 = vld [vmem:[#allocation2 + $0x20] sm:$0xff]
  %v1541 = vld [vmem:[#allocation2 + $0x28] sm:$0xff]
  %v1542 = vld [vmem:[#allocation2 + $0x30] sm:$0xff]
  %v1543 = vld [vmem:[#allocation2 + $0x38] sm:$0xff]
  %v1544 = vld [vmem:[#allocation2 + $0x40] sm:$0xff]
  %v1545 = vld [vmem:[#allocation2 + $0x48] sm:$0xff]
  %v1546 = vld [vmem:[#allocation2 + $0x50] sm:$0xff]
  %v1547 = vld [vmem:[#allocation2 + $0x58] sm:$0xff]
  %v1548 = vld [vmem:[#allocation2 + $0x60] sm:$0xff]
  %v1549 = vld [vmem:[#allocation2 + $0x68] sm:$0xff]
  %v1550 = vld [vmem:[#allocation2 + $0x70] sm:$0xff]
  %v1551 = vld [vmem:[#allocation2 + $0x78] sm:$0xff]
  %v1552 = vld [vmem:[#allocation2 + $0x80] sm:$0xff]
  %v1553 = vld [vmem:[#allocation2 + $0x88] sm:$0xff]
  %v1554 = vpack.c.bf16 %v1542, %v1536
  %v1555 = vpack.c.bf16 %v1543, %v1537
  %v1556 = vpack.c.bf16 %v1544, %v1538
  %v1557 = vpack.c.bf16 %v1545, %v1539
  %v1558 = vpack.c.bf16 %v1546, %v1540
  %v1559 = vpack.c.bf16 %v1547, %v1541
  %v1560 = vpack.c.bf16 %v1548, %v1548
  %v1561 = vpack.c.bf16 %v1549, %v1549
  %v1562 = vpack.c.bf16 %v1550, %v1550
  %v1563 = vpack.c.bf16 %v1551, %v1551
  %v1564 = vpack.c.bf16 %v1552, %v1552
  %v1565 = vpack.c.bf16 %v1553, %v1553
  %v1566 = vld [vmem:[%s6] sm:$0xf]
  %v1567 = vld [vmem:[%s6 + $0x4] sm:$0xf]
  %v1568 = vld [vmem:[%s6 + $0x8] sm:$0xf]
  %v1569 = vld [vmem:[%s6 + $0xc] sm:$0xf]
  %v1570 = vld [vmem:[%s6 + $0x10] sm:$0xf]
  %v1571 = vld [vmem:[%s6 + $0x14] sm:$0xf]
  %v1572 = vld [vmem:[%s6 + $0x18] sm:$0xf]
  %v1573 = vld [vmem:[%s6 + $0x1c] sm:$0xf]
  %v1574 = vld [vmem:[%s6 + $0x20] sm:$0xf]
  %v1575 = vld [vmem:[%s6 + $0x24] sm:$0xf]
  %v1576 = vld [vmem:[%s6 + $0x28] sm:$0xf]
  %v1577 = vld [vmem:[%s6 + $0x2c] sm:$0xf]
  %v1578 = vld [vmem:[%s6 + $0x30] sm:$0xf]
  %v1579 = vld [vmem:[%s6 + $0x34] sm:$0xf]
  %v1580 = vld [vmem:[%s6 + $0x38] sm:$0xf]
  %v1581 = vld [vmem:[%s6 + $0x3c] sm:$0xf]
  %v1582 = vld [vmem:[%s6 + $0x40] sm:$0xf]
  %v1583 = vld [vmem:[%s6 + $0x44] sm:$0xf]
  %v1602 = vunpack.c.l.b16 %v1566
  %v1603 = vunpack.c.l.b16 %v1567
  %v1604 = vunpack.c.l.b16 %v1568
  %v1605 = vunpack.c.l.b16 %v1569
  %v1606 = vunpack.c.l.b16 %v1570
  %v1607 = vunpack.c.l.b16 %v1571
  %v1608 = vunpack.c.l.b16 %v1572
  %v1609 = vunpack.c.l.b16 %v1573
  %v1610 = vunpack.c.l.b16 %v1574
  %v1611 = vunpack.c.l.b16 %v1575
  %v1612 = vunpack.c.l.b16 %v1576
  %v1613 = vunpack.c.l.b16 %v1577
  %v1614 = vunpack.c.l.b16 %v1578
  %v1615 = vunpack.c.l.b16 %v1579
  %v1616 = vunpack.c.l.b16 %v1580
  %v1617 = vunpack.c.l.b16 %v1581
  %v1618 = vunpack.c.l.b16 %v1582
  %v1619 = vunpack.c.l.b16 %v1583
  %v1620 = vpack.c.b16 %v1603, %v1602
  %v1621 = vpack.c.b16 %v1605, %v1604
  %v1622 = vpack.c.b16 %v1607, %v1606
  %v1623 = vpack.c.b16 %v1609, %v1608
  %v1624 = vpack.c.b16 %v1611, %v1610
  %v1625 = vpack.c.b16 %v1613, %v1612
  %v1626 = vpack.c.b16 %v1615, %v1614
  %v1627 = vpack.c.b16 %v1617, %v1616
  %v1628 = vpack.c.b16 %v1619, %v1618
  %vm1629 = vcmask 195584
  %v1631 = vsel %vm1629, %v1620, 0
  %v1634 = vsel %vm1629, %v1621, 0
  %v1637 = vsel %vm1629, %v1622, 0
  %v1640 = vsel %vm1629, %v1623, 0
  %v1643 = vsel %vm1629, %v1624, 0
  %v1646 = vsel %vm1629, %v1625, 0
  %v1649 = vsel %vm1629, %v1626, 0
  %v1652 = vsel %vm1629, %v1627, 0
  %v1655 = vsel %vm1629, %v1628, 0
  %v1658 = vsel %vm199, %v1560, 0
  %v1661 = vsel %vm199, %v1561, 0
  %v1664 = vsel %vm199, %v1562, 0
  %v1667 = vsel %vm199, %v1563, 0
  %v1670 = vsel %vm199, %v1564, 0
  %v1673 = vsel %vm199, %v1565, 0
  %1675 = vmatprep.subr.bf16.mxu0 %v1555
  %1676 = vmatpush1.bf16.msra.mxu0 %v1554
  %1677 = vmatprep.subr.bf16.mxu0 %v1661
  %1678 = vmatpush1.bf16.msra.mxu0 %v1658
  %1679 = vmatprep.subr.bf16.mxu0 0
  %1680 = vmatpush1.bf16.msra.mxu0 0
  %1681 = vmatprep.subr.bf16.mxu0 0
  %1682 = vmatpush1.bf16.msra.mxu0 0
  %1683 = vmatprep.subr.bf16.mxu0 0
  %1684 = vmatpush1.bf16.msra.mxu0 0
  %1685 = vmatprep.subr.bf16.mxu0 0
  %1686 = vmatpush1.bf16.msra.mxu0 0
  %1687 = vmatprep.subr.bf16.mxu0 0
  %1688 = vmatpush1.bf16.msra.mxu0 0
  %1689 = vmatprep.subr.bf16.mxu0 0
  %1690 = vmatpush1.bf16.msra.mxu0 0
  %1691 = vmatprep.subr.bf16.mxu0 0
  %1692 = vmatpush1.bf16.msra.mxu0 0
  %1693 = vmatprep.subr.bf16.mxu0 0
  %1694 = vmatpush1.bf16.msra.mxu0 0
  %1695 = vmatprep.subr.bf16.mxu0 0
  %1696 = vmatpush1.bf16.msra.mxu0 0
  %1697 = vmatprep.subr.bf16.mxu0 0
  %1698 = vmatpush1.bf16.msra.mxu0 0
  %1699 = vmatprep.subr.bf16.mxu0 0
  %1700 = vmatpush1.bf16.msra.mxu0 0
  %1701 = vmatprep.subr.bf16.mxu0 0
  %1702 = vmatpush1.bf16.msra.mxu0 0
  %1703 = vmatprep.subr.bf16.mxu0 0
  %1704 = vmatpush1.bf16.msra.mxu0 0
  %1705 = vmatprep.subr.bf16.mxu0 0
  %1706 = vmatpush1.bf16.msra.mxu0 0
  %1707 = vmatprep.mubr.bf16.mxu0 0
  %1708 = vmatmul.mubr.bf16.gmra.mrb[0].mxu0 %v1631
  %v1709 = vpop.f32.mrb[0].mxu0
  %v1710 = vadd.f32 0.0, %v1709
  %v1711 = vpop.f32.mrb[0].mxu0
  %v1712 = vadd.f32 0.0, %v1711
  %v1713 = vpop.f32.mrb[0].mxu0
  %v1714 = vadd.f32 0.0, %v1713
  %v1715 = vpop.f32.mrb[0].mxu0
  %v1716 = vadd.f32 0.0, %v1715
  %1717 = vmatprep.mubr.bf16.mxu0 0
  %1718 = vmatmul.mubr.bf16.gmra.mrb[0].mxu0 %v1634
  %v1719 = vpop.f32.mrb[0].mxu0
  %v1720 = vadd.f32 0.0, %v1719
  %v1721 = vpop.f32.mrb[0].mxu0
  %v1722 = vadd.f32 0.0, %v1721
  %v1723 = vpop.f32.mrb[0].mxu0
  %v1724 = vadd.f32 0.0, %v1723
  %v1725 = vpop.f32.mrb[0].mxu0
  %v1726 = vadd.f32 0.0, %v1725
  %1727 = vmatprep.mubr.bf16.mxu0 0
  %1728 = vmatmul.mubr.bf16.gmra.mrb[0].mxu0 %v1637
  %v1729 = vpop.f32.mrb[0].mxu0
  %v1730 = vadd.f32 0.0, %v1729
  %v1731 = vpop.f32.mrb[0].mxu0
  %v1732 = vadd.f32 0.0, %v1731
  %v1733 = vpop.f32.mrb[0].mxu0
  %v1734 = vadd.f32 0.0, %v1733
  %v1735 = vpop.f32.mrb[0].mxu0
  %v1736 = vadd.f32 0.0, %v1735
  %1737 = vmatprep.mubr.bf16.mxu0 0
  %1738 = vmatmul.mubr.bf16.gmra.mrb[0].mxu0 %v1640
  %v1739 = vpop.f32.mrb[0].mxu0
  %v1740 = vadd.f32 0.0, %v1739
  %v1741 = vpop.f32.mrb[0].mxu0
  %v1742 = vadd.f32 0.0, %v1741
  %v1743 = vpop.f32.mrb[0].mxu0
  %v1744 = vadd.f32 0.0, %v1743
  %v1745 = vpop.f32.mrb[0].mxu0
  %v1746 = vadd.f32 0.0, %v1745
  %1747 = vmatprep.mubr.bf16.mxu0 0
  %1748 = vmatmul.mubr.bf16.gmra.mrb[0].mxu0 %v1643
  %v1749 = vpop.f32.mrb[0].mxu0
  %v1750 = vpop.f32.mrb[0].mxu0
  %v1751 = vadd.f32 0.0, %v1750
  %v1752 = vpop.f32.mrb[0].mxu0
  %v1753 = vpop.f32.mrb[0].mxu0
  %v1754 = vadd.f32 0.0, %v1753
  %1755 = vmatprep.mubr.bf16.mxu0 0
  %1756 = vmatmul.mubr.bf16.gmra.mrb[0].mxu0 %v1646
  %v1757 = vpop.f32.mrb[0].mxu0
  %v1758 = vpop.f32.mrb[0].mxu0
  %v1759 = vadd.f32 0.0, %v1758
  %v1760 = vpop.f32.mrb[0].mxu0
  %v1761 = vpop.f32.mrb[0].mxu0
  %v1762 = vadd.f32 0.0, %v1761
  %1763 = vmatprep.mubr.bf16.mxu0 0
  %1764 = vmatmul.mubr.bf16.gmra.mrb[0].mxu0 %v1649
  %v1765 = vpop.f32.mrb[0].mxu0
  %v1766 = vpop.f32.mrb[0].mxu0
  %v1767 = vadd.f32 0.0, %v1766
  %v1768 = vpop.f32.mrb[0].mxu0
  %v1769 = vpop.f32.mrb[0].mxu0
  %v1770 = vadd.f32 0.0, %v1769
  %1771 = vmatprep.mubr.bf16.mxu0 0
  %1772 = vmatmul.mubr.bf16.gmra.mrb[0].mxu0 %v1652
  %v1773 = vpop.f32.mrb[0].mxu0
  %v1774 = vpop.f32.mrb[0].mxu0
  %v1775 = vadd.f32 0.0, %v1774
  %v1776 = vpop.f32.mrb[0].mxu0
  %v1777 = vpop.f32.mrb[0].mxu0
  %v1778 = vadd.f32 0.0, %v1777
  %1779 = vmatprep.mubr.bf16.mxu0 0
  %1780 = vmatmul.mubr.bf16.gmra.mrb[0].mxu0 %v1655
  %v1781 = vpop.f32.mrb[0].mxu0
  %v1782 = vpop.f32.mrb[0].mxu0
  %v1783 = vadd.f32 0.0, %v1782
  %v1784 = vpop.f32.mrb[0].mxu0
  %v1785 = vpop.f32.mrb[0].mxu0
  %v1786 = vadd.f32 0.0, %v1785
  %1787 = vdwg.mxu0
  %1788 = vmatprep.subr.bf16.mxu0 %v1557
  %1789 = vmatpush1.bf16.msra.mxu0 %v1556
  %1790 = vmatprep.subr.bf16.mxu0 %v1667
  %1791 = vmatpush1.bf16.msra.mxu0 %v1664
  %1792 = vmatprep.subr.bf16.mxu0 0
  %1793 = vmatpush1.bf16.msra.mxu0 0
  %1794 = vmatprep.subr.bf16.mxu0 0
  %1795 = vmatpush1.bf16.msra.mxu0 0
  %1796 = vmatprep.subr.bf16.mxu0 0
  %1797 = vmatpush1.bf16.msra.mxu0 0
  %1798 = vmatprep.subr.bf16.mxu0 0
  %1799 = vmatpush1.bf16.msra.mxu0 0
  %1800 = vmatprep.subr.bf16.mxu0 0
  %1801 = vmatpush1.bf16.msra.mxu0 0
  %1802 = vmatprep.subr.bf16.mxu0 0
  %1803 = vmatpush1.bf16.msra.mxu0 0
  %1804 = vmatprep.subr.bf16.mxu0 0
  %1805 = vmatpush1.bf16.msra.mxu0 0
  %1806 = vmatprep.subr.bf16.mxu0 0
  %1807 = vmatpush1.bf16.msra.mxu0 0
  %1808 = vmatprep.subr.bf16.mxu0 0
  %1809 = vmatpush1.bf16.msra.mxu0 0
  %1810 = vmatprep.subr.bf16.mxu0 0
  %1811 = vmatpush1.bf16.msra.mxu0 0
  %1812 = vmatprep.subr.bf16.mxu0 0
  %1813 = vmatpush1.bf16.msra.mxu0 0
  %1814 = vmatprep.subr.bf16.mxu0 0
  %1815 = vmatpush1.bf16.msra.mxu0 0
  %1816 = vmatprep.subr.bf16.mxu0 0
  %1817 = vmatpush1.bf16.msra.mxu0 0
  %1818 = vmatprep.subr.bf16.mxu0 0
  %1819 = vmatpush1.bf16.msra.mxu0 0
  %1820 = vmatprep.mubr.bf16.mxu0 0
  %1821 = vmatmul.mubr.bf16.gmra.mrb[0].mxu0 %v1631
  %v1822 = vpop.f32.mrb[0].mxu0
  %v1823 = vadd.f32 0.0, %v1822
  %v1824 = vpop.f32.mrb[0].mxu0
  %v1825 = vadd.f32 0.0, %v1824
  %v1826 = vpop.f32.mrb[0].mxu0
  %v1827 = vadd.f32 0.0, %v1826
  %v1828 = vpop.f32.mrb[0].mxu0
  %v1829 = vadd.f32 0.0, %v1828
  %1830 = vmatprep.mubr.bf16.mxu0 0
  %1831 = vmatmul.mubr.bf16.gmra.mrb[0].mxu0 %v1634
  %v1832 = vpop.f32.mrb[0].mxu0
  %v1833 = vadd.f32 0.0, %v1832
  %v1834 = vpop.f32.mrb[0].mxu0
  %v1835 = vadd.f32 0.0, %v1834
  %v1836 = vpop.f32.mrb[0].mxu0
  %v1837 = vadd.f32 0.0, %v1836
  %v1838 = vpop.f32.mrb[0].mxu0
  %v1839 = vadd.f32 0.0, %v1838
  %1840 = vmatprep.mubr.bf16.mxu0 0
  %1841 = vmatmul.mubr.bf16.gmra.mrb[0].mxu0 %v1637
  %v1842 = vpop.f32.mrb[0].mxu0
  %v1843 = vadd.f32 0.0, %v1842
  %v1844 = vpop.f32.mrb[0].mxu0
  %v1845 = vadd.f32 0.0, %v1844
  %v1846 = vpop.f32.mrb[0].mxu0
  %v1847 = vadd.f32 0.0, %v1846
  %v1848 = vpop.f32.mrb[0].mxu0
  %v1849 = vadd.f32 0.0, %v1848
  %1850 = vmatprep.mubr.bf16.mxu0 0
  %1851 = vmatmul.mubr.bf16.gmra.mrb[0].mxu0 %v1640
  %v1852 = vpop.f32.mrb[0].mxu0
  %v1853 = vadd.f32 0.0, %v1852
  %v1854 = vpop.f32.mrb[0].mxu0
  %v1855 = vadd.f32 0.0, %v1854
  %v1856 = vpop.f32.mrb[0].mxu0
  %v1857 = vadd.f32 0.0, %v1856
  %v1858 = vpop.f32.mrb[0].mxu0
  %v1859 = vadd.f32 0.0, %v1858
  %1860 = vmatprep.mubr.bf16.mxu0 0
  %1861 = vmatmul.mubr.bf16.gmra.mrb[0].mxu0 %v1643
  %v1862 = vpop.f32.mrb[0].mxu0
  %v1863 = vadd.f32 0.0, %v1862
  %v1864 = vpop.f32.mrb[0].mxu0
  %v1865 = vadd.f32 0.0, %v1864
  %v1866 = vpop.f32.mrb[0].mxu0
  %v1867 = vadd.f32 0.0, %v1866
  %v1868 = vpop.f32.mrb[0].mxu0
  %v1869 = vadd.f32 0.0, %v1868
  %1870 = vmatprep.mubr.bf16.mxu0 0
  %1871 = vmatmul.mubr.bf16.gmra.mrb[0].mxu0 %v1646
  %v1872 = vpop.f32.mrb[0].mxu0
  %v1873 = vadd.f32 0.0, %v1872
  %v1874 = vpop.f32.mrb[0].mxu0
  %v1875 = vadd.f32 0.0, %v1874
  %v1876 = vpop.f32.mrb[0].mxu0
  %v1877 = vadd.f32 0.0, %v1876
  %v1878 = vpop.f32.mrb[0].mxu0
  %v1879 = vadd.f32 0.0, %v1878
  %1880 = vmatprep.mubr.bf16.mxu0 0
  %1881 = vmatmul.mubr.bf16.gmra.mrb[0].mxu0 %v1649
  %v1882 = vpop.f32.mrb[0].mxu0
  %v1883 = vadd.f32 0.0, %v1882
  %v1884 = vpop.f32.mrb[0].mxu0
  %v1885 = vadd.f32 0.0, %v1884
  %v1886 = vpop.f32.mrb[0].mxu0
  %v1887 = vadd.f32 0.0, %v1886
  %v1888 = vpop.f32.mrb[0].mxu0
  %v1889 = vadd.f32 0.0, %v1888
  %1890 = vmatprep.mubr.bf16.mxu0 0
  %1891 = vmatmul.mubr.bf16.gmra.mrb[0].mxu0 %v1652
  %v1892 = vpop.f32.mrb[0].mxu0
  %v1893 = vadd.f32 0.0, %v1892
  %v1894 = vpop.f32.mrb[0].mxu0
  %v1895 = vadd.f32 0.0, %v1894
  %v1896 = vpop.f32.mrb[0].mxu0
  %v1897 = vadd.f32 0.0, %v1896
  %v1898 = vpop.f32.mrb[0].mxu0
  %v1899 = vadd.f32 0.0, %v1898
  %1900 = vmatprep.mubr.bf16.mxu0 0
  %1901 = vmatmul.mubr.bf16.gmra.mrb[0].mxu0 %v1655
  %v1902 = vpop.f32.mrb[0].mxu0
  %v1903 = vadd.f32 0.0, %v1902
  %v1904 = vpop.f32.mrb[0].mxu0
  %v1905 = vadd.f32 0.0, %v1904
  %v1906 = vpop.f32.mrb[0].mxu0
  %v1907 = vadd.f32 0.0, %v1906
  %v1908 = vpop.f32.mrb[0].mxu0
  %v1909 = vadd.f32 0.0, %v1908
  %1910 = vdwg.mxu0
  %1911 = vmatprep.subr.bf16.mxu0 %v1559
  %1912 = vmatpush1.bf16.msra.mxu0 %v1558
  %1913 = vmatprep.subr.bf16.mxu0 %v1673
  %1914 = vmatpush1.bf16.msra.mxu0 %v1670
  %1915 = vmatprep.subr.bf16.mxu0 0
  %1916 = vmatpush1.bf16.msra.mxu0 0
  %1917 = vmatprep.subr.bf16.mxu0 0
  %1918 = vmatpush1.bf16.msra.mxu0 0
  %1919 = vmatprep.subr.bf16.mxu0 0
  %1920 = vmatpush1.bf16.msra.mxu0 0
  %1921 = vmatprep.subr.bf16.mxu0 0
  %1922 = vmatpush1.bf16.msra.mxu0 0
  %1923 = vmatprep.subr.bf16.mxu0 0
  %1924 = vmatpush1.bf16.msra.mxu0 0
  %1925 = vmatprep.subr.bf16.mxu0 0
  %1926 = vmatpush1.bf16.msra.mxu0 0
  %1927 = vmatprep.subr.bf16.mxu0 0
  %1928 = vmatpush1.bf16.msra.mxu0 0
  %1929 = vmatprep.subr.bf16.mxu0 0
  %1930 = vmatpush1.bf16.msra.mxu0 0
  %1931 = vmatprep.subr.bf16.mxu0 0
  %1932 = vmatpush1.bf16.msra.mxu0 0
  %1933 = vmatprep.subr.bf16.mxu0 0
  %1934 = vmatpush1.bf16.msra.mxu0 0
  %1935 = vmatprep.subr.bf16.mxu0 0
  %1936 = vmatpush1.bf16.msra.mxu0 0
  %1937 = vmatprep.subr.bf16.mxu0 0
  %1938 = vmatpush1.bf16.msra.mxu0 0
  %1939 = vmatprep.subr.bf16.mxu0 0
  %1940 = vmatpush1.bf16.msra.mxu0 0
  %1941 = vmatprep.subr.bf16.mxu0 0
  %1942 = vmatpush1.bf16.msra.mxu0 0
  %1943 = vmatprep.mubr.bf16.mxu0 0
  %1944 = vmatmul.mubr.bf16.gmra.mrb[0].mxu0 %v1631
  %v1945 = vpop.f32.mrb[0].mxu0
  %v1946 = vadd.f32 0.0, %v1945
  %v1947 = vpop.f32.mrb[0].mxu0
  %v1948 = vpop.f32.mrb[0].mxu0
  %v1949 = vadd.f32 0.0, %v1948
  %v1950 = vpop.f32.mrb[0].mxu0
  %1951 = vmatprep.mubr.bf16.mxu0 0
  %1952 = vmatmul.mubr.bf16.gmra.mrb[0].mxu0 %v1634
  %v1953 = vpop.f32.mrb[0].mxu0
  %v1954 = vadd.f32 0.0, %v1953
  %v1955 = vpop.f32.mrb[0].mxu0
  %v1956 = vpop.f32.mrb[0].mxu0
  %v1957 = vadd.f32 0.0, %v1956
  %v1958 = vpop.f32.mrb[0].mxu0
  %1959 = vmatprep.mubr.bf16.mxu0 0
  %1960 = vmatmul.mubr.bf16.gmra.mrb[0].mxu0 %v1637
  %v1961 = vpop.f32.mrb[0].mxu0
  %v1962 = vadd.f32 0.0, %v1961
  %v1963 = vpop.f32.mrb[0].mxu0
  %v1964 = vpop.f32.mrb[0].mxu0
  %v1965 = vadd.f32 0.0, %v1964
  %v1966 = vpop.f32.mrb[0].mxu0
  %1967 = vmatprep.mubr.bf16.mxu0 0
  %1968 = vmatmul.mubr.bf16.gmra.mrb[0].mxu0 %v1640
  %v1969 = vpop.f32.mrb[0].mxu0
  %v1970 = vadd.f32 0.0, %v1969
  %v1971 = vpop.f32.mrb[0].mxu0
  %v1972 = vpop.f32.mrb[0].mxu0
  %v1973 = vadd.f32 0.0, %v1972
  %v1974 = vpop.f32.mrb[0].mxu0
  %1975 = vmatprep.mubr.bf16.mxu0 0
  %1976 = vmatmul.mubr.bf16.gmra.mrb[0].mxu0 %v1643
  %v1977 = vpop.f32.mrb[0].mxu0
  %v1978 = vadd.f32 0.0, %v1977
  %v1979 = vpop.f32.mrb[0].mxu0
  %v1980 = vpop.f32.mrb[0].mxu0
  %v1981 = vadd.f32 0.0, %v1980
  %v1982 = vpop.f32.mrb[0].mxu0
  %1983 = vmatprep.mubr.bf16.mxu0 0
  %1984 = vmatmul.mubr.bf16.gmra.mrb[0].mxu0 %v1646
  %v1985 = vpop.f32.mrb[0].mxu0
  %v1986 = vadd.f32 0.0, %v1985
  %v1987 = vpop.f32.mrb[0].mxu0
  %v1988 = vadd.f32 0.0, %v1987
  %v1989 = vpop.f32.mrb[0].mxu0
  %v1990 = vadd.f32 0.0, %v1989
  %v1991 = vpop.f32.mrb[0].mxu0
  %v1992 = vadd.f32 0.0, %v1991
  %1993 = vmatprep.mubr.bf16.mxu0 0
  %1994 = vmatmul.mubr.bf16.gmra.mrb[0].mxu0 %v1649
  %v1995 = vpop.f32.mrb[0].mxu0
  %v1996 = vadd.f32 0.0, %v1995
  %v1997 = vpop.f32.mrb[0].mxu0
  %v1998 = vadd.f32 0.0, %v1997
  %v1999 = vpop.f32.mrb[0].mxu0
  %v2000 = vadd.f32 0.0, %v1999
  %v2001 = vpop.f32.mrb[0].mxu0
  %v2002 = vadd.f32 0.0, %v2001
  %2003 = vmatprep.mubr.bf16.mxu0 0
  %2004 = vmatmul.mubr.bf16.gmra.mrb[0].mxu0 %v1652
  %v2005 = vpop.f32.mrb[0].mxu0
  %v2006 = vadd.f32 0.0, %v2005
  %v2007 = vpop.f32.mrb[0].mxu0
  %v2008 = vadd.f32 0.0, %v2007
  %v2009 = vpop.f32.mrb[0].mxu0
  %v2010 = vadd.f32 0.0, %v2009
  %v2011 = vpop.f32.mrb[0].mxu0
  %v2012 = vadd.f32 0.0, %v2011
  %2013 = vmatprep.mubr.bf16.mxu0 0
  %2014 = vmatmul.mubr.bf16.gmra.mrb[0].mxu0 %v1655
  %v2015 = vpop.f32.mrb[0].mxu0
  %v2016 = vadd.f32 0.0, %v2015
  %v2017 = vpop.f32.mrb[0].mxu0
  %v2018 = vadd.f32 0.0, %v2017
  %v2019 = vpop.f32.mrb[0].mxu0
  %v2020 = vadd.f32 0.0, %v2019
  %v2021 = vpop.f32.mrb[0].mxu0
  %v2022 = vadd.f32 0.0, %v2021
  %2023 = vdwg.mxu0
  %v2024 = vld [vmem:[%s1] ss:$8 sm:$0xf]
  %v2026 = vlaneseq
  %v2027 = vshrl.u32 %v2026, 7
  %v2028 = vsub.s32 0, %v2027
  %v2029 = vrot.slane %v2024, %v2028
  %v2030 = vlaneseq
  %v2031 = vshrl.u32 %v2030, 7
  %v2032 = vsub.s32 1, %v2031
  %v2033 = vrot.slane %v2024, %v2032
  %v2034 = vlaneseq
  %v2035 = vshrl.u32 %v2034, 7
  %v2036 = vsub.s32 2, %v2035
  %v2037 = vrot.slane %v2024, %v2036
  %v2038 = vlaneseq
  %v2039 = vshrl.u32 %v2038, 7
  %v2040 = vsub.s32 3, %v2039
  %v2041 = vrot.slane %v2024, %v2040
  %2042 = vrot.lane.b32.xlu0 %v2029, 111
  %v2043 = vpop.permute.xlu0 %2042
  %2044 = vrot.lane.b32.xlu0 %v2033, 111
  %v2045 = vpop.permute.xlu0 %2044
  %2046 = vrot.lane.b32.xlu0 %v2037, 111
  %v2047 = vpop.permute.xlu0 %2046
  %2048 = vrot.lane.b32.xlu0 %v2041, 111
  %v2049 = vpop.permute.xlu0 %2048
  %v2050 = vsel %vm593, %v2043, %v2045
  %v2051 = vsel %vm593, %v2045, %v2047
  %v2052 = vsel %vm593, %v2047, %v2049
  %v2058 = vmul.f32 %v1710, %v2043
  %v2059 = vmul.f32 %v1712, %v2050
  %v2060 = vmul.f32 %v1823, %v2051
  %v2061 = vmul.f32 %v1825, %v2052
  %v2062 = vmul.f32 %v1946, %v2049
  %v2063 = vmul.f32 %v1714, %v2043
  %v2064 = vmul.f32 %v1716, %v2050
  %v2065 = vmul.f32 %v1827, %v2051
  %v2066 = vmul.f32 %v1829, %v2052
  %v2067 = vmul.f32 %v1949, %v2049
  %2078 = vrot.lane.b32.xlu0 %v2058, 17
  %v2079 = vpop.permute.xlu0 %2078
  %2080 = vrot.lane.b32.xlu0 %v2059, 17
  %v2081 = vpop.permute.xlu0 %2080
  %2082 = vrot.lane.b32.xlu0 %v2060, 17
  %v2083 = vpop.permute.xlu0 %2082
  %2084 = vrot.lane.b32.xlu0 %v2061, 17
  %v2085 = vpop.permute.xlu0 %2084
  %2086 = vrot.lane.b32.xlu0 %v2062, 17
  %v2087 = vpop.permute.xlu0 %2086
  %2088 = vrot.lane.b32.xlu0 %v2063, 17
  %v2089 = vpop.permute.xlu0 %2088
  %2090 = vrot.lane.b32.xlu0 %v2064, 17
  %v2091 = vpop.permute.xlu0 %2090
  %2092 = vrot.lane.b32.xlu0 %v2065, 17
  %v2093 = vpop.permute.xlu0 %2092
  %2094 = vrot.lane.b32.xlu0 %v2066, 17
  %v2095 = vpop.permute.xlu0 %2094
  %2096 = vrot.lane.b32.xlu0 %v2067, 17
  %v2097 = vpop.permute.xlu0 %2096
  %v2098 = vsel %vm642, %v2079, %v2081
  %v2099 = vsel %vm642, %v2081, %v2083
  %v2100 = vsel %vm642, %v2083, %v2085
  %v2101 = vsel %vm642, %v2085, %v2087
  %v2102 = vsel %vm642, %v2089, %v2091
  %v2103 = vsel %vm642, %v2091, %v2093
  %v2104 = vsel %vm642, %v2093, %v2095
  %v2105 = vsel %vm642, %v2095, %v2097
  %v2114 = vadd.f32 %v1751, %v2098
  %v2115 = vadd.f32 %v1863, %v2099
  %v2116 = vadd.f32 %v1865, %v2100
  %v2117 = vadd.f32 %v1978, %v2101
  %v2118 = vadd.f32 %v1754, %v2102
  %v2119 = vadd.f32 %v1867, %v2103
  %v2120 = vadd.f32 %v1869, %v2104
  %v2121 = vadd.f32 %v1981, %v2105
  %v2122 = vld [vmem:[%s667] ss:$8 sm:$0xf]
  %v2124 = vlaneseq
  %v2125 = vshrl.u32 %v2124, 7
  %v2126 = vsub.s32 0, %v2125
  %v2127 = vrot.slane %v2122, %v2126
  %v2128 = vlaneseq
  %v2129 = vshrl.u32 %v2128, 7
  %v2130 = vsub.s32 1, %v2129
  %v2131 = vrot.slane %v2122, %v2130
  %v2132 = vlaneseq
  %v2133 = vshrl.u32 %v2132, 7
  %v2134 = vsub.s32 2, %v2133
  %v2135 = vrot.slane %v2122, %v2134
  %v2136 = vlaneseq
  %v2137 = vshrl.u32 %v2136, 7
  %v2138 = vsub.s32 3, %v2137
  %v2139 = vrot.slane %v2122, %v2138
  %2140 = vrot.lane.b32.xlu0 %v2127, 112
  %v2141 = vpop.permute.xlu0 %2140
  %2142 = vrot.lane.b32.xlu0 %v2131, 112
  %v2143 = vpop.permute.xlu0 %2142
  %2144 = vrot.lane.b32.xlu0 %v2135, 112
  %v2145 = vpop.permute.xlu0 %2144
  %2146 = vrot.lane.b32.xlu0 %v2139, 112
  %v2147 = vpop.permute.xlu0 %2146
  %v2148 = vsel %vm694, %v2141, %v2143
  %v2149 = vsel %vm694, %v2143, %v2145
  %v2150 = vsel %vm694, %v2145, %v2147
  %v2156 = vmul.f32 %v1720, %v2141
  %v2157 = vmul.f32 %v1722, %v2148
  %v2158 = vmul.f32 %v1833, %v2149
  %v2159 = vmul.f32 %v1835, %v2150
  %v2160 = vmul.f32 %v1954, %v2147
  %v2161 = vmul.f32 %v1724, %v2141
  %v2162 = vmul.f32 %v1726, %v2148
  %v2163 = vmul.f32 %v1837, %v2149
  %v2164 = vmul.f32 %v1839, %v2150
  %v2165 = vmul.f32 %v1957, %v2147
  %2176 = vrot.lane.b32.xlu0 %v2156, 16
  %v2177 = vpop.permute.xlu0 %2176
  %2178 = vrot.lane.b32.xlu0 %v2157, 16
  %v2179 = vpop.permute.xlu0 %2178
  %2180 = vrot.lane.b32.xlu0 %v2158, 16
  %v2181 = vpop.permute.xlu0 %2180
  %2182 = vrot.lane.b32.xlu0 %v2159, 16
  %v2183 = vpop.permute.xlu0 %2182
  %2184 = vrot.lane.b32.xlu0 %v2160, 16
  %v2185 = vpop.permute.xlu0 %2184
  %2186 = vrot.lane.b32.xlu0 %v2161, 16
  %v2187 = vpop.permute.xlu0 %2186
  %2188 = vrot.lane.b32.xlu0 %v2162, 16
  %v2189 = vpop.permute.xlu0 %2188
  %2190 = vrot.lane.b32.xlu0 %v2163, 16
  %v2191 = vpop.permute.xlu0 %2190
  %2192 = vrot.lane.b32.xlu0 %v2164, 16
  %v2193 = vpop.permute.xlu0 %2192
  %2194 = vrot.lane.b32.xlu0 %v2165, 16
  %v2195 = vpop.permute.xlu0 %2194
  %v2196 = vsel %vm743, %v2177, %v2179
  %v2197 = vsel %vm743, %v2179, %v2181
  %v2198 = vsel %vm743, %v2181, %v2183
  %v2199 = vsel %vm743, %v2183, %v2185
  %v2200 = vsel %vm743, %v2187, %v2189
  %v2201 = vsel %vm743, %v2189, %v2191
  %v2202 = vsel %vm743, %v2191, %v2193
  %v2203 = vsel %vm743, %v2193, %v2195
  %v2212 = vadd.f32 %v2114, %v2196
  %v2213 = vadd.f32 %v2115, %v2197
  %v2214 = vadd.f32 %v2116, %v2198
  %v2215 = vadd.f32 %v2117, %v2199
  %v2216 = vadd.f32 %v2118, %v2200
  %v2217 = vadd.f32 %v2119, %v2201
  %v2218 = vadd.f32 %v2120, %v2202
  %v2219 = vadd.f32 %v2121, %v2203
  %v2220 = vld [vmem:[%s768] ss:$8 sm:$0xf]
  %v2222 = vlaneseq
  %v2223 = vshrl.u32 %v2222, 7
  %v2224 = vsub.s32 0, %v2223
  %v2225 = vrot.slane %v2220, %v2224
  %v2226 = vlaneseq
  %v2227 = vshrl.u32 %v2226, 7
  %v2228 = vsub.s32 1, %v2227
  %v2229 = vrot.slane %v2220, %v2228
  %v2230 = vlaneseq
  %v2231 = vshrl.u32 %v2230, 7
  %v2232 = vsub.s32 2, %v2231
  %v2233 = vrot.slane %v2220, %v2232
  %v2234 = vlaneseq
  %v2235 = vshrl.u32 %v2234, 7
  %v2236 = vsub.s32 3, %v2235
  %v2237 = vrot.slane %v2220, %v2236
  %2238 = vrot.lane.b32.xlu0 %v2225, 113
  %v2239 = vpop.permute.xlu0 %2238
  %2240 = vrot.lane.b32.xlu0 %v2229, 113
  %v2241 = vpop.permute.xlu0 %2240
  %2242 = vrot.lane.b32.xlu0 %v2233, 113
  %v2243 = vpop.permute.xlu0 %2242
  %2244 = vrot.lane.b32.xlu0 %v2237, 113
  %v2245 = vpop.permute.xlu0 %2244
  %v2246 = vsel %vm795, %v2239, %v2241
  %v2247 = vsel %vm795, %v2241, %v2243
  %v2248 = vsel %vm795, %v2243, %v2245
  %v2254 = vmul.f32 %v1730, %v2239
  %v2255 = vmul.f32 %v1732, %v2246
  %v2256 = vmul.f32 %v1843, %v2247
  %v2257 = vmul.f32 %v1845, %v2248
  %v2258 = vmul.f32 %v1962, %v2245
  %v2259 = vmul.f32 %v1734, %v2239
  %v2260 = vmul.f32 %v1736, %v2246
  %v2261 = vmul.f32 %v1847, %v2247
  %v2262 = vmul.f32 %v1849, %v2248
  %v2263 = vmul.f32 %v1965, %v2245
  %2274 = vrot.lane.b32.xlu0 %v2254, 15
  %v2275 = vpop.permute.xlu0 %2274
  %2276 = vrot.lane.b32.xlu0 %v2255, 15
  %v2277 = vpop.permute.xlu0 %2276
  %2278 = vrot.lane.b32.xlu0 %v2256, 15
  %v2279 = vpop.permute.xlu0 %2278
  %2280 = vrot.lane.b32.xlu0 %v2257, 15
  %v2281 = vpop.permute.xlu0 %2280
  %2282 = vrot.lane.b32.xlu0 %v2258, 15
  %v2283 = vpop.permute.xlu0 %2282
  %2284 = vrot.lane.b32.xlu0 %v2259, 15
  %v2285 = vpop.permute.xlu0 %2284
  %2286 = vrot.lane.b32.xlu0 %v2260, 15
  %v2287 = vpop.permute.xlu0 %2286
  %2288 = vrot.lane.b32.xlu0 %v2261, 15
  %v2289 = vpop.permute.xlu0 %2288
  %2290 = vrot.lane.b32.xlu0 %v2262, 15
  %v2291 = vpop.permute.xlu0 %2290
  %2292 = vrot.lane.b32.xlu0 %v2263, 15
  %v2293 = vpop.permute.xlu0 %2292
  %v2294 = vsel %vm844, %v2275, %v2277
  %v2295 = vsel %vm844, %v2277, %v2279
  %v2296 = vsel %vm844, %v2279, %v2281
  %v2297 = vsel %vm844, %v2281, %v2283
  %v2298 = vsel %vm844, %v2285, %v2287
  %v2299 = vsel %vm844, %v2287, %v2289
  %v2300 = vsel %vm844, %v2289, %v2291
  %v2301 = vsel %vm844, %v2291, %v2293
  %v2310 = vadd.f32 %v2212, %v2294
  %v2311 = vadd.f32 %v2213, %v2295
  %v2312 = vadd.f32 %v2214, %v2296
  %v2313 = vadd.f32 %v2215, %v2297
  %v2314 = vadd.f32 %v2216, %v2298
  %v2315 = vadd.f32 %v2217, %v2299
  %v2316 = vadd.f32 %v2218, %v2300
  %v2317 = vadd.f32 %v2219, %v2301
  %v2318 = vld [vmem:[%s869] ss:$8 sm:$0xf]
  %v2320 = vlaneseq
  %v2321 = vshrl.u32 %v2320, 7
  %v2322 = vsub.s32 0, %v2321
  %v2323 = vrot.slane %v2318, %v2322
  %v2324 = vlaneseq
  %v2325 = vshrl.u32 %v2324, 7
  %v2326 = vsub.s32 1, %v2325
  %v2327 = vrot.slane %v2318, %v2326
  %v2328 = vlaneseq
  %v2329 = vshrl.u32 %v2328, 7
  %v2330 = vsub.s32 2, %v2329
  %v2331 = vrot.slane %v2318, %v2330
  %v2332 = vlaneseq
  %v2333 = vshrl.u32 %v2332, 7
  %v2334 = vsub.s32 3, %v2333
  %v2335 = vrot.slane %v2318, %v2334
  %2336 = vrot.lane.b32.xlu0 %v2323, 127
  %v2337 = vpop.permute.xlu0 %2336
  %2338 = vrot.lane.b32.xlu0 %v2327, 127
  %v2339 = vpop.permute.xlu0 %2338
  %2340 = vrot.lane.b32.xlu0 %v2331, 127
  %v2341 = vpop.permute.xlu0 %2340
  %2342 = vrot.lane.b32.xlu0 %v2335, 127
  %v2343 = vpop.permute.xlu0 %2342
  %v2344 = vsel %vm896, %v2337, %v2339
  %v2345 = vsel %vm896, %v2339, %v2341
  %v2346 = vsel %vm896, %v2341, %v2343
  %v2352 = vmul.f32 %v1740, %v2337
  %v2353 = vmul.f32 %v1742, %v2344
  %v2354 = vmul.f32 %v1853, %v2345
  %v2355 = vmul.f32 %v1855, %v2346
  %v2356 = vmul.f32 %v1970, %v2343
  %v2357 = vmul.f32 %v1744, %v2337
  %v2358 = vmul.f32 %v1746, %v2344
  %v2359 = vmul.f32 %v1857, %v2345
  %v2360 = vmul.f32 %v1859, %v2346
  %v2361 = vmul.f32 %v1973, %v2343
  %2372 = vrot.lane.b32.xlu0 %v2352, 1
  %v2373 = vpop.permute.xlu0 %2372
  %2374 = vrot.lane.b32.xlu0 %v2353, 1
  %v2375 = vpop.permute.xlu0 %2374
  %2376 = vrot.lane.b32.xlu0 %v2354, 1
  %v2377 = vpop.permute.xlu0 %2376
  %2378 = vrot.lane.b32.xlu0 %v2355, 1
  %v2379 = vpop.permute.xlu0 %2378
  %2380 = vrot.lane.b32.xlu0 %v2356, 1
  %v2381 = vpop.permute.xlu0 %2380
  %2382 = vrot.lane.b32.xlu0 %v2357, 1
  %v2383 = vpop.permute.xlu0 %2382
  %2384 = vrot.lane.b32.xlu0 %v2358, 1
  %v2385 = vpop.permute.xlu0 %2384
  %2386 = vrot.lane.b32.xlu0 %v2359, 1
  %v2387 = vpop.permute.xlu0 %2386
  %2388 = vrot.lane.b32.xlu0 %v2360, 1
  %v2389 = vpop.permute.xlu0 %2388
  %2390 = vrot.lane.b32.xlu0 %v2361, 1
  %v2391 = vpop.permute.xlu0 %2390
  %v2392 = vsel %vm945, %v2373, %v2375
  %v2393 = vsel %vm945, %v2375, %v2377
  %v2394 = vsel %vm945, %v2377, %v2379
  %v2395 = vsel %vm945, %v2379, %v2381
  %v2396 = vsel %vm945, %v2383, %v2385
  %v2397 = vsel %vm945, %v2385, %v2387
  %v2398 = vsel %vm945, %v2387, %v2389
  %v2399 = vsel %vm945, %v2389, %v2391
  %v2408 = vadd.f32 %v2310, %v2392
  %v2409 = vadd.f32 %v2311, %v2393
  %v2410 = vadd.f32 %v2312, %v2394
  %v2411 = vadd.f32 %v2313, %v2395
  %v2412 = vadd.f32 %v2314, %v2396
  %v2413 = vadd.f32 %v2315, %v2397
  %v2414 = vadd.f32 %v2316, %v2398
  %v2415 = vadd.f32 %v2317, %v2399
  %v2416 = vld [vmem:[%s970] ss:$8 sm:$0xf]
  %v2418 = vlaneseq
  %v2419 = vshrl.u32 %v2418, 7
  %v2420 = vsub.s32 0, %v2419
  %v2421 = vrot.slane %v2416, %v2420
  %v2422 = vlaneseq
  %v2423 = vshrl.u32 %v2422, 7
  %v2424 = vsub.s32 1, %v2423
  %v2425 = vrot.slane %v2416, %v2424
  %v2426 = vlaneseq
  %v2427 = vshrl.u32 %v2426, 7
  %v2428 = vsub.s32 2, %v2427
  %v2429 = vrot.slane %v2416, %v2428
  %v2430 = vlaneseq
  %v2431 = vshrl.u32 %v2430, 7
  %v2432 = vsub.s32 3, %v2431
  %v2433 = vrot.slane %v2416, %v2432
  %2434 = vrot.lane.b32.xlu0 %v2421, 1
  %v2435 = vpop.permute.xlu0 %2434
  %2436 = vrot.lane.b32.xlu0 %v2425, 1
  %v2437 = vpop.permute.xlu0 %2436
  %2438 = vrot.lane.b32.xlu0 %v2429, 1
  %v2439 = vpop.permute.xlu0 %2438
  %2440 = vrot.lane.b32.xlu0 %v2433, 1
  %v2441 = vpop.permute.xlu0 %2440
  %v2442 = vsel %vm945, %v2435, %v2437
  %v2443 = vsel %vm945, %v2437, %v2439
  %v2444 = vsel %vm945, %v2439, %v2441
  %v2450 = vmul.f32 %v1759, %v2435
  %v2451 = vmul.f32 %v1873, %v2442
  %v2452 = vmul.f32 %v1875, %v2443
  %v2453 = vmul.f32 %v1986, %v2444
  %v2454 = vmul.f32 %v1988, %v2441
  %v2455 = vmul.f32 %v1762, %v2435
  %v2456 = vmul.f32 %v1877, %v2442
  %v2457 = vmul.f32 %v1879, %v2443
  %v2458 = vmul.f32 %v1990, %v2444
  %v2459 = vmul.f32 %v1992, %v2441
  %2470 = vrot.lane.b32.xlu0 %v2450, 127
  %v2471 = vpop.permute.xlu0 %2470
  %2472 = vrot.lane.b32.xlu0 %v2451, 127
  %v2473 = vpop.permute.xlu0 %2472
  %2474 = vrot.lane.b32.xlu0 %v2452, 127
  %v2475 = vpop.permute.xlu0 %2474
  %2476 = vrot.lane.b32.xlu0 %v2453, 127
  %v2477 = vpop.permute.xlu0 %2476
  %2478 = vrot.lane.b32.xlu0 %v2454, 127
  %v2479 = vpop.permute.xlu0 %2478
  %2480 = vrot.lane.b32.xlu0 %v2455, 127
  %v2481 = vpop.permute.xlu0 %2480
  %2482 = vrot.lane.b32.xlu0 %v2456, 127
  %v2483 = vpop.permute.xlu0 %2482
  %2484 = vrot.lane.b32.xlu0 %v2457, 127
  %v2485 = vpop.permute.xlu0 %2484
  %2486 = vrot.lane.b32.xlu0 %v2458, 127
  %v2487 = vpop.permute.xlu0 %2486
  %2488 = vrot.lane.b32.xlu0 %v2459, 127
  %v2489 = vpop.permute.xlu0 %2488
  %v2490 = vsel %vm896, %v2471, %v2473
  %v2491 = vsel %vm896, %v2473, %v2475
  %v2492 = vsel %vm896, %v2475, %v2477
  %v2493 = vsel %vm896, %v2477, %v2479
  %v2494 = vsel %vm896, %v2481, %v2483
  %v2495 = vsel %vm896, %v2483, %v2485
  %v2496 = vsel %vm896, %v2485, %v2487
  %v2497 = vsel %vm896, %v2487, %v2489
  %v2506 = vadd.f32 %v2408, %v2490
  %v2507 = vadd.f32 %v2409, %v2491
  %v2508 = vadd.f32 %v2410, %v2492
  %v2509 = vadd.f32 %v2411, %v2493
  %v2510 = vadd.f32 %v2412, %v2494
  %v2511 = vadd.f32 %v2413, %v2495
  %v2512 = vadd.f32 %v2414, %v2496
  %v2513 = vadd.f32 %v2415, %v2497
  %v2514 = vld [vmem:[%s1069] ss:$8 sm:$0xf]
  %v2516 = vlaneseq
  %v2517 = vshrl.u32 %v2516, 7
  %v2518 = vsub.s32 0, %v2517
  %v2519 = vrot.slane %v2514, %v2518
  %v2520 = vlaneseq
  %v2521 = vshrl.u32 %v2520, 7
  %v2522 = vsub.s32 1, %v2521
  %v2523 = vrot.slane %v2514, %v2522
  %v2524 = vlaneseq
  %v2525 = vshrl.u32 %v2524, 7
  %v2526 = vsub.s32 2, %v2525
  %v2527 = vrot.slane %v2514, %v2526
  %v2528 = vlaneseq
  %v2529 = vshrl.u32 %v2528, 7
  %v2530 = vsub.s32 3, %v2529
  %v2531 = vrot.slane %v2514, %v2530
  %2532 = vrot.lane.b32.xlu0 %v2519, 15
  %v2533 = vpop.permute.xlu0 %2532
  %2534 = vrot.lane.b32.xlu0 %v2523, 15
  %v2535 = vpop.permute.xlu0 %2534
  %2536 = vrot.lane.b32.xlu0 %v2527, 15
  %v2537 = vpop.permute.xlu0 %2536
  %2538 = vrot.lane.b32.xlu0 %v2531, 15
  %v2539 = vpop.permute.xlu0 %2538
  %v2540 = vsel %vm844, %v2533, %v2535
  %v2541 = vsel %vm844, %v2535, %v2537
  %v2542 = vsel %vm844, %v2537, %v2539
  %v2548 = vmul.f32 %v1767, %v2533
  %v2549 = vmul.f32 %v1883, %v2540
  %v2550 = vmul.f32 %v1885, %v2541
  %v2551 = vmul.f32 %v1996, %v2542
  %v2552 = vmul.f32 %v1998, %v2539
  %v2553 = vmul.f32 %v1770, %v2533
  %v2554 = vmul.f32 %v1887, %v2540
  %v2555 = vmul.f32 %v1889, %v2541
  %v2556 = vmul.f32 %v2000, %v2542
  %v2557 = vmul.f32 %v2002, %v2539
  %2568 = vrot.lane.b32.xlu0 %v2548, 113
  %v2569 = vpop.permute.xlu0 %2568
  %2570 = vrot.lane.b32.xlu0 %v2549, 113
  %v2571 = vpop.permute.xlu0 %2570
  %2572 = vrot.lane.b32.xlu0 %v2550, 113
  %v2573 = vpop.permute.xlu0 %2572
  %2574 = vrot.lane.b32.xlu0 %v2551, 113
  %v2575 = vpop.permute.xlu0 %2574
  %2576 = vrot.lane.b32.xlu0 %v2552, 113
  %v2577 = vpop.permute.xlu0 %2576
  %2578 = vrot.lane.b32.xlu0 %v2553, 113
  %v2579 = vpop.permute.xlu0 %2578
  %2580 = vrot.lane.b32.xlu0 %v2554, 113
  %v2581 = vpop.permute.xlu0 %2580
  %2582 = vrot.lane.b32.xlu0 %v2555, 113
  %v2583 = vpop.permute.xlu0 %2582
  %2584 = vrot.lane.b32.xlu0 %v2556, 113
  %v2585 = vpop.permute.xlu0 %2584
  %2586 = vrot.lane.b32.xlu0 %v2557, 113
  %v2587 = vpop.permute.xlu0 %2586
  %v2588 = vsel %vm795, %v2569, %v2571
  %v2589 = vsel %vm795, %v2571, %v2573
  %v2590 = vsel %vm795, %v2573, %v2575
  %v2591 = vsel %vm795, %v2575, %v2577
  %v2592 = vsel %vm795, %v2579, %v2581
  %v2593 = vsel %vm795, %v2581, %v2583
  %v2594 = vsel %vm795, %v2583, %v2585
  %v2595 = vsel %vm795, %v2585, %v2587
  %v2604 = vadd.f32 %v2506, %v2588
  %v2605 = vadd.f32 %v2507, %v2589
  %v2606 = vadd.f32 %v2508, %v2590
  %v2607 = vadd.f32 %v2509, %v2591
  %v2608 = vadd.f32 %v2510, %v2592
  %v2609 = vadd.f32 %v2511, %v2593
  %v2610 = vadd.f32 %v2512, %v2594
  %v2611 = vadd.f32 %v2513, %v2595
  %v2612 = vld [vmem:[%s1168] ss:$8 sm:$0xf]
  %v2614 = vlaneseq
  %v2615 = vshrl.u32 %v2614, 7
  %v2616 = vsub.s32 0, %v2615
  %v2617 = vrot.slane %v2612, %v2616
  %v2618 = vlaneseq
  %v2619 = vshrl.u32 %v2618, 7
  %v2620 = vsub.s32 1, %v2619
  %v2621 = vrot.slane %v2612, %v2620
  %v2622 = vlaneseq
  %v2623 = vshrl.u32 %v2622, 7
  %v2624 = vsub.s32 2, %v2623
  %v2625 = vrot.slane %v2612, %v2624
  %v2626 = vlaneseq
  %v2627 = vshrl.u32 %v2626, 7
  %v2628 = vsub.s32 3, %v2627
  %v2629 = vrot.slane %v2612, %v2628
  %2630 = vrot.lane.b32.xlu0 %v2617, 16
  %v2631 = vpop.permute.xlu0 %2630
  %2632 = vrot.lane.b32.xlu0 %v2621, 16
  %v2633 = vpop.permute.xlu0 %2632
  %2634 = vrot.lane.b32.xlu0 %v2625, 16
  %v2635 = vpop.permute.xlu0 %2634
  %2636 = vrot.lane.b32.xlu0 %v2629, 16
  %v2637 = vpop.permute.xlu0 %2636
  %v2638 = vsel %vm743, %v2631, %v2633
  %v2639 = vsel %vm743, %v2633, %v2635
  %v2640 = vsel %vm743, %v2635, %v2637
  %v2646 = vmul.f32 %v1775, %v2631
  %v2647 = vmul.f32 %v1893, %v2638
  %v2648 = vmul.f32 %v1895, %v2639
  %v2649 = vmul.f32 %v2006, %v2640
  %v2650 = vmul.f32 %v2008, %v2637
  %v2651 = vmul.f32 %v1778, %v2631
  %v2652 = vmul.f32 %v1897, %v2638
  %v2653 = vmul.f32 %v1899, %v2639
  %v2654 = vmul.f32 %v2010, %v2640
  %v2655 = vmul.f32 %v2012, %v2637
  %2666 = vrot.lane.b32.xlu0 %v2646, 112
  %v2667 = vpop.permute.xlu0 %2666
  %2668 = vrot.lane.b32.xlu0 %v2647, 112
  %v2669 = vpop.permute.xlu0 %2668
  %2670 = vrot.lane.b32.xlu0 %v2648, 112
  %v2671 = vpop.permute.xlu0 %2670
  %2672 = vrot.lane.b32.xlu0 %v2649, 112
  %v2673 = vpop.permute.xlu0 %2672
  %2674 = vrot.lane.b32.xlu0 %v2650, 112
  %v2675 = vpop.permute.xlu0 %2674
  %2676 = vrot.lane.b32.xlu0 %v2651, 112
  %v2677 = vpop.permute.xlu0 %2676
  %2678 = vrot.lane.b32.xlu0 %v2652, 112
  %v2679 = vpop.permute.xlu0 %2678
  %2680 = vrot.lane.b32.xlu0 %v2653, 112
  %v2681 = vpop.permute.xlu0 %2680
  %2682 = vrot.lane.b32.xlu0 %v2654, 112
  %v2683 = vpop.permute.xlu0 %2682
  %2684 = vrot.lane.b32.xlu0 %v2655, 112
  %v2685 = vpop.permute.xlu0 %2684
  %v2686 = vsel %vm694, %v2667, %v2669
  %v2687 = vsel %vm694, %v2669, %v2671
  %v2688 = vsel %vm694, %v2671, %v2673
  %v2689 = vsel %vm694, %v2673, %v2675
  %v2690 = vsel %vm694, %v2677, %v2679
  %v2691 = vsel %vm694, %v2679, %v2681
  %v2692 = vsel %vm694, %v2681, %v2683
  %v2693 = vsel %vm694, %v2683, %v2685
  %v2702 = vadd.f32 %v2604, %v2686
  %v2703 = vadd.f32 %v2605, %v2687
  %v2704 = vadd.f32 %v2606, %v2688
  %v2705 = vadd.f32 %v2607, %v2689
  %v2706 = vadd.f32 %v2608, %v2690
  %v2707 = vadd.f32 %v2609, %v2691
  %v2708 = vadd.f32 %v2610, %v2692
  %v2709 = vadd.f32 %v2611, %v2693
  %v2710 = vld [vmem:[%s1267] ss:$8 sm:$0xf]
  %v2712 = vlaneseq
  %v2713 = vshrl.u32 %v2712, 7
  %v2714 = vsub.s32 0, %v2713
  %v2715 = vrot.slane %v2710, %v2714
  %v2716 = vlaneseq
  %v2717 = vshrl.u32 %v2716, 7
  %v2718 = vsub.s32 1, %v2717
  %v2719 = vrot.slane %v2710, %v2718
  %v2720 = vlaneseq
  %v2721 = vshrl.u32 %v2720, 7
  %v2722 = vsub.s32 2, %v2721
  %v2723 = vrot.slane %v2710, %v2722
  %v2724 = vlaneseq
  %v2725 = vshrl.u32 %v2724, 7
  %v2726 = vsub.s32 3, %v2725
  %v2727 = vrot.slane %v2710, %v2726
  %2728 = vrot.lane.b32.xlu0 %v2715, 17
  %v2729 = vpop.permute.xlu0 %2728
  %2730 = vrot.lane.b32.xlu0 %v2719, 17
  %v2731 = vpop.permute.xlu0 %2730
  %2732 = vrot.lane.b32.xlu0 %v2723, 17
  %v2733 = vpop.permute.xlu0 %2732
  %2734 = vrot.lane.b32.xlu0 %v2727, 17
  %v2735 = vpop.permute.xlu0 %2734
  %v2736 = vsel %vm642, %v2729, %v2731
  %v2737 = vsel %vm642, %v2731, %v2733
  %v2738 = vsel %vm642, %v2733, %v2735
  %v2744 = vmul.f32 %v1783, %v2729
  %v2745 = vmul.f32 %v1903, %v2736
  %v2746 = vmul.f32 %v1905, %v2737
  %v2747 = vmul.f32 %v2016, %v2738
  %v2748 = vmul.f32 %v2018, %v2735
  %v2749 = vmul.f32 %v1786, %v2729
  %v2750 = vmul.f32 %v1907, %v2736
  %v2751 = vmul.f32 %v1909, %v2737
  %v2752 = vmul.f32 %v2020, %v2738
  %v2753 = vmul.f32 %v2022, %v2735
  %2764 = vrot.lane.b32.xlu0 %v2744, 111
  %v2765 = vpop.permute.xlu0 %2764
  %2766 = vrot.lane.b32.xlu0 %v2745, 111
  %v2767 = vpop.permute.xlu0 %2766
  %2768 = vrot.lane.b32.xlu0 %v2746, 111
  %v2769 = vpop.permute.xlu0 %2768
  %2770 = vrot.lane.b32.xlu0 %v2747, 111
  %v2771 = vpop.permute.xlu0 %2770
  %2772 = vrot.lane.b32.xlu0 %v2748, 111
  %v2773 = vpop.permute.xlu0 %2772
  %2774 = vrot.lane.b32.xlu0 %v2749, 111
  %v2775 = vpop.permute.xlu0 %2774
  %2776 = vrot.lane.b32.xlu0 %v2750, 111
  %v2777 = vpop.permute.xlu0 %2776
  %2778 = vrot.lane.b32.xlu0 %v2751, 111
  %v2779 = vpop.permute.xlu0 %2778
  %2780 = vrot.lane.b32.xlu0 %v2752, 111
  %v2781 = vpop.permute.xlu0 %2780
  %2782 = vrot.lane.b32.xlu0 %v2753, 111
  %v2783 = vpop.permute.xlu0 %2782
  %v2784 = vsel %vm593, %v2765, %v2767
  %v2785 = vsel %vm593, %v2767, %v2769
  %v2786 = vsel %vm593, %v2769, %v2771
  %v2787 = vsel %vm593, %v2771, %v2773
  %v2788 = vsel %vm593, %v2775, %v2777
  %v2789 = vsel %vm593, %v2777, %v2779
  %v2790 = vsel %vm593, %v2779, %v2781
  %v2791 = vsel %vm593, %v2781, %v2783
  %v2800 = vadd.f32 %v2702, %v2784
  %v2801 = vadd.f32 %v2703, %v2785
  %v2802 = vadd.f32 %v2704, %v2786
  %v2803 = vadd.f32 %v2705, %v2787
  %v2804 = vadd.f32 %v2706, %v2788
  %v2805 = vadd.f32 %v2707, %v2789
  %v2806 = vadd.f32 %v2708, %v2790
  %v2807 = vadd.f32 %v2709, %v2791
  %v2808 = vld [vmem:[%s7] sm:$0xff]
  %v2809 = vld [vmem:[%s7 + $0x8] sm:$0xff]
  %2811 = vset.pattern.permute.xlu0 0
  %2812 = vperm.xlu0 %2811, %v2808
  %v2813 = vpop.permute.xlu0 %2812
  %2816 = vset.pattern.permute.xlu0 0
  %2817 = vperm.xlu0 %2816, %v2809
  %v2818 = vpop.permute.xlu0 %2817
  %v2820 = vadd.f32 %v2800, %v2813
  %v2821 = vadd.f32 %v2801, %v2813
  %v2822 = vadd.f32 %v2802, %v2813
  %v2823 = vadd.f32 %v2803, %v2813
  %v2824 = vadd.f32 %v2804, %v2818
  %v2825 = vadd.f32 %v2805, %v2818
  %v2826 = vadd.f32 %v2806, %v2818
  %v2827 = vadd.f32 %v2807, %v2818
  %v2828 = vmax.f32 %v2820, 0.0
  %v2829 = vmax.f32 %v2821, 0.0
  %v2830 = vmax.f32 %v2822, 0.0
  %v2831 = vmax.f32 %v2823, 0.0
  %v2832 = vmax.f32 %v2824, 0.0
  %v2833 = vmax.f32 %v2825, 0.0
  %v2834 = vmax.f32 %v2826, 0.0
  %v2835 = vmax.f32 %v2827, 0.0
  %v2836 = vadd.f32 %v2828, %v2829
  %v2837 = vadd.f32 %v2836, %v2830
  %v2838 = vadd.f32 %v2837, %v2831
  %2839 = vadd.xlane.f32.xlu0 %v2838
  %v2840 = vpop.xlane.xlu0 %2839
  %v2841 = vadd.f32 %v2832, %v2833
  %v2842 = vadd.f32 %v2841, %v2834
  %v2843 = vadd.f32 %v2842, %v2835
  %2844 = vadd.xlane.f32.xlu0 %v2843
  %v2845 = vpop.xlane.xlu0 %2844
  %v2846 = vmul.f32 %v2828, %v2828
  %v2847 = vmul.f32 %v2829, %v2829
  %v2848 = vmul.f32 %v2830, %v2830
  %v2849 = vmul.f32 %v2831, %v2831
  %v2850 = vmul.f32 %v2832, %v2832
  %v2851 = vmul.f32 %v2833, %v2833
  %v2852 = vmul.f32 %v2834, %v2834
  %v2853 = vmul.f32 %v2835, %v2835
  %v2854 = vadd.f32 %v2846, %v2847
  %v2855 = vadd.f32 %v2854, %v2848
  %v2856 = vadd.f32 %v2855, %v2849
  %2857 = vadd.xlane.f32.xlu0 %v2856
  %v2858 = vpop.xlane.xlu0 %2857
  %v2859 = vadd.f32 %v2850, %v2851
  %v2860 = vadd.f32 %v2859, %v2852
  %v2861 = vadd.f32 %v2860, %v2853
  %2862 = vadd.xlane.f32.xlu0 %v2861
  %v2863 = vpop.xlane.xlu0 %2862
  %v2864 = vmul.f32 %v2840, 0.001953125
  %v2865 = vmul.f32 %v2845, 0.001953125
  %v2866 = vmul.f32 %v2858, 0.001953125
  %v2867 = vmul.f32 %v2863, 0.001953125
  %v2868 = vmul.f32 %v2864, %v2864
  %v2869 = vmul.f32 %v2865, %v2865
  %v2870 = vsub.f32 %v2866, %v2868
  %v2871 = vsub.f32 %v2867, %v2869
  %v2872 = vmax.f32 %v2870, 0.0
  %v2873 = vmax.f32 %v2871, 0.0
  %v2874 = vsub.f32 %v2828, %v2864
  %v2875 = vsub.f32 %v2829, %v2864
  %v2876 = vsub.f32 %v2830, %v2864
  %v2877 = vsub.f32 %v2831, %v2864
  %v2878 = vsub.f32 %v2832, %v2865
  %v2879 = vsub.f32 %v2833, %v2865
  %v2880 = vsub.f32 %v2834, %v2865
  %v2881 = vsub.f32 %v2835, %v2865
  %v2882 = vadd.f32 %v2872, 1e-05
  %v2883 = vadd.f32 %v2873, 1e-05
  %v2884 = vrsqrt.pop %v2882
  %v2885 = vrsqrt.pop %v2883
  %v2886 = vmul.f32 %v2874, %v2884
  %v2887 = vmul.f32 %v2875, %v2884
  %v2888 = vmul.f32 %v2876, %v2884
  %v2889 = vmul.f32 %v2877, %v2884
  %v2890 = vmul.f32 %v2878, %v2885
  %v2891 = vmul.f32 %v2879, %v2885
  %v2892 = vmul.f32 %v2880, %v2885
  %v2893 = vmul.f32 %v2881, %v2885
  %v2894 = vld [vmem:[%s8] sm:$0xff]
  %v2895 = vld [vmem:[%s8 + $0x8] sm:$0xff]
  %2897 = vset.pattern.permute.xlu0 0
  %2898 = vperm.xlu0 %2897, %v2894
  %v2899 = vpop.permute.xlu0 %2898
  %2902 = vset.pattern.permute.xlu0 0
  %2903 = vperm.xlu0 %2902, %v2895
  %v2904 = vpop.permute.xlu0 %2903
  %v2906 = vmul.f32 %v2886, %v2899
  %v2907 = vmul.f32 %v2887, %v2899
  %v2908 = vmul.f32 %v2888, %v2899
  %v2909 = vmul.f32 %v2889, %v2899
  %v2910 = vmul.f32 %v2890, %v2904
  %v2911 = vmul.f32 %v2891, %v2904
  %v2912 = vmul.f32 %v2892, %v2904
  %v2913 = vmul.f32 %v2893, %v2904
  %v2914 = vld [vmem:[%s9] sm:$0xff]
  %v2915 = vld [vmem:[%s9 + $0x8] sm:$0xff]
  %2917 = vset.pattern.permute.xlu0 0
  %2918 = vperm.xlu0 %2917, %v2914
  %v2919 = vpop.permute.xlu0 %2918
  %2922 = vset.pattern.permute.xlu0 0
  %2923 = vperm.xlu0 %2922, %v2915
  %v2924 = vpop.permute.xlu0 %2923
  %v2926 = vadd.f32 %v2906, %v2919
  %v2927 = vadd.f32 %v2907, %v2919
  %v2928 = vadd.f32 %v2908, %v2919
  %v2929 = vadd.f32 %v2909, %v2919
  %v2930 = vadd.f32 %v2910, %v2924
  %v2931 = vadd.f32 %v2911, %v2924
  %v2932 = vadd.f32 %v2912, %v2924
  %v2933 = vadd.f32 %v2913, %v2924
  %2934 = vst [vmem:[#allocation2 + $0x98] sm:$0xff] %v2926
  %2935 = vst [vmem:[#allocation2 + $0xa0] sm:$0xff] %v2927
  %2936 = vst [vmem:[#allocation2 + $0xa8] sm:$0xff] %v2928
  %2937 = vst [vmem:[#allocation2 + $0xb0] sm:$0xff] %v2929
  %2938 = vst [vmem:[#allocation2 + $0xc8] sm:$0xff] %v2930
  %2939 = vst [vmem:[#allocation2 + $0xd0] sm:$0xff] %v2931
  %2940 = vst [vmem:[#allocation2 + $0xd8] sm:$0xff] %v2932
  %2941 = vst [vmem:[#allocation2 + $0xe0] sm:$0xff] %v2933
  %2942 = vst [vmem:[%s19 + $0x40] sm:$0xff] %v2926
  %2943 = vst [vmem:[%s19 + $0x48] sm:$0xff] %v2927
  %2944 = vst [vmem:[%s19 + $0x50] sm:$0xff] %v2928
  %2945 = vst [vmem:[%s19 + $0x58] sm:$0xff] %v2929
  %2946 = vst [vmem:[%s19 + $0x60] sm:$0xf] %v2930
  %2947 = vst [vmem:[%s19 + $0x68] sm:$0xf] %v2931
  %2948 = vst [vmem:[%s19 + $0x70] sm:$0xf] %v2932
  %2949 = vst [vmem:[%s19 + $0x78] sm:$0xf] %v2933
  %v2950 = vld [vmem:[#allocation2] sm:$0xff]
  %v2951 = vld [vmem:[#allocation2 + $0x8] sm:$0xff]
  %v2952 = vld [vmem:[#allocation2 + $0x10] sm:$0xff]
  %v2953 = vld [vmem:[#allocation2 + $0x18] sm:$0xff]
  %v2954 = vld [vmem:[#allocation2 + $0x20] sm:$0xff]
  %v2955 = vld [vmem:[#allocation2 + $0x28] sm:$0xff]
  %v2956 = vld [vmem:[#allocation2 + $0x30] sm:$0xff]
  %v2957 = vld [vmem:[#allocation2 + $0x38] sm:$0xff]
  %v2958 = vld [vmem:[#allocation2 + $0x40] sm:$0xff]
  %v2959 = vld [vmem:[#allocation2 + $0x48] sm:$0xff]
  %v2960 = vld [vmem:[#allocation2 + $0x50] sm:$0xff]
  %v2961 = vld [vmem:[#allocation2 + $0x58] sm:$0xff]
  %v2962 = vld [vmem:[#allocation2 + $0x60] sm:$0xff]
  %v2963 = vld [vmem:[#allocation2 + $0x68] sm:$0xff]
  %v2964 = vld [vmem:[#allocation2 + $0x70] sm:$0xff]
  %v2965 = vld [vmem:[#allocation2 + $0x78] sm:$0xff]
  %v2966 = vld [vmem:[#allocation2 + $0x80] sm:$0xff]
  %v2967 = vld [vmem:[#allocation2 + $0x88] sm:$0xff]
  %v2968 = vld [vmem:[#allocation2 + $0x90] sm:$0xff]
  %v2969 = vld [vmem:[#allocation2 + $0x98] sm:$0xff]
  %v2970 = vld [vmem:[#allocation2 + $0xa0] sm:$0xff]
  %v2971 = vld [vmem:[#allocation2 + $0xa8] sm:$0xff]
  %v2972 = vld [vmem:[#allocation2 + $0xb0] sm:$0xff]
  %v2973 = vld [vmem:[#allocation2 + $0xb8] sm:$0xff]
  %v2974 = vld [vmem:[#allocation2 + $0xc0] sm:$0xff]
  %v2975 = vld [vmem:[#allocation2 + $0xc8] sm:$0xff]
  %v2976 = vld [vmem:[#allocation2 + $0xd0] sm:$0xff]
  %v2977 = vld [vmem:[#allocation2 + $0xd8] sm:$0xff]
  %v2978 = vld [vmem:[#allocation2 + $0xe0] sm:$0xff]
  %v2979 = vld [vmem:[#allocation2 + $0xe8] sm:$0xff]
  %v2980 = vpack.c.bf16 %v2956, %v2950
  %v2981 = vpack.c.bf16 %v2957, %v2951
  %v2982 = vpack.c.bf16 %v2958, %v2952
  %v2983 = vpack.c.bf16 %v2959, %v2953
  %v2984 = vpack.c.bf16 %v2960, %v2954
  %v2985 = vpack.c.bf16 %v2961, %v2955
  %v2986 = vpack.c.bf16 %v2968, %v2962
  %v2987 = vpack.c.bf16 %v2969, %v2963
  %v2988 = vpack.c.bf16 %v2970, %v2964
  %v2989 = vpack.c.bf16 %v2971, %v2965
  %v2990 = vpack.c.bf16 %v2972, %v2966
  %v2991 = vpack.c.bf16 %v2973, %v2967
  %v2992 = vpack.c.bf16 %v2974, %v2974
  %v2993 = vpack.c.bf16 %v2975, %v2975
  %v2994 = vpack.c.bf16 %v2976, %v2976
  %v2995 = vpack.c.bf16 %v2977, %v2977
  %v2996 = vpack.c.bf16 %v2978, %v2978
  %v2997 = vpack.c.bf16 %v2979, %v2979
  %v2998 = vld [vmem:[%s10] sm:$0xf]
  %v2999 = vld [vmem:[%s10 + $0x4] sm:$0xf]
  %v3000 = vld [vmem:[%s10 + $0x8] sm:$0xf]
  %v3001 = vld [vmem:[%s10 + $0xc] sm:$0xf]
  %v3002 = vld [vmem:[%s10 + $0x10] sm:$0xf]
  %v3003 = vld [vmem:[%s10 + $0x14] sm:$0xf]
  %v3004 = vld [vmem:[%s10 + $0x18] sm:$0xf]
  %v3005 = vld [vmem:[%s10 + $0x1c] sm:$0xf]
  %v3006 = vld [vmem:[%s10 + $0x20] sm:$0xf]
  %v3007 = vld [vmem:[%s10 + $0x24] sm:$0xf]
  %v3008 = vld [vmem:[%s10 + $0x28] sm:$0xf]
  %v3009 = vld [vmem:[%s10 + $0x2c] sm:$0xf]
  %v3010 = vld [vmem:[%s10 + $0x30] sm:$0xf]
  %v3011 = vld [vmem:[%s10 + $0x34] sm:$0xf]
  %v3012 = vld [vmem:[%s10 + $0x38] sm:$0xf]
  %v3013 = vld [vmem:[%s10 + $0x3c] sm:$0xf]
  %v3014 = vld [vmem:[%s10 + $0x40] sm:$0xf]
  %v3015 = vld [vmem:[%s10 + $0x44] sm:$0xf]
  %v3034 = vunpack.c.l.b16 %v2998
  %v3035 = vunpack.c.l.b16 %v2999
  %v3036 = vunpack.c.l.b16 %v3000
  %v3037 = vunpack.c.l.b16 %v3001
  %v3038 = vunpack.c.l.b16 %v3002
  %v3039 = vunpack.c.l.b16 %v3003
  %v3040 = vunpack.c.l.b16 %v3004
  %v3041 = vunpack.c.l.b16 %v3005
  %v3042 = vunpack.c.l.b16 %v3006
  %v3043 = vunpack.c.l.b16 %v3007
  %v3044 = vunpack.c.l.b16 %v3008
  %v3045 = vunpack.c.l.b16 %v3009
  %v3046 = vunpack.c.l.b16 %v3010
  %v3047 = vunpack.c.l.b16 %v3011
  %v3048 = vunpack.c.l.b16 %v3012
  %v3049 = vunpack.c.l.b16 %v3013
  %v3050 = vunpack.c.l.b16 %v3014
  %v3051 = vunpack.c.l.b16 %v3015
  %v3052 = vpack.c.b16 %v3035, %v3034
  %v3053 = vpack.c.b16 %v3037, %v3036
  %v3054 = vpack.c.b16 %v3039, %v3038
  %v3055 = vpack.c.b16 %v3041, %v3040
  %v3056 = vpack.c.b16 %v3043, %v3042
  %v3057 = vpack.c.b16 %v3045, %v3044
  %v3058 = vpack.c.b16 %v3047, %v3046
  %v3059 = vpack.c.b16 %v3049, %v3048
  %v3060 = vpack.c.b16 %v3051, %v3050
  %vm3061 = vcmask 326656
  %v3063 = vsel %vm3061, %v3052, 0
  %v3066 = vsel %vm3061, %v3053, 0
  %v3069 = vsel %vm3061, %v3054, 0
  %v3072 = vsel %vm3061, %v3055, 0
  %v3075 = vsel %vm3061, %v3056, 0
  %v3078 = vsel %vm3061, %v3057, 0
  %v3081 = vsel %vm3061, %v3058, 0
  %v3084 = vsel %vm3061, %v3059, 0
  %v3087 = vsel %vm3061, %v3060, 0
  %v3090 = vsel %vm199, %v2992, 0
  %v3093 = vsel %vm199, %v2993, 0
  %v3096 = vsel %vm199, %v2994, 0
  %v3099 = vsel %vm199, %v2995, 0
  %v3102 = vsel %vm199, %v2996, 0
  %v3105 = vsel %vm199, %v2997, 0
  %3107 = vmatprep.subr.bf16.mxu0 %v2981
  %3108 = vmatpush1.bf16.msra.mxu0 %v2980
  %3109 = vmatprep.subr.bf16.mxu0 %v2987
  %3110 = vmatpush1.bf16.msra.mxu0 %v2986
  %3111 = vmatprep.subr.bf16.mxu0 %v3093
  %3112 = vmatpush1.bf16.msra.mxu0 %v3090
  %3113 = vmatprep.subr.bf16.mxu0 0
  %3114 = vmatpush1.bf16.msra.mxu0 0
  %3115 = vmatprep.subr.bf16.mxu0 0
  %3116 = vmatpush1.bf16.msra.mxu0 0
  %3117 = vmatprep.subr.bf16.mxu0 0
  %3118 = vmatpush1.bf16.msra.mxu0 0
  %3119 = vmatprep.subr.bf16.mxu0 0
  %3120 = vmatpush1.bf16.msra.mxu0 0
  %3121 = vmatprep.subr.bf16.mxu0 0
  %3122 = vmatpush1.bf16.msra.mxu0 0
  %3123 = vmatprep.subr.bf16.mxu0 0
  %3124 = vmatpush1.bf16.msra.mxu0 0
  %3125 = vmatprep.subr.bf16.mxu0 0
  %3126 = vmatpush1.bf16.msra.mxu0 0
  %3127 = vmatprep.subr.bf16.mxu0 0
  %3128 = vmatpush1.bf16.msra.mxu0 0
  %3129 = vmatprep.subr.bf16.mxu0 0
  %3130 = vmatpush1.bf16.msra.mxu0 0
  %3131 = vmatprep.subr.bf16.mxu0 0
  %3132 = vmatpush1.bf16.msra.mxu0 0
  %3133 = vmatprep.subr.bf16.mxu0 0
  %3134 = vmatpush1.bf16.msra.mxu0 0
  %3135 = vmatprep.subr.bf16.mxu0 0
  %3136 = vmatpush1.bf16.msra.mxu0 0
  %3137 = vmatprep.subr.bf16.mxu0 0
  %3138 = vmatpush1.bf16.msra.mxu0 0
  %3139 = vmatprep.mubr.bf16.mxu0 0
  %3140 = vmatmul.mubr.bf16.gmra.mrb[0].mxu0 %v3063
  %v3141 = vpop.f32.mrb[0].mxu0
  %v3142 = vadd.f32 0.0, %v3141
  %v3143 = vpop.f32.mrb[0].mxu0
  %v3144 = vadd.f32 0.0, %v3143
  %v3145 = vpop.f32.mrb[0].mxu0
  %v3146 = vadd.f32 0.0, %v3145
  %v3147 = vpop.f32.mrb[0].mxu0
  %v3148 = vadd.f32 0.0, %v3147
  %3149 = vmatprep.mubr.bf16.mxu0 0
  %3150 = vmatmul.mubr.bf16.gmra.mrb[0].mxu0 %v3066
  %v3151 = vpop.f32.mrb[0].mxu0
  %v3152 = vadd.f32 0.0, %v3151
  %v3153 = vpop.f32.mrb[0].mxu0
  %v3154 = vadd.f32 0.0, %v3153
  %v3155 = vpop.f32.mrb[0].mxu0
  %v3156 = vadd.f32 0.0, %v3155
  %v3157 = vpop.f32.mrb[0].mxu0
  %v3158 = vadd.f32 0.0, %v3157
  %3159 = vmatprep.mubr.bf16.mxu0 0
  %3160 = vmatmul.mubr.bf16.gmra.mrb[0].mxu0 %v3069
  %v3161 = vpop.f32.mrb[0].mxu0
  %v3162 = vadd.f32 0.0, %v3161
  %v3163 = vpop.f32.mrb[0].mxu0
  %v3164 = vadd.f32 0.0, %v3163
  %v3165 = vpop.f32.mrb[0].mxu0
  %v3166 = vadd.f32 0.0, %v3165
  %v3167 = vpop.f32.mrb[0].mxu0
  %v3168 = vadd.f32 0.0, %v3167
  %3169 = vmatprep.mubr.bf16.mxu0 0
  %3170 = vmatmul.mubr.bf16.gmra.mrb[0].mxu0 %v3072
  %v3171 = vpop.f32.mrb[0].mxu0
  %v3172 = vadd.f32 0.0, %v3171
  %v3173 = vpop.f32.mrb[0].mxu0
  %v3174 = vadd.f32 0.0, %v3173
  %v3175 = vpop.f32.mrb[0].mxu0
  %v3176 = vadd.f32 0.0, %v3175
  %v3177 = vpop.f32.mrb[0].mxu0
  %v3178 = vadd.f32 0.0, %v3177
  %3179 = vmatprep.mubr.bf16.mxu0 0
  %3180 = vmatmul.mubr.bf16.gmra.mrb[0].mxu0 %v3075
  %v3181 = vpop.f32.mrb[0].mxu0
  %v3182 = vpop.f32.mrb[0].mxu0
  %v3183 = vadd.f32 0.0, %v3182
  %v3184 = vpop.f32.mrb[0].mxu0
  %v3185 = vpop.f32.mrb[0].mxu0
  %v3186 = vadd.f32 0.0, %v3185
  %3187 = vmatprep.mubr.bf16.mxu0 0
  %3188 = vmatmul.mubr.bf16.gmra.mrb[0].mxu0 %v3078
  %v3189 = vpop.f32.mrb[0].mxu0
  %v3190 = vpop.f32.mrb[0].mxu0
  %v3191 = vadd.f32 0.0, %v3190
  %v3192 = vpop.f32.mrb[0].mxu0
  %v3193 = vpop.f32.mrb[0].mxu0
  %v3194 = vadd.f32 0.0, %v3193
  %3195 = vmatprep.mubr.bf16.mxu0 0
  %3196 = vmatmul.mubr.bf16.gmra.mrb[0].mxu0 %v3081
  %v3197 = vpop.f32.mrb[0].mxu0
  %v3198 = vpop.f32.mrb[0].mxu0
  %v3199 = vadd.f32 0.0, %v3198
  %v3200 = vpop.f32.mrb[0].mxu0
  %v3201 = vpop.f32.mrb[0].mxu0
  %v3202 = vadd.f32 0.0, %v3201
  %3203 = vmatprep.mubr.bf16.mxu0 0
  %3204 = vmatmul.mubr.bf16.gmra.mrb[0].mxu0 %v3084
  %v3205 = vpop.f32.mrb[0].mxu0
  %v3206 = vpop.f32.mrb[0].mxu0
  %v3207 = vadd.f32 0.0, %v3206
  %v3208 = vpop.f32.mrb[0].mxu0
  %v3209 = vpop.f32.mrb[0].mxu0
  %v3210 = vadd.f32 0.0, %v3209
  %3211 = vmatprep.mubr.bf16.mxu0 0
  %3212 = vmatmul.mubr.bf16.gmra.mrb[0].mxu0 %v3087
  %v3213 = vpop.f32.mrb[0].mxu0
  %v3214 = vpop.f32.mrb[0].mxu0
  %v3215 = vadd.f32 0.0, %v3214
  %v3216 = vpop.f32.mrb[0].mxu0
  %v3217 = vpop.f32.mrb[0].mxu0
  %v3218 = vadd.f32 0.0, %v3217
  %3219 = vdwg.mxu0
  %3220 = vmatprep.subr.bf16.mxu0 %v2983
  %3221 = vmatpush1.bf16.msra.mxu0 %v2982
  %3222 = vmatprep.subr.bf16.mxu0 %v2989
  %3223 = vmatpush1.bf16.msra.mxu0 %v2988
  %3224 = vmatprep.subr.bf16.mxu0 %v3099
  %3225 = vmatpush1.bf16.msra.mxu0 %v3096
  %3226 = vmatprep.subr.bf16.mxu0 0
  %3227 = vmatpush1.bf16.msra.mxu0 0
  %3228 = vmatprep.subr.bf16.mxu0 0
  %3229 = vmatpush1.bf16.msra.mxu0 0
  %3230 = vmatprep.subr.bf16.mxu0 0
  %3231 = vmatpush1.bf16.msra.mxu0 0
  %3232 = vmatprep.subr.bf16.mxu0 0
  %3233 = vmatpush1.bf16.msra.mxu0 0
  %3234 = vmatprep.subr.bf16.mxu0 0
  %3235 = vmatpush1.bf16.msra.mxu0 0
  %3236 = vmatprep.subr.bf16.mxu0 0
  %3237 = vmatpush1.bf16.msra.mxu0 0
  %3238 = vmatprep.subr.bf16.mxu0 0
  %3239 = vmatpush1.bf16.msra.mxu0 0
  %3240 = vmatprep.subr.bf16.mxu0 0
  %3241 = vmatpush1.bf16.msra.mxu0 0
  %3242 = vmatprep.subr.bf16.mxu0 0
  %3243 = vmatpush1.bf16.msra.mxu0 0
  %3244 = vmatprep.subr.bf16.mxu0 0
  %3245 = vmatpush1.bf16.msra.mxu0 0
  %3246 = vmatprep.subr.bf16.mxu0 0
  %3247 = vmatpush1.bf16.msra.mxu0 0
  %3248 = vmatprep.subr.bf16.mxu0 0
  %3249 = vmatpush1.bf16.msra.mxu0 0
  %3250 = vmatprep.subr.bf16.mxu0 0
  %3251 = vmatpush1.bf16.msra.mxu0 0
  %3252 = vmatprep.mubr.bf16.mxu0 0
  %3253 = vmatmul.mubr.bf16.gmra.mrb[0].mxu0 %v3063
  %v3254 = vpop.f32.mrb[0].mxu0
  %v3255 = vadd.f32 0.0, %v3254
  %v3256 = vpop.f32.mrb[0].mxu0
  %v3257 = vadd.f32 0.0, %v3256
  %v3258 = vpop.f32.mrb[0].mxu0
  %v3259 = vadd.f32 0.0, %v3258
  %v3260 = vpop.f32.mrb[0].mxu0
  %v3261 = vadd.f32 0.0, %v3260
  %3262 = vmatprep.mubr.bf16.mxu0 0
  %3263 = vmatmul.mubr.bf16.gmra.mrb[0].mxu0 %v3066
  %v3264 = vpop.f32.mrb[0].mxu0
  %v3265 = vadd.f32 0.0, %v3264
  %v3266 = vpop.f32.mrb[0].mxu0
  %v3267 = vadd.f32 0.0, %v3266
  %v3268 = vpop.f32.mrb[0].mxu0
  %v3269 = vadd.f32 0.0, %v3268
  %v3270 = vpop.f32.mrb[0].mxu0
  %v3271 = vadd.f32 0.0, %v3270
  %3272 = vmatprep.mubr.bf16.mxu0 0
  %3273 = vmatmul.mubr.bf16.gmra.mrb[0].mxu0 %v3069
  %v3274 = vpop.f32.mrb[0].mxu0
  %v3275 = vadd.f32 0.0, %v3274
  %v3276 = vpop.f32.mrb[0].mxu0
  %v3277 = vadd.f32 0.0, %v3276
  %v3278 = vpop.f32.mrb[0].mxu0
  %v3279 = vadd.f32 0.0, %v3278
  %v3280 = vpop.f32.mrb[0].mxu0
  %v3281 = vadd.f32 0.0, %v3280
  %3282 = vmatprep.mubr.bf16.mxu0 0
  %3283 = vmatmul.mubr.bf16.gmra.mrb[0].mxu0 %v3072
  %v3284 = vpop.f32.mrb[0].mxu0
  %v3285 = vadd.f32 0.0, %v3284
  %v3286 = vpop.f32.mrb[0].mxu0
  %v3287 = vadd.f32 0.0, %v3286
  %v3288 = vpop.f32.mrb[0].mxu0
  %v3289 = vadd.f32 0.0, %v3288
  %v3290 = vpop.f32.mrb[0].mxu0
  %v3291 = vadd.f32 0.0, %v3290
  %3292 = vmatprep.mubr.bf16.mxu0 0
  %3293 = vmatmul.mubr.bf16.gmra.mrb[0].mxu0 %v3075
  %v3294 = vpop.f32.mrb[0].mxu0
  %v3295 = vadd.f32 0.0, %v3294
  %v3296 = vpop.f32.mrb[0].mxu0
  %v3297 = vadd.f32 0.0, %v3296
  %v3298 = vpop.f32.mrb[0].mxu0
  %v3299 = vadd.f32 0.0, %v3298
  %v3300 = vpop.f32.mrb[0].mxu0
  %v3301 = vadd.f32 0.0, %v3300
  %3302 = vmatprep.mubr.bf16.mxu0 0
  %3303 = vmatmul.mubr.bf16.gmra.mrb[0].mxu0 %v3078
  %v3304 = vpop.f32.mrb[0].mxu0
  %v3305 = vadd.f32 0.0, %v3304
  %v3306 = vpop.f32.mrb[0].mxu0
  %v3307 = vadd.f32 0.0, %v3306
  %v3308 = vpop.f32.mrb[0].mxu0
  %v3309 = vadd.f32 0.0, %v3308
  %v3310 = vpop.f32.mrb[0].mxu0
  %v3311 = vadd.f32 0.0, %v3310
  %3312 = vmatprep.mubr.bf16.mxu0 0
  %3313 = vmatmul.mubr.bf16.gmra.mrb[0].mxu0 %v3081
  %v3314 = vpop.f32.mrb[0].mxu0
  %v3315 = vadd.f32 0.0, %v3314
  %v3316 = vpop.f32.mrb[0].mxu0
  %v3317 = vadd.f32 0.0, %v3316
  %v3318 = vpop.f32.mrb[0].mxu0
  %v3319 = vadd.f32 0.0, %v3318
  %v3320 = vpop.f32.mrb[0].mxu0
  %v3321 = vadd.f32 0.0, %v3320
  %3322 = vmatprep.mubr.bf16.mxu0 0
  %3323 = vmatmul.mubr.bf16.gmra.mrb[0].mxu0 %v3084
  %v3324 = vpop.f32.mrb[0].mxu0
  %v3325 = vadd.f32 0.0, %v3324
  %v3326 = vpop.f32.mrb[0].mxu0
  %v3327 = vadd.f32 0.0, %v3326
  %v3328 = vpop.f32.mrb[0].mxu0
  %v3329 = vadd.f32 0.0, %v3328
  %v3330 = vpop.f32.mrb[0].mxu0
  %v3331 = vadd.f32 0.0, %v3330
  %3332 = vmatprep.mubr.bf16.mxu0 0
  %3333 = vmatmul.mubr.bf16.gmra.mrb[0].mxu0 %v3087
  %v3334 = vpop.f32.mrb[0].mxu0
  %v3335 = vadd.f32 0.0, %v3334
  %v3336 = vpop.f32.mrb[0].mxu0
  %v3337 = vadd.f32 0.0, %v3336
  %v3338 = vpop.f32.mrb[0].mxu0
  %v3339 = vadd.f32 0.0, %v3338
  %v3340 = vpop.f32.mrb[0].mxu0
  %v3341 = vadd.f32 0.0, %v3340
  %3342 = vdwg.mxu0
  %3343 = vmatprep.subr.bf16.mxu0 %v2985
  %3344 = vmatpush1.bf16.msra.mxu0 %v2984
  %3345 = vmatprep.subr.bf16.mxu0 %v2991
  %3346 = vmatpush1.bf16.msra.mxu0 %v2990
  %3347 = vmatprep.subr.bf16.mxu0 %v3105
  %3348 = vmatpush1.bf16.msra.mxu0 %v3102
  %3349 = vmatprep.subr.bf16.mxu0 0
  %3350 = vmatpush1.bf16.msra.mxu0 0
  %3351 = vmatprep.subr.bf16.mxu0 0
  %3352 = vmatpush1.bf16.msra.mxu0 0
  %3353 = vmatprep.subr.bf16.mxu0 0
  %3354 = vmatpush1.bf16.msra.mxu0 0
  %3355 = vmatprep.subr.bf16.mxu0 0
  %3356 = vmatpush1.bf16.msra.mxu0 0
  %3357 = vmatprep.subr.bf16.mxu0 0
  %3358 = vmatpush1.bf16.msra.mxu0 0
  %3359 = vmatprep.subr.bf16.mxu0 0
  %3360 = vmatpush1.bf16.msra.mxu0 0
  %3361 = vmatprep.subr.bf16.mxu0 0
  %3362 = vmatpush1.bf16.msra.mxu0 0
  %3363 = vmatprep.subr.bf16.mxu0 0
  %3364 = vmatpush1.bf16.msra.mxu0 0
  %3365 = vmatprep.subr.bf16.mxu0 0
  %3366 = vmatpush1.bf16.msra.mxu0 0
  %3367 = vmatprep.subr.bf16.mxu0 0
  %3368 = vmatpush1.bf16.msra.mxu0 0
  %3369 = vmatprep.subr.bf16.mxu0 0
  %3370 = vmatpush1.bf16.msra.mxu0 0
  %3371 = vmatprep.subr.bf16.mxu0 0
  %3372 = vmatpush1.bf16.msra.mxu0 0
  %3373 = vmatprep.subr.bf16.mxu0 0
  %3374 = vmatpush1.bf16.msra.mxu0 0
  %3375 = vmatprep.mubr.bf16.mxu0 0
  %3376 = vmatmul.mubr.bf16.gmra.mrb[0].mxu0 %v3063
  %v3377 = vpop.f32.mrb[0].mxu0
  %v3378 = vadd.f32 0.0, %v3377
  %v3379 = vpop.f32.mrb[0].mxu0
  %v3380 = vpop.f32.mrb[0].mxu0
  %v3381 = vadd.f32 0.0, %v3380
  %v3382 = vpop.f32.mrb[0].mxu0
  %3383 = vmatprep.mubr.bf16.mxu0 0
  %3384 = vmatmul.mubr.bf16.gmra.mrb[0].mxu0 %v3066
  %v3385 = vpop.f32.mrb[0].mxu0
  %v3386 = vadd.f32 0.0, %v3385
  %v3387 = vpop.f32.mrb[0].mxu0
  %v3388 = vpop.f32.mrb[0].mxu0
  %v3389 = vadd.f32 0.0, %v3388
  %v3390 = vpop.f32.mrb[0].mxu0
  %3391 = vmatprep.mubr.bf16.mxu0 0
  %3392 = vmatmul.mubr.bf16.gmra.mrb[0].mxu0 %v3069
  %v3393 = vpop.f32.mrb[0].mxu0
  %v3394 = vadd.f32 0.0, %v3393
  %v3395 = vpop.f32.mrb[0].mxu0
  %v3396 = vpop.f32.mrb[0].mxu0
  %v3397 = vadd.f32 0.0, %v3396
  %v3398 = vpop.f32.mrb[0].mxu0
  %3399 = vmatprep.mubr.bf16.mxu0 0
  %3400 = vmatmul.mubr.bf16.gmra.mrb[0].mxu0 %v3072
  %v3401 = vpop.f32.mrb[0].mxu0
  %v3402 = vadd.f32 0.0, %v3401
  %v3403 = vpop.f32.mrb[0].mxu0
  %v3404 = vpop.f32.mrb[0].mxu0
  %v3405 = vadd.f32 0.0, %v3404
  %v3406 = vpop.f32.mrb[0].mxu0
  %3407 = vmatprep.mubr.bf16.mxu0 0
  %3408 = vmatmul.mubr.bf16.gmra.mrb[0].mxu0 %v3075
  %v3409 = vpop.f32.mrb[0].mxu0
  %v3410 = vadd.f32 0.0, %v3409
  %v3411 = vpop.f32.mrb[0].mxu0
  %v3412 = vpop.f32.mrb[0].mxu0
  %v3413 = vadd.f32 0.0, %v3412
  %v3414 = vpop.f32.mrb[0].mxu0
  %3415 = vmatprep.mubr.bf16.mxu0 0
  %3416 = vmatmul.mubr.bf16.gmra.mrb[0].mxu0 %v3078
  %v3417 = vpop.f32.mrb[0].mxu0
  %v3418 = vadd.f32 0.0, %v3417
  %v3419 = vpop.f32.mrb[0].mxu0
  %v3420 = vadd.f32 0.0, %v3419
  %v3421 = vpop.f32.mrb[0].mxu0
  %v3422 = vadd.f32 0.0, %v3421
  %v3423 = vpop.f32.mrb[0].mxu0
  %v3424 = vadd.f32 0.0, %v3423
  %3425 = vmatprep.mubr.bf16.mxu0 0
  %3426 = vmatmul.mubr.bf16.gmra.mrb[0].mxu0 %v3081
  %v3427 = vpop.f32.mrb[0].mxu0
  %v3428 = vadd.f32 0.0, %v3427
  %v3429 = vpop.f32.mrb[0].mxu0
  %v3430 = vadd.f32 0.0, %v3429
  %v3431 = vpop.f32.mrb[0].mxu0
  %v3432 = vadd.f32 0.0, %v3431
  %v3433 = vpop.f32.mrb[0].mxu0
  %v3434 = vadd.f32 0.0, %v3433
  %3435 = vmatprep.mubr.bf16.mxu0 0
  %3436 = vmatmul.mubr.bf16.gmra.mrb[0].mxu0 %v3084
  %v3437 = vpop.f32.mrb[0].mxu0
  %v3438 = vadd.f32 0.0, %v3437
  %v3439 = vpop.f32.mrb[0].mxu0
  %v3440 = vadd.f32 0.0, %v3439
  %v3441 = vpop.f32.mrb[0].mxu0
  %v3442 = vadd.f32 0.0, %v3441
  %v3443 = vpop.f32.mrb[0].mxu0
  %v3444 = vadd.f32 0.0, %v3443
  %3445 = vmatprep.mubr.bf16.mxu0 0
  %3446 = vmatmul.mubr.bf16.gmra.mrb[0].mxu0 %v3087
  %v3447 = vpop.f32.mrb[0].mxu0
  %v3448 = vadd.f32 0.0, %v3447
  %v3449 = vpop.f32.mrb[0].mxu0
  %v3450 = vadd.f32 0.0, %v3449
  %v3451 = vpop.f32.mrb[0].mxu0
  %v3452 = vadd.f32 0.0, %v3451
  %v3453 = vpop.f32.mrb[0].mxu0
  %v3454 = vadd.f32 0.0, %v3453
  %3455 = vdwg.mxu0
  %v3456 = vld [vmem:[%s1] ss:$8 sm:$0xf]
  %v3458 = vlaneseq
  %v3459 = vshrl.u32 %v3458, 7
  %v3460 = vsub.s32 0, %v3459
  %v3461 = vrot.slane %v3456, %v3460
  %v3462 = vlaneseq
  %v3463 = vshrl.u32 %v3462, 7
  %v3464 = vsub.s32 1, %v3463
  %v3465 = vrot.slane %v3456, %v3464
  %v3466 = vlaneseq
  %v3467 = vshrl.u32 %v3466, 7
  %v3468 = vsub.s32 2, %v3467
  %v3469 = vrot.slane %v3456, %v3468
  %v3470 = vlaneseq
  %v3471 = vshrl.u32 %v3470, 7
  %v3472 = vsub.s32 3, %v3471
  %v3473 = vrot.slane %v3456, %v3472
  %3474 = vrot.lane.b32.xlu0 %v3461, 111
  %v3475 = vpop.permute.xlu0 %3474
  %3476 = vrot.lane.b32.xlu0 %v3465, 111
  %v3477 = vpop.permute.xlu0 %3476
  %3478 = vrot.lane.b32.xlu0 %v3469, 111
  %v3479 = vpop.permute.xlu0 %3478
  %3480 = vrot.lane.b32.xlu0 %v3473, 111
  %v3481 = vpop.permute.xlu0 %3480
  %v3482 = vsel %vm593, %v3475, %v3477
  %v3483 = vsel %vm593, %v3477, %v3479
  %v3484 = vsel %vm593, %v3479, %v3481
  %v3490 = vmul.f32 %v3142, %v3475
  %v3491 = vmul.f32 %v3144, %v3482
  %v3492 = vmul.f32 %v3255, %v3483
  %v3493 = vmul.f32 %v3257, %v3484
  %v3494 = vmul.f32 %v3378, %v3481
  %v3495 = vmul.f32 %v3146, %v3475
  %v3496 = vmul.f32 %v3148, %v3482
  %v3497 = vmul.f32 %v3259, %v3483
  %v3498 = vmul.f32 %v3261, %v3484
  %v3499 = vmul.f32 %v3381, %v3481
  %3510 = vrot.lane.b32.xlu0 %v3490, 17
  %v3511 = vpop.permute.xlu0 %3510
  %3512 = vrot.lane.b32.xlu0 %v3491, 17
  %v3513 = vpop.permute.xlu0 %3512
  %3514 = vrot.lane.b32.xlu0 %v3492, 17
  %v3515 = vpop.permute.xlu0 %3514
  %3516 = vrot.lane.b32.xlu0 %v3493, 17
  %v3517 = vpop.permute.xlu0 %3516
  %3518 = vrot.lane.b32.xlu0 %v3494, 17
  %v3519 = vpop.permute.xlu0 %3518
  %3520 = vrot.lane.b32.xlu0 %v3495, 17
  %v3521 = vpop.permute.xlu0 %3520
  %3522 = vrot.lane.b32.xlu0 %v3496, 17
  %v3523 = vpop.permute.xlu0 %3522
  %3524 = vrot.lane.b32.xlu0 %v3497, 17
  %v3525 = vpop.permute.xlu0 %3524
  %3526 = vrot.lane.b32.xlu0 %v3498, 17
  %v3527 = vpop.permute.xlu0 %3526
  %3528 = vrot.lane.b32.xlu0 %v3499, 17
  %v3529 = vpop.permute.xlu0 %3528
  %v3530 = vsel %vm642, %v3511, %v3513
  %v3531 = vsel %vm642, %v3513, %v3515
  %v3532 = vsel %vm642, %v3515, %v3517
  %v3533 = vsel %vm642, %v3517, %v3519
  %v3534 = vsel %vm642, %v3521, %v3523
  %v3535 = vsel %vm642, %v3523, %v3525
  %v3536 = vsel %vm642, %v3525, %v3527
  %v3537 = vsel %vm642, %v3527, %v3529
  %v3546 = vadd.f32 %v3183, %v3530
  %v3547 = vadd.f32 %v3295, %v3531
  %v3548 = vadd.f32 %v3297, %v3532
  %v3549 = vadd.f32 %v3410, %v3533
  %v3550 = vadd.f32 %v3186, %v3534
  %v3551 = vadd.f32 %v3299, %v3535
  %v3552 = vadd.f32 %v3301, %v3536
  %v3553 = vadd.f32 %v3413, %v3537
  %v3554 = vld [vmem:[%s667] ss:$8 sm:$0xf]
  %v3556 = vlaneseq
  %v3557 = vshrl.u32 %v3556, 7
  %v3558 = vsub.s32 0, %v3557
  %v3559 = vrot.slane %v3554, %v3558
  %v3560 = vlaneseq
  %v3561 = vshrl.u32 %v3560, 7
  %v3562 = vsub.s32 1, %v3561
  %v3563 = vrot.slane %v3554, %v3562
  %v3564 = vlaneseq
  %v3565 = vshrl.u32 %v3564, 7
  %v3566 = vsub.s32 2, %v3565
  %v3567 = vrot.slane %v3554, %v3566
  %v3568 = vlaneseq
  %v3569 = vshrl.u32 %v3568, 7
  %v3570 = vsub.s32 3, %v3569
  %v3571 = vrot.slane %v3554, %v3570
  %3572 = vrot.lane.b32.xlu0 %v3559, 112
  %v3573 = vpop.permute.xlu0 %3572
  %3574 = vrot.lane.b32.xlu0 %v3563, 112
  %v3575 = vpop.permute.xlu0 %3574
  %3576 = vrot.lane.b32.xlu0 %v3567, 112
  %v3577 = vpop.permute.xlu0 %3576
  %3578 = vrot.lane.b32.xlu0 %v3571, 112
  %v3579 = vpop.permute.xlu0 %3578
  %v3580 = vsel %vm694, %v3573, %v3575
  %v3581 = vsel %vm694, %v3575, %v3577
  %v3582 = vsel %vm694, %v3577, %v3579
  %v3588 = vmul.f32 %v3152, %v3573
  %v3589 = vmul.f32 %v3154, %v3580
  %v3590 = vmul.f32 %v3265, %v3581
  %v3591 = vmul.f32 %v3267, %v3582
  %v3592 = vmul.f32 %v3386, %v3579
  %v3593 = vmul.f32 %v3156, %v3573
  %v3594 = vmul.f32 %v3158, %v3580
  %v3595 = vmul.f32 %v3269, %v3581
  %v3596 = vmul.f32 %v3271, %v3582
  %v3597 = vmul.f32 %v3389, %v3579
  %3608 = vrot.lane.b32.xlu0 %v3588, 16
  %v3609 = vpop.permute.xlu0 %3608
  %3610 = vrot.lane.b32.xlu0 %v3589, 16
  %v3611 = vpop.permute.xlu0 %3610
  %3612 = vrot.lane.b32.xlu0 %v3590, 16
  %v3613 = vpop.permute.xlu0 %3612
  %3614 = vrot.lane.b32.xlu0 %v3591, 16
  %v3615 = vpop.permute.xlu0 %3614
  %3616 = vrot.lane.b32.xlu0 %v3592, 16
  %v3617 = vpop.permute.xlu0 %3616
  %3618 = vrot.lane.b32.xlu0 %v3593, 16
  %v3619 = vpop.permute.xlu0 %3618
  %3620 = vrot.lane.b32.xlu0 %v3594, 16
  %v3621 = vpop.permute.xlu0 %3620
  %3622 = vrot.lane.b32.xlu0 %v3595, 16
  %v3623 = vpop.permute.xlu0 %3622
  %3624 = vrot.lane.b32.xlu0 %v3596, 16
  %v3625 = vpop.permute.xlu0 %3624
  %3626 = vrot.lane.b32.xlu0 %v3597, 16
  %v3627 = vpop.permute.xlu0 %3626
  %v3628 = vsel %vm743, %v3609, %v3611
  %v3629 = vsel %vm743, %v3611, %v3613
  %v3630 = vsel %vm743, %v3613, %v3615
  %v3631 = vsel %vm743, %v3615, %v3617
  %v3632 = vsel %vm743, %v3619, %v3621
  %v3633 = vsel %vm743, %v3621, %v3623
  %v3634 = vsel %vm743, %v3623, %v3625
  %v3635 = vsel %vm743, %v3625, %v3627
  %v3644 = vadd.f32 %v3546, %v3628
  %v3645 = vadd.f32 %v3547, %v3629
  %v3646 = vadd.f32 %v3548, %v3630
  %v3647 = vadd.f32 %v3549, %v3631
  %v3648 = vadd.f32 %v3550, %v3632
  %v3649 = vadd.f32 %v3551, %v3633
  %v3650 = vadd.f32 %v3552, %v3634
  %v3651 = vadd.f32 %v3553, %v3635
  %v3652 = vld [vmem:[%s768] ss:$8 sm:$0xf]
  %v3654 = vlaneseq
  %v3655 = vshrl.u32 %v3654, 7
  %v3656 = vsub.s32 0, %v3655
  %v3657 = vrot.slane %v3652, %v3656
  %v3658 = vlaneseq
  %v3659 = vshrl.u32 %v3658, 7
  %v3660 = vsub.s32 1, %v3659
  %v3661 = vrot.slane %v3652, %v3660
  %v3662 = vlaneseq
  %v3663 = vshrl.u32 %v3662, 7
  %v3664 = vsub.s32 2, %v3663
  %v3665 = vrot.slane %v3652, %v3664
  %v3666 = vlaneseq
  %v3667 = vshrl.u32 %v3666, 7
  %v3668 = vsub.s32 3, %v3667
  %v3669 = vrot.slane %v3652, %v3668
  %3670 = vrot.lane.b32.xlu0 %v3657, 113
  %v3671 = vpop.permute.xlu0 %3670
  %3672 = vrot.lane.b32.xlu0 %v3661, 113
  %v3673 = vpop.permute.xlu0 %3672
  %3674 = vrot.lane.b32.xlu0 %v3665, 113
  %v3675 = vpop.permute.xlu0 %3674
  %3676 = vrot.lane.b32.xlu0 %v3669, 113
  %v3677 = vpop.permute.xlu0 %3676
  %v3678 = vsel %vm795, %v3671, %v3673
  %v3679 = vsel %vm795, %v3673, %v3675
  %v3680 = vsel %vm795, %v3675, %v3677
  %v3686 = vmul.f32 %v3162, %v3671
  %v3687 = vmul.f32 %v3164, %v3678
  %v3688 = vmul.f32 %v3275, %v3679
  %v3689 = vmul.f32 %v3277, %v3680
  %v3690 = vmul.f32 %v3394, %v3677
  %v3691 = vmul.f32 %v3166, %v3671
  %v3692 = vmul.f32 %v3168, %v3678
  %v3693 = vmul.f32 %v3279, %v3679
  %v3694 = vmul.f32 %v3281, %v3680
  %v3695 = vmul.f32 %v3397, %v3677
  %3706 = vrot.lane.b32.xlu0 %v3686, 15
  %v3707 = vpop.permute.xlu0 %3706
  %3708 = vrot.lane.b32.xlu0 %v3687, 15
  %v3709 = vpop.permute.xlu0 %3708
  %3710 = vrot.lane.b32.xlu0 %v3688, 15
  %v3711 = vpop.permute.xlu0 %3710
  %3712 = vrot.lane.b32.xlu0 %v3689, 15
  %v3713 = vpop.permute.xlu0 %3712
  %3714 = vrot.lane.b32.xlu0 %v3690, 15
  %v3715 = vpop.permute.xlu0 %3714
  %3716 = vrot.lane.b32.xlu0 %v3691, 15
  %v3717 = vpop.permute.xlu0 %3716
  %3718 = vrot.lane.b32.xlu0 %v3692, 15
  %v3719 = vpop.permute.xlu0 %3718
  %3720 = vrot.lane.b32.xlu0 %v3693, 15
  %v3721 = vpop.permute.xlu0 %3720
  %3722 = vrot.lane.b32.xlu0 %v3694, 15
  %v3723 = vpop.permute.xlu0 %3722
  %3724 = vrot.lane.b32.xlu0 %v3695, 15
  %v3725 = vpop.permute.xlu0 %3724
  %v3726 = vsel %vm844, %v3707, %v3709
  %v3727 = vsel %vm844, %v3709, %v3711
  %v3728 = vsel %vm844, %v3711, %v3713
  %v3729 = vsel %vm844, %v3713, %v3715
  %v3730 = vsel %vm844, %v3717, %v3719
  %v3731 = vsel %vm844, %v3719, %v3721
  %v3732 = vsel %vm844, %v3721, %v3723
  %v3733 = vsel %vm844, %v3723, %v3725
  %v3742 = vadd.f32 %v3644, %v3726
  %v3743 = vadd.f32 %v3645, %v3727
  %v3744 = vadd.f32 %v3646, %v3728
  %v3745 = vadd.f32 %v3647, %v3729
  %v3746 = vadd.f32 %v3648, %v3730
  %v3747 = vadd.f32 %v3649, %v3731
  %v3748 = vadd.f32 %v3650, %v3732
  %v3749 = vadd.f32 %v3651, %v3733
  %v3750 = vld [vmem:[%s869] ss:$8 sm:$0xf]
  %v3752 = vlaneseq
  %v3753 = vshrl.u32 %v3752, 7
  %v3754 = vsub.s32 0, %v3753
  %v3755 = vrot.slane %v3750, %v3754
  %v3756 = vlaneseq
  %v3757 = vshrl.u32 %v3756, 7
  %v3758 = vsub.s32 1, %v3757
  %v3759 = vrot.slane %v3750, %v3758
  %v3760 = vlaneseq
  %v3761 = vshrl.u32 %v3760, 7
  %v3762 = vsub.s32 2, %v3761
  %v3763 = vrot.slane %v3750, %v3762
  %v3764 = vlaneseq
  %v3765 = vshrl.u32 %v3764, 7
  %v3766 = vsub.s32 3, %v3765
  %v3767 = vrot.slane %v3750, %v3766
  %3768 = vrot.lane.b32.xlu0 %v3755, 127
  %v3769 = vpop.permute.xlu0 %3768
  %3770 = vrot.lane.b32.xlu0 %v3759, 127
  %v3771 = vpop.permute.xlu0 %3770
  %3772 = vrot.lane.b32.xlu0 %v3763, 127
  %v3773 = vpop.permute.xlu0 %3772
  %3774 = vrot.lane.b32.xlu0 %v3767, 127
  %v3775 = vpop.permute.xlu0 %3774
  %v3776 = vsel %vm896, %v3769, %v3771
  %v3777 = vsel %vm896, %v3771, %v3773
  %v3778 = vsel %vm896, %v3773, %v3775
  %v3784 = vmul.f32 %v3172, %v3769
  %v3785 = vmul.f32 %v3174, %v3776
  %v3786 = vmul.f32 %v3285, %v3777
  %v3787 = vmul.f32 %v3287, %v3778
  %v3788 = vmul.f32 %v3402, %v3775
  %v3789 = vmul.f32 %v3176, %v3769
  %v3790 = vmul.f32 %v3178, %v3776
  %v3791 = vmul.f32 %v3289, %v3777
  %v3792 = vmul.f32 %v3291, %v3778
  %v3793 = vmul.f32 %v3405, %v3775
  %3804 = vrot.lane.b32.xlu0 %v3784, 1
  %v3805 = vpop.permute.xlu0 %3804
  %3806 = vrot.lane.b32.xlu0 %v3785, 1
  %v3807 = vpop.permute.xlu0 %3806
  %3808 = vrot.lane.b32.xlu0 %v3786, 1
  %v3809 = vpop.permute.xlu0 %3808
  %3810 = vrot.lane.b32.xlu0 %v3787, 1
  %v3811 = vpop.permute.xlu0 %3810
  %3812 = vrot.lane.b32.xlu0 %v3788, 1
  %v3813 = vpop.permute.xlu0 %3812
  %3814 = vrot.lane.b32.xlu0 %v3789, 1
  %v3815 = vpop.permute.xlu0 %3814
  %3816 = vrot.lane.b32.xlu0 %v3790, 1
  %v3817 = vpop.permute.xlu0 %3816
  %3818 = vrot.lane.b32.xlu0 %v3791, 1
  %v3819 = vpop.permute.xlu0 %3818
  %3820 = vrot.lane.b32.xlu0 %v3792, 1
  %v3821 = vpop.permute.xlu0 %3820
  %3822 = vrot.lane.b32.xlu0 %v3793, 1
  %v3823 = vpop.permute.xlu0 %3822
  %v3824 = vsel %vm945, %v3805, %v3807
  %v3825 = vsel %vm945, %v3807, %v3809
  %v3826 = vsel %vm945, %v3809, %v3811
  %v3827 = vsel %vm945, %v3811, %v3813
  %v3828 = vsel %vm945, %v3815, %v3817
  %v3829 = vsel %vm945, %v3817, %v3819
  %v3830 = vsel %vm945, %v3819, %v3821
  %v3831 = vsel %vm945, %v3821, %v3823
  %v3840 = vadd.f32 %v3742, %v3824
  %v3841 = vadd.f32 %v3743, %v3825
  %v3842 = vadd.f32 %v3744, %v3826
  %v3843 = vadd.f32 %v3745, %v3827
  %v3844 = vadd.f32 %v3746, %v3828
  %v3845 = vadd.f32 %v3747, %v3829
  %v3846 = vadd.f32 %v3748, %v3830
  %v3847 = vadd.f32 %v3749, %v3831
  %v3848 = vld [vmem:[%s970] ss:$8 sm:$0xf]
  %v3850 = vlaneseq
  %v3851 = vshrl.u32 %v3850, 7
  %v3852 = vsub.s32 0, %v3851
  %v3853 = vrot.slane %v3848, %v3852
  %v3854 = vlaneseq
  %v3855 = vshrl.u32 %v3854, 7
  %v3856 = vsub.s32 1, %v3855
  %v3857 = vrot.slane %v3848, %v3856
  %v3858 = vlaneseq
  %v3859 = vshrl.u32 %v3858, 7
  %v3860 = vsub.s32 2, %v3859
  %v3861 = vrot.slane %v3848, %v3860
  %v3862 = vlaneseq
  %v3863 = vshrl.u32 %v3862, 7
  %v3864 = vsub.s32 3, %v3863
  %v3865 = vrot.slane %v3848, %v3864
  %3866 = vrot.lane.b32.xlu0 %v3853, 1
  %v3867 = vpop.permute.xlu0 %3866
  %3868 = vrot.lane.b32.xlu0 %v3857, 1
  %v3869 = vpop.permute.xlu0 %3868
  %3870 = vrot.lane.b32.xlu0 %v3861, 1
  %v3871 = vpop.permute.xlu0 %3870
  %3872 = vrot.lane.b32.xlu0 %v3865, 1
  %v3873 = vpop.permute.xlu0 %3872
  %v3874 = vsel %vm945, %v3867, %v3869
  %v3875 = vsel %vm945, %v3869, %v3871
  %v3876 = vsel %vm945, %v3871, %v3873
  %v3882 = vmul.f32 %v3191, %v3867
  %v3883 = vmul.f32 %v3305, %v3874
  %v3884 = vmul.f32 %v3307, %v3875
  %v3885 = vmul.f32 %v3418, %v3876
  %v3886 = vmul.f32 %v3420, %v3873
  %v3887 = vmul.f32 %v3194, %v3867
  %v3888 = vmul.f32 %v3309, %v3874
  %v3889 = vmul.f32 %v3311, %v3875
  %v3890 = vmul.f32 %v3422, %v3876
  %v3891 = vmul.f32 %v3424, %v3873
  %3902 = vrot.lane.b32.xlu0 %v3882, 127
  %v3903 = vpop.permute.xlu0 %3902
  %3904 = vrot.lane.b32.xlu0 %v3883, 127
  %v3905 = vpop.permute.xlu0 %3904
  %3906 = vrot.lane.b32.xlu0 %v3884, 127
  %v3907 = vpop.permute.xlu0 %3906
  %3908 = vrot.lane.b32.xlu0 %v3885, 127
  %v3909 = vpop.permute.xlu0 %3908
  %3910 = vrot.lane.b32.xlu0 %v3886, 127
  %v3911 = vpop.permute.xlu0 %3910
  %3912 = vrot.lane.b32.xlu0 %v3887, 127
  %v3913 = vpop.permute.xlu0 %3912
  %3914 = vrot.lane.b32.xlu0 %v3888, 127
  %v3915 = vpop.permute.xlu0 %3914
  %3916 = vrot.lane.b32.xlu0 %v3889, 127
  %v3917 = vpop.permute.xlu0 %3916
  %3918 = vrot.lane.b32.xlu0 %v3890, 127
  %v3919 = vpop.permute.xlu0 %3918
  %3920 = vrot.lane.b32.xlu0 %v3891, 127
  %v3921 = vpop.permute.xlu0 %3920
  %v3922 = vsel %vm896, %v3903, %v3905
  %v3923 = vsel %vm896, %v3905, %v3907
  %v3924 = vsel %vm896, %v3907, %v3909
  %v3925 = vsel %vm896, %v3909, %v3911
  %v3926 = vsel %vm896, %v3913, %v3915
  %v3927 = vsel %vm896, %v3915, %v3917
  %v3928 = vsel %vm896, %v3917, %v3919
  %v3929 = vsel %vm896, %v3919, %v3921
  %v3938 = vadd.f32 %v3840, %v3922
  %v3939 = vadd.f32 %v3841, %v3923
  %v3940 = vadd.f32 %v3842, %v3924
  %v3941 = vadd.f32 %v3843, %v3925
  %v3942 = vadd.f32 %v3844, %v3926
  %v3943 = vadd.f32 %v3845, %v3927
  %v3944 = vadd.f32 %v3846, %v3928
  %v3945 = vadd.f32 %v3847, %v3929
  %v3946 = vld [vmem:[%s1069] ss:$8 sm:$0xf]
  %v3948 = vlaneseq
  %v3949 = vshrl.u32 %v3948, 7
  %v3950 = vsub.s32 0, %v3949
  %v3951 = vrot.slane %v3946, %v3950
  %v3952 = vlaneseq
  %v3953 = vshrl.u32 %v3952, 7
  %v3954 = vsub.s32 1, %v3953
  %v3955 = vrot.slane %v3946, %v3954
  %v3956 = vlaneseq
  %v3957 = vshrl.u32 %v3956, 7
  %v3958 = vsub.s32 2, %v3957
  %v3959 = vrot.slane %v3946, %v3958
  %v3960 = vlaneseq
  %v3961 = vshrl.u32 %v3960, 7
  %v3962 = vsub.s32 3, %v3961
  %v3963 = vrot.slane %v3946, %v3962
  %3964 = vrot.lane.b32.xlu0 %v3951, 15
  %v3965 = vpop.permute.xlu0 %3964
  %3966 = vrot.lane.b32.xlu0 %v3955, 15
  %v3967 = vpop.permute.xlu0 %3966
  %3968 = vrot.lane.b32.xlu0 %v3959, 15
  %v3969 = vpop.permute.xlu0 %3968
  %3970 = vrot.lane.b32.xlu0 %v3963, 15
  %v3971 = vpop.permute.xlu0 %3970
  %v3972 = vsel %vm844, %v3965, %v3967
  %v3973 = vsel %vm844, %v3967, %v3969
  %v3974 = vsel %vm844, %v3969, %v3971
  %v3980 = vmul.f32 %v3199, %v3965
  %v3981 = vmul.f32 %v3315, %v3972
  %v3982 = vmul.f32 %v3317, %v3973
  %v3983 = vmul.f32 %v3428, %v3974
  %v3984 = vmul.f32 %v3430, %v3971
  %v3985 = vmul.f32 %v3202, %v3965
  %v3986 = vmul.f32 %v3319, %v3972
  %v3987 = vmul.f32 %v3321, %v3973
  %v3988 = vmul.f32 %v3432, %v3974
  %v3989 = vmul.f32 %v3434, %v3971
  %4000 = vrot.lane.b32.xlu0 %v3980, 113
  %v4001 = vpop.permute.xlu0 %4000
  %4002 = vrot.lane.b32.xlu0 %v3981, 113
  %v4003 = vpop.permute.xlu0 %4002
  %4004 = vrot.lane.b32.xlu0 %v3982, 113
  %v4005 = vpop.permute.xlu0 %4004
  %4006 = vrot.lane.b32.xlu0 %v3983, 113
  %v4007 = vpop.permute.xlu0 %4006
  %4008 = vrot.lane.b32.xlu0 %v3984, 113
  %v4009 = vpop.permute.xlu0 %4008
  %4010 = vrot.lane.b32.xlu0 %v3985, 113
  %v4011 = vpop.permute.xlu0 %4010
  %4012 = vrot.lane.b32.xlu0 %v3986, 113
  %v4013 = vpop.permute.xlu0 %4012
  %4014 = vrot.lane.b32.xlu0 %v3987, 113
  %v4015 = vpop.permute.xlu0 %4014
  %4016 = vrot.lane.b32.xlu0 %v3988, 113
  %v4017 = vpop.permute.xlu0 %4016
  %4018 = vrot.lane.b32.xlu0 %v3989, 113
  %v4019 = vpop.permute.xlu0 %4018
  %v4020 = vsel %vm795, %v4001, %v4003
  %v4021 = vsel %vm795, %v4003, %v4005
  %v4022 = vsel %vm795, %v4005, %v4007
  %v4023 = vsel %vm795, %v4007, %v4009
  %v4024 = vsel %vm795, %v4011, %v4013
  %v4025 = vsel %vm795, %v4013, %v4015
  %v4026 = vsel %vm795, %v4015, %v4017
  %v4027 = vsel %vm795, %v4017, %v4019
  %v4036 = vadd.f32 %v3938, %v4020
  %v4037 = vadd.f32 %v3939, %v4021
  %v4038 = vadd.f32 %v3940, %v4022
  %v4039 = vadd.f32 %v3941, %v4023
  %v4040 = vadd.f32 %v3942, %v4024
  %v4041 = vadd.f32 %v3943, %v4025
  %v4042 = vadd.f32 %v3944, %v4026
  %v4043 = vadd.f32 %v3945, %v4027
  %v4044 = vld [vmem:[%s1168] ss:$8 sm:$0xf]
  %v4046 = vlaneseq
  %v4047 = vshrl.u32 %v4046, 7
  %v4048 = vsub.s32 0, %v4047
  %v4049 = vrot.slane %v4044, %v4048
  %v4050 = vlaneseq
  %v4051 = vshrl.u32 %v4050, 7
  %v4052 = vsub.s32 1, %v4051
  %v4053 = vrot.slane %v4044, %v4052
  %v4054 = vlaneseq
  %v4055 = vshrl.u32 %v4054, 7
  %v4056 = vsub.s32 2, %v4055
  %v4057 = vrot.slane %v4044, %v4056
  %v4058 = vlaneseq
  %v4059 = vshrl.u32 %v4058, 7
  %v4060 = vsub.s32 3, %v4059
  %v4061 = vrot.slane %v4044, %v4060
  %4062 = vrot.lane.b32.xlu0 %v4049, 16
  %v4063 = vpop.permute.xlu0 %4062
  %4064 = vrot.lane.b32.xlu0 %v4053, 16
  %v4065 = vpop.permute.xlu0 %4064
  %4066 = vrot.lane.b32.xlu0 %v4057, 16
  %v4067 = vpop.permute.xlu0 %4066
  %4068 = vrot.lane.b32.xlu0 %v4061, 16
  %v4069 = vpop.permute.xlu0 %4068
  %v4070 = vsel %vm743, %v4063, %v4065
  %v4071 = vsel %vm743, %v4065, %v4067
  %v4072 = vsel %vm743, %v4067, %v4069
  %v4078 = vmul.f32 %v3207, %v4063
  %v4079 = vmul.f32 %v3325, %v4070
  %v4080 = vmul.f32 %v3327, %v4071
  %v4081 = vmul.f32 %v3438, %v4072
  %v4082 = vmul.f32 %v3440, %v4069
  %v4083 = vmul.f32 %v3210, %v4063
  %v4084 = vmul.f32 %v3329, %v4070
  %v4085 = vmul.f32 %v3331, %v4071
  %v4086 = vmul.f32 %v3442, %v4072
  %v4087 = vmul.f32 %v3444, %v4069
  %4098 = vrot.lane.b32.xlu0 %v4078, 112
  %v4099 = vpop.permute.xlu0 %4098
  %4100 = vrot.lane.b32.xlu0 %v4079, 112
  %v4101 = vpop.permute.xlu0 %4100
  %4102 = vrot.lane.b32.xlu0 %v4080, 112
  %v4103 = vpop.permute.xlu0 %4102
  %4104 = vrot.lane.b32.xlu0 %v4081, 112
  %v4105 = vpop.permute.xlu0 %4104
  %4106 = vrot.lane.b32.xlu0 %v4082, 112
  %v4107 = vpop.permute.xlu0 %4106
  %4108 = vrot.lane.b32.xlu0 %v4083, 112
  %v4109 = vpop.permute.xlu0 %4108
  %4110 = vrot.lane.b32.xlu0 %v4084, 112
  %v4111 = vpop.permute.xlu0 %4110
  %4112 = vrot.lane.b32.xlu0 %v4085, 112
  %v4113 = vpop.permute.xlu0 %4112
  %4114 = vrot.lane.b32.xlu0 %v4086, 112
  %v4115 = vpop.permute.xlu0 %4114
  %4116 = vrot.lane.b32.xlu0 %v4087, 112
  %v4117 = vpop.permute.xlu0 %4116
  %v4118 = vsel %vm694, %v4099, %v4101
  %v4119 = vsel %vm694, %v4101, %v4103
  %v4120 = vsel %vm694, %v4103, %v4105
  %v4121 = vsel %vm694, %v4105, %v4107
  %v4122 = vsel %vm694, %v4109, %v4111
  %v4123 = vsel %vm694, %v4111, %v4113
  %v4124 = vsel %vm694, %v4113, %v4115
  %v4125 = vsel %vm694, %v4115, %v4117
  %v4134 = vadd.f32 %v4036, %v4118
  %v4135 = vadd.f32 %v4037, %v4119
  %v4136 = vadd.f32 %v4038, %v4120
  %v4137 = vadd.f32 %v4039, %v4121
  %v4138 = vadd.f32 %v4040, %v4122
  %v4139 = vadd.f32 %v4041, %v4123
  %v4140 = vadd.f32 %v4042, %v4124
  %v4141 = vadd.f32 %v4043, %v4125
  %v4142 = vld [vmem:[%s1267] ss:$8 sm:$0xf]
  %v4144 = vlaneseq
  %v4145 = vshrl.u32 %v4144, 7
  %v4146 = vsub.s32 0, %v4145
  %v4147 = vrot.slane %v4142, %v4146
  %v4148 = vlaneseq
  %v4149 = vshrl.u32 %v4148, 7
  %v4150 = vsub.s32 1, %v4149
  %v4151 = vrot.slane %v4142, %v4150
  %v4152 = vlaneseq
  %v4153 = vshrl.u32 %v4152, 7
  %v4154 = vsub.s32 2, %v4153
  %v4155 = vrot.slane %v4142, %v4154
  %v4156 = vlaneseq
  %v4157 = vshrl.u32 %v4156, 7
  %v4158 = vsub.s32 3, %v4157
  %v4159 = vrot.slane %v4142, %v4158
  %4160 = vrot.lane.b32.xlu0 %v4147, 17
  %v4161 = vpop.permute.xlu0 %4160
  %4162 = vrot.lane.b32.xlu0 %v4151, 17
  %v4163 = vpop.permute.xlu0 %4162
  %4164 = vrot.lane.b32.xlu0 %v4155, 17
  %v4165 = vpop.permute.xlu0 %4164
  %4166 = vrot.lane.b32.xlu0 %v4159, 17
  %v4167 = vpop.permute.xlu0 %4166
  %v4168 = vsel %vm642, %v4161, %v4163
  %v4169 = vsel %vm642, %v4163, %v4165
  %v4170 = vsel %vm642, %v4165, %v4167
  %v4176 = vmul.f32 %v3215, %v4161
  %v4177 = vmul.f32 %v3335, %v4168
  %v4178 = vmul.f32 %v3337, %v4169
  %v4179 = vmul.f32 %v3448, %v4170
  %v4180 = vmul.f32 %v3450, %v4167
  %v4181 = vmul.f32 %v3218, %v4161
  %v4182 = vmul.f32 %v3339, %v4168
  %v4183 = vmul.f32 %v3341, %v4169
  %v4184 = vmul.f32 %v3452, %v4170
  %v4185 = vmul.f32 %v3454, %v4167
  %4196 = vrot.lane.b32.xlu0 %v4176, 111
  %v4197 = vpop.permute.xlu0 %4196
  %4198 = vrot.lane.b32.xlu0 %v4177, 111
  %v4199 = vpop.permute.xlu0 %4198
  %4200 = vrot.lane.b32.xlu0 %v4178, 111
  %v4201 = vpop.permute.xlu0 %4200
  %4202 = vrot.lane.b32.xlu0 %v4179, 111
  %v4203 = vpop.permute.xlu0 %4202
  %4204 = vrot.lane.b32.xlu0 %v4180, 111
  %v4205 = vpop.permute.xlu0 %4204
  %4206 = vrot.lane.b32.xlu0 %v4181, 111
  %v4207 = vpop.permute.xlu0 %4206
  %4208 = vrot.lane.b32.xlu0 %v4182, 111
  %v4209 = vpop.permute.xlu0 %4208
  %4210 = vrot.lane.b32.xlu0 %v4183, 111
  %v4211 = vpop.permute.xlu0 %4210
  %4212 = vrot.lane.b32.xlu0 %v4184, 111
  %v4213 = vpop.permute.xlu0 %4212
  %4214 = vrot.lane.b32.xlu0 %v4185, 111
  %v4215 = vpop.permute.xlu0 %4214
  %v4216 = vsel %vm593, %v4197, %v4199
  %v4217 = vsel %vm593, %v4199, %v4201
  %v4218 = vsel %vm593, %v4201, %v4203
  %v4219 = vsel %vm593, %v4203, %v4205
  %v4220 = vsel %vm593, %v4207, %v4209
  %v4221 = vsel %vm593, %v4209, %v4211
  %v4222 = vsel %vm593, %v4211, %v4213
  %v4223 = vsel %vm593, %v4213, %v4215
  %v4232 = vadd.f32 %v4134, %v4216
  %v4233 = vadd.f32 %v4135, %v4217
  %v4234 = vadd.f32 %v4136, %v4218
  %v4235 = vadd.f32 %v4137, %v4219
  %v4236 = vadd.f32 %v4138, %v4220
  %v4237 = vadd.f32 %v4139, %v4221
  %v4238 = vadd.f32 %v4140, %v4222
  %v4239 = vadd.f32 %v4141, %v4223
  %v4240 = vld [vmem:[%s11] sm:$0xff]
  %v4241 = vld [vmem:[%s11 + $0x8] sm:$0xff]
  %4243 = vset.pattern.permute.xlu0 0
  %4244 = vperm.xlu0 %4243, %v4240
  %v4245 = vpop.permute.xlu0 %4244
  %4248 = vset.pattern.permute.xlu0 0
  %4249 = vperm.xlu0 %4248, %v4241
  %v4250 = vpop.permute.xlu0 %4249
  %v4252 = vadd.f32 %v4232, %v4245
  %v4253 = vadd.f32 %v4233, %v4245
  %v4254 = vadd.f32 %v4234, %v4245
  %v4255 = vadd.f32 %v4235, %v4245
  %v4256 = vadd.f32 %v4236, %v4250
  %v4257 = vadd.f32 %v4237, %v4250
  %v4258 = vadd.f32 %v4238, %v4250
  %v4259 = vadd.f32 %v4239, %v4250
  %v4260 = vmax.f32 %v4252, 0.0
  %v4261 = vmax.f32 %v4253, 0.0
  %v4262 = vmax.f32 %v4254, 0.0
  %v4263 = vmax.f32 %v4255, 0.0
  %v4264 = vmax.f32 %v4256, 0.0
  %v4265 = vmax.f32 %v4257, 0.0
  %v4266 = vmax.f32 %v4258, 0.0
  %v4267 = vmax.f32 %v4259, 0.0
  %v4268 = vadd.f32 %v4260, %v4261
  %v4269 = vadd.f32 %v4268, %v4262
  %v4270 = vadd.f32 %v4269, %v4263
  %4271 = vadd.xlane.f32.xlu0 %v4270
  %v4272 = vpop.xlane.xlu0 %4271
  %v4273 = vadd.f32 %v4264, %v4265
  %v4274 = vadd.f32 %v4273, %v4266
  %v4275 = vadd.f32 %v4274, %v4267
  %4276 = vadd.xlane.f32.xlu0 %v4275
  %v4277 = vpop.xlane.xlu0 %4276
  %v4278 = vmul.f32 %v4260, %v4260
  %v4279 = vmul.f32 %v4261, %v4261
  %v4280 = vmul.f32 %v4262, %v4262
  %v4281 = vmul.f32 %v4263, %v4263
  %v4282 = vmul.f32 %v4264, %v4264
  %v4283 = vmul.f32 %v4265, %v4265
  %v4284 = vmul.f32 %v4266, %v4266
  %v4285 = vmul.f32 %v4267, %v4267
  %v4286 = vadd.f32 %v4278, %v4279
  %v4287 = vadd.f32 %v4286, %v4280
  %v4288 = vadd.f32 %v4287, %v4281
  %4289 = vadd.xlane.f32.xlu0 %v4288
  %v4290 = vpop.xlane.xlu0 %4289
  %v4291 = vadd.f32 %v4282, %v4283
  %v4292 = vadd.f32 %v4291, %v4284
  %v4293 = vadd.f32 %v4292, %v4285
  %4294 = vadd.xlane.f32.xlu0 %v4293
  %v4295 = vpop.xlane.xlu0 %4294
  %v4296 = vmul.f32 %v4272, 0.001953125
  %v4297 = vmul.f32 %v4277, 0.001953125
  %v4298 = vmul.f32 %v4290, 0.001953125
  %v4299 = vmul.f32 %v4295, 0.001953125
  %v4300 = vmul.f32 %v4296, %v4296
  %v4301 = vmul.f32 %v4297, %v4297
  %v4302 = vsub.f32 %v4298, %v4300
  %v4303 = vsub.f32 %v4299, %v4301
  %v4304 = vmax.f32 %v4302, 0.0
  %v4305 = vmax.f32 %v4303, 0.0
  %v4306 = vsub.f32 %v4260, %v4296
  %v4307 = vsub.f32 %v4261, %v4296
  %v4308 = vsub.f32 %v4262, %v4296
  %v4309 = vsub.f32 %v4263, %v4296
  %v4310 = vsub.f32 %v4264, %v4297
  %v4311 = vsub.f32 %v4265, %v4297
  %v4312 = vsub.f32 %v4266, %v4297
  %v4313 = vsub.f32 %v4267, %v4297
  %v4314 = vadd.f32 %v4304, 1e-05
  %v4315 = vadd.f32 %v4305, 1e-05
  %v4316 = vrsqrt.pop %v4314
  %v4317 = vrsqrt.pop %v4315
  %v4318 = vmul.f32 %v4306, %v4316
  %v4319 = vmul.f32 %v4307, %v4316
  %v4320 = vmul.f32 %v4308, %v4316
  %v4321 = vmul.f32 %v4309, %v4316
  %v4322 = vmul.f32 %v4310, %v4317
  %v4323 = vmul.f32 %v4311, %v4317
  %v4324 = vmul.f32 %v4312, %v4317
  %v4325 = vmul.f32 %v4313, %v4317
  %v4326 = vld [vmem:[%s12] sm:$0xff]
  %v4327 = vld [vmem:[%s12 + $0x8] sm:$0xff]
  %4329 = vset.pattern.permute.xlu0 0
  %4330 = vperm.xlu0 %4329, %v4326
  %v4331 = vpop.permute.xlu0 %4330
  %4334 = vset.pattern.permute.xlu0 0
  %4335 = vperm.xlu0 %4334, %v4327
  %v4336 = vpop.permute.xlu0 %4335
  %v4338 = vmul.f32 %v4318, %v4331
  %v4339 = vmul.f32 %v4319, %v4331
  %v4340 = vmul.f32 %v4320, %v4331
  %v4341 = vmul.f32 %v4321, %v4331
  %v4342 = vmul.f32 %v4322, %v4336
  %v4343 = vmul.f32 %v4323, %v4336
  %v4344 = vmul.f32 %v4324, %v4336
  %v4345 = vmul.f32 %v4325, %v4336
  %v4346 = vld [vmem:[%s13] sm:$0xff]
  %v4347 = vld [vmem:[%s13 + $0x8] sm:$0xff]
  %4349 = vset.pattern.permute.xlu0 0
  %4350 = vperm.xlu0 %4349, %v4346
  %v4351 = vpop.permute.xlu0 %4350
  %4354 = vset.pattern.permute.xlu0 0
  %4355 = vperm.xlu0 %4354, %v4347
  %v4356 = vpop.permute.xlu0 %4355
  %v4358 = vadd.f32 %v4338, %v4351
  %v4359 = vadd.f32 %v4339, %v4351
  %v4360 = vadd.f32 %v4340, %v4351
  %v4361 = vadd.f32 %v4341, %v4351
  %v4362 = vadd.f32 %v4342, %v4356
  %v4363 = vadd.f32 %v4343, %v4356
  %v4364 = vadd.f32 %v4344, %v4356
  %v4365 = vadd.f32 %v4345, %v4356
  %4366 = vst [vmem:[#allocation2 + $0xf8] sm:$0xff] %v4358
  %4367 = vst [vmem:[#allocation2 + $0x100] sm:$0xff] %v4359
  %4368 = vst [vmem:[#allocation2 + $0x108] sm:$0xff] %v4360
  %4369 = vst [vmem:[#allocation2 + $0x110] sm:$0xff] %v4361
  %4370 = vst [vmem:[#allocation2 + $0x128] sm:$0xff] %v4362
  %4371 = vst [vmem:[#allocation2 + $0x130] sm:$0xff] %v4363
  %4372 = vst [vmem:[#allocation2 + $0x138] sm:$0xff] %v4364
  %4373 = vst [vmem:[#allocation2 + $0x140] sm:$0xff] %v4365
  %v4382 = vrot.slane %v4358, 4
  %v4383 = vrot.slane %v4359, 4
  %v4384 = vrot.slane %v4360, 4
  %v4385 = vrot.slane %v4361, 4
  %v4386 = vrot.slane %v4362, 4
  %v4387 = vsel %vm199, %v4382, %v4386
  %v4388 = vrot.slane %v4363, 4
  %v4389 = vsel %vm199, %v4383, %v4388
  %v4390 = vrot.slane %v4364, 4
  %v4391 = vsel %vm199, %v4384, %v4390
  %v4392 = vrot.slane %v4365, 4
  %v4393 = vsel %vm199, %v4385, %v4392
  %4402 = vst [vmem:[%s19 + $0x60] sm:$0xf0] %v4382
  %4403 = vst [vmem:[%s19 + $0x68] sm:$0xf0] %v4383
  %4404 = vst [vmem:[%s19 + $0x70] sm:$0xf0] %v4384
  %4405 = vst [vmem:[%s19 + $0x78] sm:$0xf0] %v4385
  %4406 = vst [vmem:[%s19 + $0x80] sm:$0xff] %v4387
  %4407 = vst [vmem:[%s19 + $0x88] sm:$0xff] %v4389
  %4408 = vst [vmem:[%s19 + $0x90] sm:$0xff] %v4391
  %4409 = vst [vmem:[%s19 + $0x98] sm:$0xff] %v4393
  %v4410 = vld [vmem:[#allocation2 + $0x8] sm:$0xff]
  %v4411 = vld [vmem:[#allocation2 + $0x10] sm:$0xff]
  %v4412 = vld [vmem:[#allocation2 + $0x18] sm:$0xff]
  %v4413 = vld [vmem:[#allocation2 + $0x20] sm:$0xff]
  %v4414 = vld [vmem:[#allocation2 + $0x38] sm:$0xff]
  %v4415 = vld [vmem:[#allocation2 + $0x40] sm:$0xff]
  %v4416 = vld [vmem:[#allocation2 + $0x48] sm:$0xff]
  %v4417 = vld [vmem:[#allocation2 + $0x50] sm:$0xff]
  %v4418 = vld [vmem:[#allocation2 + $0x68] sm:$0xff]
  %v4419 = vld [vmem:[#allocation2 + $0x70] sm:$0xff]
  %v4420 = vld [vmem:[#allocation2 + $0x78] sm:$0xff]
  %v4421 = vld [vmem:[#allocation2 + $0x80] sm:$0xff]
  %v4422 = vld [vmem:[#allocation2 + $0x98] sm:$0xff]
  %v4423 = vld [vmem:[#allocation2 + $0xa0] sm:$0xff]
  %v4424 = vld [vmem:[#allocation2 + $0xa8] sm:$0xff]
  %v4425 = vld [vmem:[#allocation2 + $0xb0] sm:$0xff]
  %v4426 = vld [vmem:[#allocation2 + $0xc8] sm:$0xff]
  %v4427 = vld [vmem:[#allocation2 + $0xd0] sm:$0xff]
  %v4428 = vld [vmem:[#allocation2 + $0xd8] sm:$0xff]
  %v4429 = vld [vmem:[#allocation2 + $0xe0] sm:$0xff]
  %v4430 = vld [vmem:[#allocation2 + $0xf8] sm:$0xff]
  %v4431 = vld [vmem:[#allocation2 + $0x100] sm:$0xff]
  %v4432 = vld [vmem:[#allocation2 + $0x108] sm:$0xff]
  %v4433 = vld [vmem:[#allocation2 + $0x110] sm:$0xff]
  %v4434 = vld [vmem:[#allocation2 + $0x128] sm:$0xff]
  %v4435 = vld [vmem:[#allocation2 + $0x130] sm:$0xff]
  %v4436 = vld [vmem:[#allocation2 + $0x138] sm:$0xff]
  %v4437 = vld [vmem:[#allocation2 + $0x140] sm:$0xff]
  %v4438 = vpack.c.bf16 %v4414, %v4410
  %v4439 = vpack.c.bf16 %v4415, %v4411
  %v4440 = vpack.c.bf16 %v4416, %v4412
  %v4441 = vpack.c.bf16 %v4417, %v4413
  %v4442 = vpack.c.bf16 %v4422, %v4418
  %v4443 = vpack.c.bf16 %v4423, %v4419
  %v4444 = vpack.c.bf16 %v4424, %v4420
  %v4445 = vpack.c.bf16 %v4425, %v4421
  %v4446 = vpack.c.bf16 %v4430, %v4426
  %v4447 = vpack.c.bf16 %v4431, %v4427
  %v4448 = vpack.c.bf16 %v4432, %v4428
  %v4449 = vpack.c.bf16 %v4433, %v4429
  %v4450 = vpack.c.bf16 %v4434, %v4434
  %v4451 = vpack.c.bf16 %v4435, %v4435
  %v4452 = vpack.c.bf16 %v4436, %v4436
  %v4453 = vpack.c.bf16 %v4437, %v4437
  %v4454 = vld [vmem:[%s14] sm:$0xf]
  %v4455 = vld [vmem:[%s15] sm:$0xff]
  %4457 = vset.pattern.permute.xlu0 0
  %4458 = vperm.xlu0 %4457, %v4455
  %v4459 = vpop.permute.xlu0 %4458
  %vm4461 = vcmask 457728
  %v4463 = vsel %vm4461, %v4454, 0
  %v4466 = vsel %vm199, %v4450, 0
  %v4469 = vsel %vm199, %v4451, 0
  %v4472 = vsel %vm199, %v4452, 0
  %v4475 = vsel %vm199, %v4453, 0
  %4477 = vmatprep.subr.bf16.mxu0 %v4439
  %4478 = vmatpush1.bf16.msra.mxu0 %v4438
  %4479 = vmatprep.subr.bf16.mxu0 %v4443
  %4480 = vmatpush1.bf16.msra.mxu0 %v4442
  %4481 = vmatprep.subr.bf16.mxu0 %v4447
  %4482 = vmatpush1.bf16.msra.mxu0 %v4446
  %4483 = vmatprep.subr.bf16.mxu0 %v4469
  %4484 = vmatpush1.bf16.msra.mxu0 %v4466
  %4485 = vmatprep.subr.bf16.mxu0 0
  %4486 = vmatpush1.bf16.msra.mxu0 0
  %4487 = vmatprep.subr.bf16.mxu0 0
  %4488 = vmatpush1.bf16.msra.mxu0 0
  %4489 = vmatprep.subr.bf16.mxu0 0
  %4490 = vmatpush1.bf16.msra.mxu0 0
  %4491 = vmatprep.subr.bf16.mxu0 0
  %4492 = vmatpush1.bf16.msra.mxu0 0
  %4493 = vmatprep.subr.bf16.mxu0 0
  %4494 = vmatpush1.bf16.msra.mxu0 0
  %4495 = vmatprep.subr.bf16.mxu0 0
  %4496 = vmatpush1.bf16.msra.mxu0 0
  %4497 = vmatprep.subr.bf16.mxu0 0
  %4498 = vmatpush1.bf16.msra.mxu0 0
  %4499 = vmatprep.subr.bf16.mxu0 0
  %4500 = vmatpush1.bf16.msra.mxu0 0
  %4501 = vmatprep.subr.bf16.mxu0 0
  %4502 = vmatpush1.bf16.msra.mxu0 0
  %4503 = vmatprep.subr.bf16.mxu0 0
  %4504 = vmatpush1.bf16.msra.mxu0 0
  %4505 = vmatprep.subr.bf16.mxu0 0
  %4506 = vmatpush1.bf16.msra.mxu0 0
  %4507 = vmatprep.subr.bf16.mxu0 0
  %4508 = vmatpush1.bf16.msra.mxu0 0
  %4509 = vmatprep.mubr.bf16.mxu0 0
  %4510 = vmatmul.mubr.bf16.gmra.mrb[0].mxu0 %v4463
  %v4511 = vpop.f32.mrb[0].mxu0
  %v4512 = vadd.f32 %v4459, %v4511
  %v4513 = vpop.f32.mrb[0].mxu0
  %v4514 = vadd.f32 %v4459, %v4513
  %v4515 = vpop.f32.mrb[0].mxu0
  %v4516 = vpop.f32.mrb[0].mxu0
  %4517 = vdwg.mxu0
  %4518 = vmatprep.subr.bf16.mxu0 %v4441
  %4519 = vmatpush1.bf16.msra.mxu0 %v4440
  %4520 = vmatprep.subr.bf16.mxu0 %v4445
  %4521 = vmatpush1.bf16.msra.mxu0 %v4444
  %4522 = vmatprep.subr.bf16.mxu0 %v4449
  %4523 = vmatpush1.bf16.msra.mxu0 %v4448
  %4524 = vmatprep.subr.bf16.mxu0 %v4475
  %4525 = vmatpush1.bf16.msra.mxu0 %v4472
  %4526 = vmatprep.subr.bf16.mxu0 0
  %4527 = vmatpush1.bf16.msra.mxu0 0
  %4528 = vmatprep.subr.bf16.mxu0 0
  %4529 = vmatpush1.bf16.msra.mxu0 0
  %4530 = vmatprep.subr.bf16.mxu0 0
  %4531 = vmatpush1.bf16.msra.mxu0 0
  %4532 = vmatprep.subr.bf16.mxu0 0
  %4533 = vmatpush1.bf16.msra.mxu0 0
  %4534 = vmatprep.subr.bf16.mxu0 0
  %4535 = vmatpush1.bf16.msra.mxu0 0
  %4536 = vmatprep.subr.bf16.mxu0 0
  %4537 = vmatpush1.bf16.msra.mxu0 0
  %4538 = vmatprep.subr.bf16.mxu0 0
  %4539 = vmatpush1.bf16.msra.mxu0 0
  %4540 = vmatprep.subr.bf16.mxu0 0
  %4541 = vmatpush1.bf16.msra.mxu0 0
  %4542 = vmatprep.subr.bf16.mxu0 0
  %4543 = vmatpush1.bf16.msra.mxu0 0
  %4544 = vmatprep.subr.bf16.mxu0 0
  %4545 = vmatpush1.bf16.msra.mxu0 0
  %4546 = vmatprep.subr.bf16.mxu0 0
  %4547 = vmatpush1.bf16.msra.mxu0 0
  %4548 = vmatprep.subr.bf16.mxu0 0
  %4549 = vmatpush1.bf16.msra.mxu0 0
  %4550 = vmatprep.mubr.bf16.mxu0 0
  %4551 = vmatmul.mubr.bf16.gmra.mrb[0].mxu0 %v4463
  %v4552 = vpop.f32.mrb[0].mxu0
  %v4553 = vadd.f32 %v4459, %v4552
  %v4554 = vpop.f32.mrb[0].mxu0
  %v4555 = vadd.f32 %v4459, %v4554
  %v4556 = vpop.f32.mrb[0].mxu0
  %v4557 = vpop.f32.mrb[0].mxu0
  %4558 = vdwg.mxu0
  %v4559 = vmax.f32 %v4512, 0.0
  %v4560 = vmax.f32 %v4514, 0.0
  %v4561 = vmax.f32 %v4553, 0.0
  %v4562 = vmax.f32 %v4555, 0.0
  %v4563 = vadd.f32 %v4559, %v4560
  %v4564 = vadd.f32 %v4563, %v4561
  %v4565 = vadd.f32 %v4564, %v4562
  %4566 = vadd.xlane.f32.xlu0 %v4565
  %v4567 = vpop.xlane.xlu0 %4566
  %v4568 = vmul.f32 %v4559, %v4559
  %v4569 = vmul.f32 %v4560, %v4560
  %v4570 = vmul.f32 %v4561, %v4561
  %v4571 = vmul.f32 %v4562, %v4562
  %v4572 = vadd.f32 %v4568, %v4569
  %v4573 = vadd.f32 %v4572, %v4570
  %v4574 = vadd.f32 %v4573, %v4571
  %4575 = vadd.xlane.f32.xlu0 %v4574
  %v4576 = vpop.xlane.xlu0 %4575
  %v4577 = vmul.f32 %v4567, 0.001953125
  %v4578 = vmul.f32 %v4576, 0.001953125
  %v4579 = vmul.f32 %v4577, %v4577
  %v4580 = vsub.f32 %v4578, %v4579
  %v4581 = vmax.f32 %v4580, 0.0
  %v4582 = vsub.f32 %v4559, %v4577
  %v4583 = vsub.f32 %v4560, %v4577
  %v4584 = vsub.f32 %v4561, %v4577
  %v4585 = vsub.f32 %v4562, %v4577
  %v4586 = vadd.f32 %v4581, 1e-05
  %v4587 = vrsqrt.pop %v4586
  %v4588 = vmul.f32 %v4582, %v4587
  %v4589 = vmul.f32 %v4583, %v4587
  %v4590 = vmul.f32 %v4584, %v4587
  %v4591 = vmul.f32 %v4585, %v4587
  %v4592 = vld [vmem:[%s16] sm:$0xff]
  %4594 = vset.pattern.permute.xlu0 0
  %4595 = vperm.xlu0 %4594, %v4592
  %v4596 = vpop.permute.xlu0 %4595
  %v4598 = vmul.f32 %v4588, %v4596
  %v4599 = vmul.f32 %v4589, %v4596
  %v4600 = vmul.f32 %v4590, %v4596
  %v4601 = vmul.f32 %v4591, %v4596
  %v4602 = vld [vmem:[%s17] sm:$0xff]
  %4604 = vset.pattern.permute.xlu0 0
  %4605 = vperm.xlu0 %4604, %v4602
  %v4606 = vpop.permute.xlu0 %4605
  %v4608 = vadd.f32 %v4598, %v4606
  %v4609 = vadd.f32 %v4599, %v4606
  %v4610 = vadd.f32 %v4600, %v4606
  %v4611 = vadd.f32 %v4601, %v4606
  %4612 = vst [vmem:[%s18] sm:$0xff] %v4608
  %4613 = vst [vmem:[%s18 + $0x8] sm:$0xff] %v4609
  %4614 = vst [vmem:[%s18 + $0x10] sm:$0xff] %v4610
  %4615 = vst [vmem:[%s18 + $0x18] sm:$0xff] %v4611
  // Predicated region
  $region74: #{dense_conv_block_forward.1} parent=0 // pred_check
    _
  $region75: #{dense_conv_block_forward.1} parent=0 // pred_check_branch
    %4617 = sbr.rel (0) target = $region77
  $region76: #{dense_conv_block_forward.1} parent=0 // pred_region
    _
  $region77: #{dense_conv_block_forward.1} parent=0 // pred_fallthru
    _
  // Predicated region
  $region78: #{dense_conv_block_forward.1} parent=0 // pred_check
    _
  $region79: #{dense_conv_block_forward.1} parent=0 // pred_check_branch
    %4619 = sbr.rel (0) target = $region81
  $region80: #{dense_conv_block_forward.1} parent=0 // pred_region
    _
  $region81: #{dense_conv_block_forward.1} parent=0 // pred_fallthru
    _
  // Predicated region
  $region82: #{dense_conv_block_forward.1} parent=0 // pred_check
    _
  $region83: #{dense_conv_block_forward.1} parent=0 // pred_check_branch
    %4621 = sbr.rel (0) target = $region85
  $region84: #{dense_conv_block_forward.1} parent=0 // pred_region
    _
  $region85: #{dense_conv_block_forward.1} parent=0 // pred_fallthru
    _
  // Predicated region
  $region86: #{dense_conv_block_forward.1} parent=0 // pred_check
    _
  $region87: #{dense_conv_block_forward.1} parent=0 // pred_check_branch
    %4623 = sbr.rel (0) target = $region89
  $region88: #{dense_conv_block_forward.1} parent=0 // pred_region
    _
  $region89: #{dense_conv_block_forward.1} parent=0 // pred_fallthru
    _

</llo_original>
